<compile_context>
chip_gen: v5e
topology: v5e:2x2
jax: 0.10.0
libtpu: 0.0.40
codegen_flags: <defaults>
</compile_context>

<pallas_src>
import math

import numpy as np
import jax
import jax.numpy as jnp
from jax import lax
from jax.experimental import pallas as pl
from jax.experimental.pallas import tpu as pltpu

# ----------------------------------------------------------------------------
# Small-model hyperparameters (scaled-down MViT; 96->768 dims become 32->64)
# TODO(synk): real mvit_base_32x3 has 16 blocks, 96->768 dims, overlapping
# 3x3x3 pooling convs and loads a Kinetics checkpoint; scaled down here with
# kernel==stride pooling and synthetic weights.
# ----------------------------------------------------------------------------
EMBED_DIM = 32
PATCH_KERNEL = (3, 7, 7)
PATCH_STRIDE = (2, 4, 4)
PATCH_PAD = (1, 3, 3)
PATCH_K_PAD = 512  # im2col K = 3*3*7*7 = 441, zero-padded to a 128-aligned 512
BLOCK_CFGS = [
    dict(dim=32, dim_out=32, heads=1, stride_q=(1, 1, 1), stride_kv=(1, 2, 2)),
    dict(dim=32, dim_out=64, heads=2, stride_q=(1, 2, 2), stride_kv=(1, 2, 2)),
]
LN_EPS = 1e-6  # MViT uses LayerNorm(eps=1e-6)


def _prod3(t):
    return t[0] * t[1] * t[2]


# ----------------------------------------------------------------------------
# In-kernel helpers (traced inside the fused Pallas kernel)
# ----------------------------------------------------------------------------

def _ln(v, g, b, eps=LN_EPS):
    """LayerNorm over the last (lane) dim, f32 math."""
    v = v.astype(jnp.float32)
    mu = jnp.mean(v, axis=-1, keepdims=True)
    vc = v - mu
    var = jnp.mean(vc * vc, axis=-1, keepdims=True)
    return vc * lax.rsqrt(var + eps) * g.astype(jnp.float32) + b.astype(jnp.float32)


def _mm_bf(a_bf16, w_bf16):
    """bf16 x bf16 MXU matmul with f32 accumulation."""
    return lax.dot_general(a_bf16, w_bf16, (((1,), (0,)), ((), ())),
                           preferred_element_type=jnp.float32)


def _mm(a_f32, w_bf16):
    return _mm_bf(a_f32.astype(jnp.bfloat16), w_bf16)


def _gelu(y):
    # TODO(synk): torch.nn.GELU uses the exact erf form; tanh approximation
    # used here (erf has no clean Mosaic lowering; tanh lands on the EUP slot).
    c = math.sqrt(2.0 / math.pi)
    return 0.5 * y * (1.0 + jnp.tanh(c * (y + 0.044715 * y * y * y)))


def _const_index_map(ndim):
    if ndim == 2:
        return lambda b: (0, 0)
    assert ndim == 3
    return lambda b: (0, 0, 0)


# ----------------------------------------------------------------------------
# Patch im2col glue (single XLA conv op) — matmul itself happens in-kernel
# ----------------------------------------------------------------------------

def _extract_patches(frames_bcthw):
    """(B, Cin, T, H, W) -> (B, 1 + To*Ho*Wo, PATCH_K_PAD) bf16, row 0 = zeros (CLS)."""
    kt, kh, kw = PATCH_KERNEL
    st, sh, sw = PATCH_STRIDE
    pt, ph, pw = PATCH_PAD
    B, Cin = frames_bcthw.shape[:2]
    pat = lax.conv_general_dilated_patches(
        frames_bcthw, filter_shape=(kt, kh, kw),
        window_strides=(st, sh, sw),
        padding=((pt, pt), (ph, ph), (pw, pw)))     # (B, Cin*kt*kh*kw, To, Ho, Wo)
    K = Cin * kt * kh * kw
    _, _, To, Ho, Wo = pat.shape
    pat = pat.reshape(B, K, To * Ho * Wo).transpose(0, 2, 1)      # (B, N_sp, K)
    pat = jnp.pad(pat, ((0, 0), (1, 0), (0, PATCH_K_PAD - K)))    # CLS row + K pad
    return pat.astype(jnp.bfloat16), (To, Ho, Wo)


# ----------------------------------------------------------------------------
# Fully fused forward: one pallas_call, grid over batch
# ----------------------------------------------------------------------------

def mvit_forward(params, frames):
    # frames: (B, num_frames, 3, H, W) as in the PyTorch docstring.
    x_bcthw = jnp.transpose(frames, (0, 2, 1, 3, 4))              # (B, Cin, T, H, W)
    patches, thw0 = _extract_patches(x_bcthw)
    B, N, Kp = patches.shape
    To, Ho, Wo = thw0
    C0 = EMBED_DIM

    # Row 0 = cls_token + pos_cls ; rows 1.. = patch bias + separable pos embed.
    pos_sp = jnp.tile(params['pos_spatial'], (To, 1))
    pos_tm = jnp.repeat(params['pos_temporal'], Ho * Wo, axis=0)
    add0 = jnp.concatenate(
        [params['cls_token'].reshape(1, C0) + params['pos_cls'],
         params['patch_b'] + pos_sp + pos_tm], axis=0)            # (N, C0) f32

    inputs = [patches, params['patch_w_mat'], add0]
    specs = [pl.BlockSpec((1, N, Kp), lambda b: (b, 0, 0)),
             pl.BlockSpec(params['patch_w_mat'].shape, _const_index_map(2)),
             pl.BlockSpec(add0.shape, _const_index_map(2))]

    def add(arr):
        inputs.append(arr)
        specs.append(pl.BlockSpec(arr.shape, _const_index_map(arr.ndim)))

    meta = []
    thw = thw0
    n_cur = N
    for cfg, blk in zip(BLOCK_CFGS, params['blocks']):
        sq, skv = cfg['stride_q'], cfg['stride_kv']
        pool_q = sq != (1, 1, 1)
        pool_kv = skv != (1, 1, 1)
        thw_q = tuple(d // s for d, s in zip(thw, sq))
        thw_kv = tuple(d // s for d, s in zip(thw, skv))
        m = dict(pool_q=pool_q, pool_kv=pool_kv,
                 Pq=_prod3(sq), Pkv=_prod3(skv),
                 Nq=(1 + _prod3(thw_q)) if pool_q else n_cur,
                 Nkv=(1 + _prod3(thw_kv)) if pool_kv else n_cur,
                 has_skip=cfg['dim'] != cfg['dim_out'],
                 heads=cfg['heads'], dim=cfg['dim'], dim_out=cfg['dim_out'])
        meta.append(m)
        add(blk['norm1_g']); add(blk['norm1_b'])
        add(blk['qkv_w']); add(blk['qkv_b'])
        if pool_q:
            add(blk['sel_q']); add(blk['pool_q_w'])
            add(blk['normq_g']); add(blk['normq_b'])
        if pool_kv:
            add(blk['sel_kv'])
            add(blk['pool_k_w']); add(blk['normk_g']); add(blk['normk_b'])
            add(blk['pool_v_w']); add(blk['normv_g']); add(blk['normv_b'])
        add(blk['proj_w']); add(blk['proj_b'])
        add(blk['norm2_g']); add(blk['norm2_b'])
        add(blk['fc1_w']); add(blk['fc1_b'])
        add(blk['fc2_w']); add(blk['fc2_b'])
        if m['has_skip']:
            add(blk['proj_skip_w']); add(blk['proj_skip_b'])
        thw = thw_q if pool_q else thw
        n_cur = m['Nq']
    add(params['norm_g']); add(params['norm_b'])

    Cf = BLOCK_CFGS[-1]['dim_out']

    def kernel(*refs):
        it = iter(refs)
        p_ref = next(it); wp_ref = next(it); add0_ref = next(it)

        def pool_sum(tok_f32, sel_bf, w_all, P, No):
            # One stacked bf16 gather matmul over all P window positions
            # (sel is 0/1, CLS is selected by every position), then a P-term
            # weighted VPU sum; no concatenation, no per-P matmuls.
            g = _mm_bf(sel_bf, tok_f32.astype(jnp.bfloat16))      # (P*No, C)
            acc = g[0:No, :] * w_all[0]
            for p in range(1, P):
                acc = acc + g[p * No:(p + 1) * No, :] * w_all[p]
            return acc                                            # (No, C) f32

        # Patch embedding; CLS token + positional embedding folded into add0
        # (patches row 0 is all-zero so row 0 becomes exactly cls + pos_cls).
        x = _mm_bf(p_ref[0], wp_ref[...]) + add0_ref[...]         # (N, C0) f32

        for m in meta:
            C, h = m['dim'], m['heads']
            Dh = C // h
            scale = Dh ** -0.5
            n1g = next(it); n1b = next(it)
            wqkv = next(it); bqkv = next(it)
            if m['pool_q']:
                selq = next(it); wq_full = next(it)
                nqg = next(it); nqb = next(it)
            if m['pool_kv']:
                selkv = next(it)
                wk_full = next(it); nkg = next(it); nkb = next(it)
                wv_full = next(it); nvg = next(it); nvb = next(it)
            wproj = next(it); bproj = next(it)
            n2g = next(it); n2b = next(it)
            wfc1 = next(it); bfc1 = next(it)
            wfc2 = next(it); bfc2 = next(it)
            if m['has_skip']:
                wskip = next(it); bskip = next(it)

            xn = _ln(x, n1g[...], n1b[...])
            # Fused QKV projection: one (N, C) x (C, 3C) bf16 MXU pass.
            qkv = _mm(xn, wqkv[...]) + bqkv[...]                  # (n, 3C) f32
            q = qkv[:, 0:C]
            k = qkv[:, C:2 * C]
            v = qkv[:, 2 * C:3 * C]

            # Attention pooling (depthwise conv, kernel == stride) done at full
            # channel width; per-head LayerNorm happens on lane slices below.
            if m['pool_kv']:
                selkv_bf = selkv[...].astype(jnp.bfloat16)        # exact 0/1 cast
                k = pool_sum(k, selkv_bf, wk_full[...], m['Pkv'], m['Nkv'])
                v = pool_sum(v, selkv_bf, wv_full[...], m['Pkv'], m['Nkv'])
            if m['pool_q']:
                selq_f32 = selq[...]
                q = pool_sum(q, selq_f32.astype(jnp.bfloat16),
                             wq_full[...], m['Pq'], m['Nq'])

            # Multi-head attention with per-head output-projection accumulation.
            wproj_all = wproj[...]                                # (C, C) bf16
            attn = None
            for hd in range(h):
                sl = slice(hd * Dh, (hd + 1) * Dh)
                q_h = q[:, sl]
                k_h = k[:, sl]
                v_h = v[:, sl]
                if m['pool_q']:
                    q_h = _ln(q_h, nqg[...], nqb[...])
                if m['pool_kv']:
                    k_h = _ln(k_h, nkg[...], nkb[...])
                    v_h = _ln(v_h, nvg[...], nvb[...])
                s = lax.dot_general((q_h * scale).astype(jnp.bfloat16),
                                    k_h.astype(jnp.bfloat16),
                                    (((1,), (1,)), ((), ())),
                                    preferred_element_type=jnp.float32)
                s = s - jnp.max(s, axis=-1, keepdims=True)
                e = jnp.exp(s)
                prob = e * pl.reciprocal(jnp.sum(e, axis=-1, keepdims=True),
                                         approx=True)
                o_h = _mm(prob, v_h.astype(jnp.bfloat16))         # (Nq, Dh)
                contrib = _mm(o_h, wproj_all[sl, :])              # (Nq, C)
                attn = contrib if attn is None else attn + contrib
            attn = attn + bproj[...]

            # Residual skip: MaxPool3d over the same non-overlapping windows as
            # a single exact f32 gather matmul + VPU max (CLS is selected by
            # every window position, so max() passes it through exactly).
            if m['pool_q']:
                gsk = lax.dot_general(selq_f32, x, (((1,), (0,)), ((), ())),
                                      preferred_element_type=jnp.float32)
                No = m['Nq']
                skip = gsk[0:No, :]
                for p in range(1, m['Pq']):
                    skip = jnp.maximum(skip, gsk[p * No:(p + 1) * No, :])
            else:
                skip = x
            x2 = skip + attn

            # MLP (+ optional channel-expanding skip projection), fused.
            xn2 = _ln(x2, n2g[...], n2b[...])
            xn2_bf = xn2.astype(jnp.bfloat16)                     # hoisted cast
            hid = _gelu(_mm_bf(xn2_bf, wfc1[...]) + bfc1[...])
            mlp = _mm(hid, wfc2[...]) + bfc2[...]                 # (Nq, Cout)
            if m['has_skip']:
                base = _mm_bf(xn2_bf, wskip[...]) + bskip[...]
            else:
                base = x2
            x = base + mlp

        # Final LayerNorm applied only to the CLS row (LN is per-token, so this
        # equals LN(all tokens)[:, 0, :]); head = sequence_pool -> CLS output.
        ng = next(it); nb = next(it)
        o_ref = next(it)
        o_ref[0] = _ln(x[0:1, :], ng[...], nb[...]).astype(o_ref.dtype)

    out = pl.pallas_call(
        kernel,
        out_shape=jax.ShapeDtypeStruct((B, 1, Cf), jnp.float32),
        grid=(B,),
        in_specs=specs,
        out_specs=pl.BlockSpec((1, 1, Cf), lambda b: (b, 0, 0)),
        compiler_params=pltpu.CompilerParams(dimension_semantics=("parallel",)),
    )(*inputs)
    return out[:, 0, :]


# ----------------------------------------------------------------------------
# Deterministic parameter initialization (synthetic; no checkpoint loading)
# ----------------------------------------------------------------------------

def make_pool_sel(thw, stride):
    """Stacked 0/1 gather matrix (P*Nout, N_in).

    Row o of slab p selects window member p of pooled token o; the CLS row
    (o == 0) is selected by every slab, so a 1/P-weighted sum or a max over
    slabs reproduces the CLS token exactly.
    """
    T, H, W = thw
    st, sh, sw = stride
    To, Ho, Wo = T // st, H // sh, W // sw
    P = st * sh * sw
    No = 1 + To * Ho * Wo
    N = 1 + T * H * W
    sel = np.zeros((P, No, N), np.float32)
    sel[:, 0, 0] = 1.0
    for to in range(To):
        for ho in range(Ho):
            for wo in range(Wo):
                o = 1 + (to * Ho + ho) * Wo + wo
                pidx = 0
                for dt in range(st):
                    for dh in range(sh):
                        for dw in range(sw):
                            t, hh, ww = to * st + dt, ho * sh + dh, wo * sw + dw
                            sel[pidx, o, 1 + (t * H + hh) * W + ww] = 1.0
                            pidx += 1
    return jnp.asarray(sel.reshape(P * No, N))


def make_pool_weights(key, stride, heads, Dh, No):
    """(P, No, heads*Dh) depthwise-conv pooling weights (shared across heads);
    row 0 is 1/P so the CLS row sums back to itself."""
    P = _prod3(stride)
    base = 1.0 / P + 0.02 * jax.random.normal(key, (P, Dh), dtype=jnp.float32)
    w = jnp.tile(base, (1, heads))                                # (P, C)
    w_full = jnp.broadcast_to(w[:, None, :], (P, No, heads * Dh))
    return w_full.at[:, 0, :].set(1.0 / P)


def init_params(key, thw0):
    To, Ho, Wo = thw0
    keys = iter(jax.random.split(key, 64))

    def nrm(shape, scale=0.02):
        return scale * jax.random.normal(next(keys), shape, dtype=jnp.float32)

    zeros = lambda s: jnp.zeros(s, jnp.float32)
    ones = lambda s: jnp.ones(s, jnp.float32)

    Cin = 3
    kt, kh, kw = PATCH_KERNEL
    K = Cin * kt * kh * kw
    w_conv = nrm((EMBED_DIM, K))                                  # (Cout, Cin*kt*kh*kw)
    w_mat = jnp.pad(w_conv.T, ((0, PATCH_K_PAD - K), (0, 0))).astype(jnp.bfloat16)

    params = {
        'patch_w_mat': w_mat,
        'patch_b': zeros((1, EMBED_DIM)),
        'cls_token': nrm((1, EMBED_DIM)),
        'pos_spatial': nrm((Ho * Wo, EMBED_DIM)),
        'pos_temporal': nrm((To, EMBED_DIM)),
        'pos_cls': nrm((1, EMBED_DIM)),
        'blocks': [],
    }
    thw = thw0
    for cfg in BLOCK_CFGS:
        dim, dim_out, h = cfg['dim'], cfg['dim_out'], cfg['heads']
        Dh = dim // h
        sq, skv = cfg['stride_q'], cfg['stride_kv']
        blk = {
            'norm1_g': ones((1, dim)), 'norm1_b': zeros((1, dim)),
            'qkv_w': nrm((dim, 3 * dim)).astype(jnp.bfloat16),
            'qkv_b': zeros((1, 3 * dim)),
            'proj_w': nrm((dim, dim)).astype(jnp.bfloat16),
            'proj_b': zeros((1, dim)),
            'norm2_g': ones((1, dim)), 'norm2_b': zeros((1, dim)),
            'fc1_w': nrm((dim, 4 * dim)).astype(jnp.bfloat16),
            'fc1_b': zeros((1, 4 * dim)),
            'fc2_w': nrm((4 * dim, dim_out)).astype(jnp.bfloat16),
            'fc2_b': zeros((1, dim_out)),
        }
        if sq != (1, 1, 1):
            Nq = 1 + _prod3(tuple(d // s for d, s in zip(thw, sq)))
            blk['sel_q'] = make_pool_sel(thw, sq)
            blk['pool_q_w'] = make_pool_weights(next(keys), sq, h, Dh, Nq)
            blk['normq_g'] = ones((1, Dh)); blk['normq_b'] = zeros((1, Dh))
        if skv != (1, 1, 1):
            Nkv = 1 + _prod3(tuple(d // s for d, s in zip(thw, skv)))
            blk['sel_kv'] = make_pool_sel(thw, skv)
            blk['pool_k_w'] = make_pool_weights(next(keys), skv, h, Dh, Nkv)
            blk['normk_g'] = ones((1, Dh)); blk['normk_b'] = zeros((1, Dh))
            blk['pool_v_w'] = make_pool_weights(next(keys), skv, h, Dh, Nkv)
            blk['normv_g'] = ones((1, Dh)); blk['normv_b'] = zeros((1, Dh))
        if dim != dim_out:
            blk['proj_skip_w'] = nrm((dim, dim_out)).astype(jnp.bfloat16)
            blk['proj_skip_b'] = zeros((1, dim_out))
        params['blocks'].append(blk)
        thw = tuple(d // s for d, s in zip(thw, sq))

    final_dim = BLOCK_CFGS[-1]['dim_out']
    params['norm_g'] = ones((1, final_dim))
    params['norm_b'] = zeros((1, final_dim))
    return params


# ----------------------------------------------------------------------------

if __name__ == "__main__":
    key = jax.random.PRNGKey(0)
    kf, kp = jax.random.split(key)

    # Small shapes consistent with the forward: (B, num_frames, 3, H, W)
    B, T, Cin, H, W = 2, 4, 3, 16, 16
    frames = jax.random.normal(kf, (B, T, Cin, H, W), dtype=jnp.float32)

    To = (T + 2 * PATCH_PAD[0] - PATCH_KERNEL[0]) // PATCH_STRIDE[0] + 1
    Ho = (H + 2 * PATCH_PAD[1] - PATCH_KERNEL[1]) // PATCH_STRIDE[1] + 1
    Wo = (W + 2 * PATCH_PAD[2] - PATCH_KERNEL[2]) // PATCH_STRIDE[2] + 1
    params = init_params(kp, (To, Ho, Wo))

    fwd = jax.jit(mvit_forward)
    out = jax.block_until_ready(fwd(params, frames))

    assert out.shape == (B, BLOCK_CFGS[-1]['dim_out']), out.shape
    assert bool(jnp.all(jnp.isfinite(out)))
    print("KERNEL_OK")
</pallas_src>

<mosaic_0001>
module attributes {stable_mosaic.version = 11 : i64} {
  func.func @kernel(%arg0: i32, %arg1: memref<1x33x512xbf16, #tpu.memory_space<vmem>>, %arg2: memref<512x32xbf16, #tpu.memory_space<vmem>>, %arg3: memref<33x32xf32, #tpu.memory_space<vmem>>, %arg4: memref<1x32xf32, #tpu.memory_space<vmem>>, %arg5: memref<1x32xf32, #tpu.memory_space<vmem>>, %arg6: memref<32x96xbf16, #tpu.memory_space<vmem>>, %arg7: memref<1x96xf32, #tpu.memory_space<vmem>>, %arg8: memref<36x33xf32, #tpu.memory_space<vmem>>, %arg9: memref<4x9x32xf32, #tpu.memory_space<vmem>>, %arg10: memref<1x32xf32, #tpu.memory_space<vmem>>, %arg11: memref<1x32xf32, #tpu.memory_space<vmem>>, %arg12: memref<4x9x32xf32, #tpu.memory_space<vmem>>, %arg13: memref<1x32xf32, #tpu.memory_space<vmem>>, %arg14: memref<1x32xf32, #tpu.memory_space<vmem>>, %arg15: memref<32x32xbf16, #tpu.memory_space<vmem>>, %arg16: memref<1x32xf32, #tpu.memory_space<vmem>>, %arg17: memref<1x32xf32, #tpu.memory_space<vmem>>, %arg18: memref<1x32xf32, #tpu.memory_space<vmem>>, %arg19: memref<32x128xbf16, #tpu.memory_space<vmem>>, %arg20: memref<1x128xf32, #tpu.memory_space<vmem>>, %arg21: memref<128x32xbf16, #tpu.memory_space<vmem>>, %arg22: memref<1x32xf32, #tpu.memory_space<vmem>>, %arg23: memref<1x32xf32, #tpu.memory_space<vmem>>, %arg24: memref<1x32xf32, #tpu.memory_space<vmem>>, %arg25: memref<32x96xbf16, #tpu.memory_space<vmem>>, %arg26: memref<1x96xf32, #tpu.memory_space<vmem>>, %arg27: memref<36x33xf32, #tpu.memory_space<vmem>>, %arg28: memref<4x9x32xf32, #tpu.memory_space<vmem>>, %arg29: memref<1x16xf32, #tpu.memory_space<vmem>>, %arg30: memref<1x16xf32, #tpu.memory_space<vmem>>, %arg31: memref<36x33xf32, #tpu.memory_space<vmem>>, %arg32: memref<4x9x32xf32, #tpu.memory_space<vmem>>, %arg33: memref<1x16xf32, #tpu.memory_space<vmem>>, %arg34: memref<1x16xf32, #tpu.memory_space<vmem>>, %arg35: memref<4x9x32xf32, #tpu.memory_space<vmem>>, %arg36: memref<1x16xf32, #tpu.memory_space<vmem>>, %arg37: memref<1x16xf32, #tpu.memory_space<vmem>>, %arg38: memref<32x32xbf16, #tpu.memory_space<vmem>>, %arg39: memref<1x32xf32, #tpu.memory_space<vmem>>, %arg40: memref<1x32xf32, #tpu.memory_space<vmem>>, %arg41: memref<1x32xf32, #tpu.memory_space<vmem>>, %arg42: memref<32x128xbf16, #tpu.memory_space<vmem>>, %arg43: memref<1x128xf32, #tpu.memory_space<vmem>>, %arg44: memref<128x64xbf16, #tpu.memory_space<vmem>>, %arg45: memref<1x64xf32, #tpu.memory_space<vmem>>, %arg46: memref<32x64xbf16, #tpu.memory_space<vmem>>, %arg47: memref<1x64xf32, #tpu.memory_space<vmem>>, %arg48: memref<1x64xf32, #tpu.memory_space<vmem>>, %arg49: memref<1x64xf32, #tpu.memory_space<vmem>>, %arg50: memref<1x1x64xf32, #tpu.memory_space<vmem>>) attributes {dimension_semantics = [#tpu.dimension_semantics<parallel>], iteration_bounds = array<i64: 2>, scalar_prefetch = 0 : i64, scratch_operands = 0 : i64, tpu.core_type = #tpu.core_type<tc>, window_params = [{transform_indices = @transform_0, window_bounds = array<i64: 1, 33, 512>}, {pipeline_mode = #tpu.pipeline_mode<synchronous>, transform_indices = @transform_1, window_bounds = array<i64: 512, 32>}, {pipeline_mode = #tpu.pipeline_mode<synchronous>, transform_indices = @transform_2, window_bounds = array<i64: 33, 32>}, {pipeline_mode = #tpu.pipeline_mode<synchronous>, transform_indices = @transform_3, window_bounds = array<i64: 1, 32>}, {pipeline_mode = #tpu.pipeline_mode<synchronous>, transform_indices = @transform_4, window_bounds = array<i64: 1, 32>}, {pipeline_mode = #tpu.pipeline_mode<synchronous>, transform_indices = @transform_5, window_bounds = array<i64: 32, 96>}, {pipeline_mode = #tpu.pipeline_mode<synchronous>, transform_indices = @transform_6, window_bounds = array<i64: 1, 96>}, {pipeline_mode = #tpu.pipeline_mode<synchronous>, transform_indices = @transform_7, window_bounds = array<i64: 36, 33>}, {pipeline_mode = #tpu.pipeline_mode<synchronous>, transform_indices = @transform_8, window_bounds = array<i64: 4, 9, 32>}, {pipeline_mode = #tpu.pipeline_mode<synchronous>, transform_indices = @transform_9, window_bounds = array<i64: 1, 32>}, {pipeline_mode = #tpu.pipeline_mode<synchronous>, transform_indices = @transform_10, window_bounds = array<i64: 1, 32>}, {pipeline_mode = #tpu.pipeline_mode<synchronous>, transform_indices = @transform_11, window_bounds = array<i64: 4, 9, 32>}, {pipeline_mode = #tpu.pipeline_mode<synchronous>, transform_indices = @transform_12, window_bounds = array<i64: 1, 32>}, {pipeline_mode = #tpu.pipeline_mode<synchronous>, transform_indices = @transform_13, window_bounds = array<i64: 1, 32>}, {pipeline_mode = #tpu.pipeline_mode<synchronous>, transform_indices = @transform_14, window_bounds = array<i64: 32, 32>}, {pipeline_mode = #tpu.pipeline_mode<synchronous>, transform_indices = @transform_15, window_bounds = array<i64: 1, 32>}, {pipeline_mode = #tpu.pipeline_mode<synchronous>, transform_indices = @transform_16, window_bounds = array<i64: 1, 32>}, {pipeline_mode = #tpu.pipeline_mode<synchronous>, transform_indices = @transform_17, window_bounds = array<i64: 1, 32>}, {pipeline_mode = #tpu.pipeline_mode<synchronous>, transform_indices = @transform_18, window_bounds = array<i64: 32, 128>}, {pipeline_mode = #tpu.pipeline_mode<synchronous>, transform_indices = @transform_19, window_bounds = array<i64: 1, 128>}, {pipeline_mode = #tpu.pipeline_mode<synchronous>, transform_indices = @transform_20, window_bounds = array<i64: 128, 32>}, {pipeline_mode = #tpu.pipeline_mode<synchronous>, transform_indices = @transform_21, window_bounds = array<i64: 1, 32>}, {pipeline_mode = #tpu.pipeline_mode<synchronous>, transform_indices = @transform_22, window_bounds = array<i64: 1, 32>}, {pipeline_mode = #tpu.pipeline_mode<synchronous>, transform_indices = @transform_23, window_bounds = array<i64: 1, 32>}, {pipeline_mode = #tpu.pipeline_mode<synchronous>, transform_indices = @transform_24, window_bounds = array<i64: 32, 96>}, {pipeline_mode = #tpu.pipeline_mode<synchronous>, transform_indices = @transform_25, window_bounds = array<i64: 1, 96>}, {pipeline_mode = #tpu.pipeline_mode<synchronous>, transform_indices = @transform_26, window_bounds = array<i64: 36, 33>}, {pipeline_mode = #tpu.pipeline_mode<synchronous>, transform_indices = @transform_27, window_bounds = array<i64: 4, 9, 32>}, {pipeline_mode = #tpu.pipeline_mode<synchronous>, transform_indices = @transform_28, window_bounds = array<i64: 1, 16>}, {pipeline_mode = #tpu.pipeline_mode<synchronous>, transform_indices = @transform_29, window_bounds = array<i64: 1, 16>}, {pipeline_mode = #tpu.pipeline_mode<synchronous>, transform_indices = @transform_30, window_bounds = array<i64: 36, 33>}, {pipeline_mode = #tpu.pipeline_mode<synchronous>, transform_indices = @transform_31, window_bounds = array<i64: 4, 9, 32>}, {pipeline_mode = #tpu.pipeline_mode<synchronous>, transform_indices = @transform_32, window_bounds = array<i64: 1, 16>}, {pipeline_mode = #tpu.pipeline_mode<synchronous>, transform_indices = @transform_33, window_bounds = array<i64: 1, 16>}, {pipeline_mode = #tpu.pipeline_mode<synchronous>, transform_indices = @transform_34, window_bounds = array<i64: 4, 9, 32>}, {pipeline_mode = #tpu.pipeline_mode<synchronous>, transform_indices = @transform_35, window_bounds = array<i64: 1, 16>}, {pipeline_mode = #tpu.pipeline_mode<synchronous>, transform_indices = @transform_36, window_bounds = array<i64: 1, 16>}, {pipeline_mode = #tpu.pipeline_mode<synchronous>, transform_indices = @transform_37, window_bounds = array<i64: 32, 32>}, {pipeline_mode = #tpu.pipeline_mode<synchronous>, transform_indices = @transform_38, window_bounds = array<i64: 1, 32>}, {pipeline_mode = #tpu.pipeline_mode<synchronous>, transform_indices = @transform_39, window_bounds = array<i64: 1, 32>}, {pipeline_mode = #tpu.pipeline_mode<synchronous>, transform_indices = @transform_40, window_bounds = array<i64: 1, 32>}, {pipeline_mode = #tpu.pipeline_mode<synchronous>, transform_indices = @transform_41, window_bounds = array<i64: 32, 128>}, {pipeline_mode = #tpu.pipeline_mode<synchronous>, transform_indices = @transform_42, window_bounds = array<i64: 1, 128>}, {pipeline_mode = #tpu.pipeline_mode<synchronous>, transform_indices = @transform_43, window_bounds = array<i64: 128, 64>}, {pipeline_mode = #tpu.pipeline_mode<synchronous>, transform_indices = @transform_44, window_bounds = array<i64: 1, 64>}, {pipeline_mode = #tpu.pipeline_mode<synchronous>, transform_indices = @transform_45, window_bounds = array<i64: 32, 64>}, {pipeline_mode = #tpu.pipeline_mode<synchronous>, transform_indices = @transform_46, window_bounds = array<i64: 1, 64>}, {pipeline_mode = #tpu.pipeline_mode<synchronous>, transform_indices = @transform_47, window_bounds = array<i64: 1, 64>}, {pipeline_mode = #tpu.pipeline_mode<synchronous>, transform_indices = @transform_48, window_bounds = array<i64: 1, 64>}, {transform_indices = @transform_49, window_bounds = array<i64: 1, 1, 64>}]} {
    %c0 = arith.constant 0 : index
    %c0_0 = arith.constant 0 : index
    %c0_1 = arith.constant 0 : index
    %0 = vector.load %arg1[%c0, %c0_0, %c0_1] : memref<1x33x512xbf16, #tpu.memory_space<vmem>>, vector<1x33x512xbf16>
    %1 = vector.shape_cast %0 : vector<1x33x512xbf16> to vector<33x512xbf16>
    %c0_2 = arith.constant 0 : index
    %c0_3 = arith.constant 0 : index
    %2 = vector.load %arg2[%c0_2, %c0_3] : memref<512x32xbf16, #tpu.memory_space<vmem>>, vector<512x32xbf16>
    %cst = arith.constant dense<0.000000e+00> : vector<33x32xf32>
    %3 = tpu.matmul %1, %2, %cst {dimension_numbers = #tpu.dot_dimension_numbers<[1], [0], [0], [1], [0, 0, 1, 1], [], []>} : vector<33x512xbf16>, vector<512x32xbf16>, vector<33x32xf32> -> vector<33x32xf32>
    %c0_4 = arith.constant 0 : index
    %c0_5 = arith.constant 0 : index
    %4 = vector.load %arg3[%c0_4, %c0_5] : memref<33x32xf32, #tpu.memory_space<vmem>>, vector<33x32xf32>
    %5 = arith.addf %3, %4 : vector<33x32xf32>
    %c0_6 = arith.constant 0 : index
    %c0_7 = arith.constant 0 : index
    %6 = vector.load %arg4[%c0_6, %c0_7] : memref<1x32xf32, #tpu.memory_space<vmem>>, vector<1x32xf32>
    %c0_8 = arith.constant 0 : index
    %c0_9 = arith.constant 0 : index
    %7 = vector.load %arg5[%c0_8, %c0_9] : memref<1x32xf32, #tpu.memory_space<vmem>>, vector<1x32xf32>
    %cst_10 = arith.constant dense<0.000000e+00> : vector<33xf32>
    %8 = vector.multi_reduction <add>, %5, %cst_10 [1] : vector<33x32xf32> to vector<33xf32>
    %9 = vector.shape_cast %8 : vector<33xf32> to vector<33x1xf32>
    %cst_11 = arith.constant 3.200000e+01 : f32
    %10 = vector.broadcast %cst_11 : f32 to vector<33x1xf32>
    %11 = arith.divf %9, %10 : vector<33x1xf32>
    %12 = vector.broadcast %11 : vector<33x1xf32> to vector<33x32xf32>
    %13 = arith.subf %5, %12 : vector<33x32xf32>
    %14 = arith.mulf %13, %13 : vector<33x32xf32>
    %cst_12 = arith.constant dense<0.000000e+00> : vector<33xf32>
    %15 = vector.multi_reduction <add>, %14, %cst_12 [1] : vector<33x32xf32> to vector<33xf32>
    %16 = vector.shape_cast %15 : vector<33xf32> to vector<33x1xf32>
    %cst_13 = arith.constant 3.200000e+01 : f32
    %17 = vector.broadcast %cst_13 : f32 to vector<33x1xf32>
    %18 = arith.divf %16, %17 : vector<33x1xf32>
    %cst_14 = arith.constant 9.99999997E-7 : f32
    %19 = vector.broadcast %cst_14 : f32 to vector<33x1xf32>
    %20 = arith.addf %18, %19 : vector<33x1xf32>
    %21 = math.rsqrt %20 : vector<33x1xf32>
    %22 = vector.broadcast %21 : vector<33x1xf32> to vector<33x32xf32>
    %23 = arith.mulf %13, %22 : vector<33x32xf32>
    %24 = vector.broadcast %6 : vector<1x32xf32> to vector<33x32xf32>
    %25 = arith.mulf %23, %24 : vector<33x32xf32>
    %26 = vector.broadcast %7 : vector<1x32xf32> to vector<33x32xf32>
    %27 = arith.addf %25, %26 : vector<33x32xf32>
    %c0_15 = arith.constant 0 : index
    %c0_16 = arith.constant 0 : index
    %28 = vector.load %arg6[%c0_15, %c0_16] : memref<32x96xbf16, #tpu.memory_space<vmem>>, vector<32x96xbf16>
    %29 = arith.truncf %27 : vector<33x32xf32> to vector<33x32xbf16>
    %cst_17 = arith.constant dense<0.000000e+00> : vector<33x96xf32>
    %30 = tpu.matmul %29, %28, %cst_17 {dimension_numbers = #tpu.dot_dimension_numbers<[1], [0], [0], [1], [0, 0, 1, 1], [], []>} : vector<33x32xbf16>, vector<32x96xbf16>, vector<33x96xf32> -> vector<33x96xf32>
    %c0_18 = arith.constant 0 : index
    %c0_19 = arith.constant 0 : index
    %31 = vector.load %arg7[%c0_18, %c0_19] : memref<1x96xf32, #tpu.memory_space<vmem>>, vector<1x96xf32>
    %32 = vector.broadcast %31 : vector<1x96xf32> to vector<33x96xf32>
    %33 = arith.addf %30, %32 : vector<33x96xf32>
    %34 = vector.extract_strided_slice %33 {offsets = [0, 0], sizes = [33, 32], strides = [1, 1]} : vector<33x96xf32> to vector<33x32xf32>
    %35 = vector.extract_strided_slice %33 {offsets = [0, 32], sizes = [33, 32], strides = [1, 1]} : vector<33x96xf32> to vector<33x32xf32>
    %36 = vector.extract_strided_slice %33 {offsets = [0, 64], sizes = [33, 32], strides = [1, 1]} : vector<33x96xf32> to vector<33x32xf32>
    %c0_20 = arith.constant 0 : index
    %c0_21 = arith.constant 0 : index
    %37 = vector.load %arg8[%c0_20, %c0_21] : memref<36x33xf32, #tpu.memory_space<vmem>>, vector<36x33xf32>
    %38 = arith.truncf %37 : vector<36x33xf32> to vector<36x33xbf16>
    %c0_22 = arith.constant 0 : index
    %c0_23 = arith.constant 0 : index
    %c0_24 = arith.constant 0 : index
    %39 = vector.load %arg9[%c0_22, %c0_23, %c0_24] : memref<4x9x32xf32, #tpu.memory_space<vmem>>, vector<4x9x32xf32>
    %40 = arith.truncf %35 : vector<33x32xf32> to vector<33x32xbf16>
    %cst_25 = arith.constant dense<0.000000e+00> : vector<36x32xf32>
    %41 = tpu.matmul %38, %40, %cst_25 {dimension_numbers = #tpu.dot_dimension_numbers<[1], [0], [0], [1], [0, 0, 1, 1], [], []>} : vector<36x33xbf16>, vector<33x32xbf16>, vector<36x32xf32> -> vector<36x32xf32>
    %42 = vector.extract_strided_slice %41 {offsets = [0, 0], sizes = [9, 32], strides = [1, 1]} : vector<36x32xf32> to vector<9x32xf32>
    %43 = vector.extract_strided_slice %39 {offsets = [0, 0, 0], sizes = [1, 9, 32], strides = [1, 1, 1]} : vector<4x9x32xf32> to vector<1x9x32xf32>
    %44 = vector.shape_cast %43 : vector<1x9x32xf32> to vector<9x32xf32>
    %45 = arith.mulf %42, %44 : vector<9x32xf32>
    %46 = vector.extract_strided_slice %41 {offsets = [9, 0], sizes = [9, 32], strides = [1, 1]} : vector<36x32xf32> to vector<9x32xf32>
    %47 = vector.extract_strided_slice %39 {offsets = [1, 0, 0], sizes = [1, 9, 32], strides = [1, 1, 1]} : vector<4x9x32xf32> to vector<1x9x32xf32>
    %48 = vector.shape_cast %47 : vector<1x9x32xf32> to vector<9x32xf32>
    %49 = arith.mulf %46, %48 : vector<9x32xf32>
    %50 = arith.addf %45, %49 : vector<9x32xf32>
    %51 = vector.extract_strided_slice %41 {offsets = [18, 0], sizes = [9, 32], strides = [1, 1]} : vector<36x32xf32> to vector<9x32xf32>
    %52 = vector.extract_strided_slice %39 {offsets = [2, 0, 0], sizes = [1, 9, 32], strides = [1, 1, 1]} : vector<4x9x32xf32> to vector<1x9x32xf32>
    %53 = vector.shape_cast %52 : vector<1x9x32xf32> to vector<9x32xf32>
    %54 = arith.mulf %51, %53 : vector<9x32xf32>
    %55 = arith.addf %50, %54 : vector<9x32xf32>
    %56 = vector.extract_strided_slice %41 {offsets = [27, 0], sizes = [9, 32], strides = [1, 1]} : vector<36x32xf32> to vector<9x32xf32>
    %57 = vector.extract_strided_slice %39 {offsets = [3, 0, 0], sizes = [1, 9, 32], strides = [1, 1, 1]} : vector<4x9x32xf32> to vector<1x9x32xf32>
    %58 = vector.shape_cast %57 : vector<1x9x32xf32> to vector<9x32xf32>
    %59 = arith.mulf %56, %58 : vector<9x32xf32>
    %60 = arith.addf %55, %59 : vector<9x32xf32>
    %c0_26 = arith.constant 0 : index
    %c0_27 = arith.constant 0 : index
    %c0_28 = arith.constant 0 : index
    %61 = vector.load %arg12[%c0_26, %c0_27, %c0_28] : memref<4x9x32xf32, #tpu.memory_space<vmem>>, vector<4x9x32xf32>
    %62 = arith.truncf %36 : vector<33x32xf32> to vector<33x32xbf16>
    %cst_29 = arith.constant dense<0.000000e+00> : vector<36x32xf32>
    %63 = tpu.matmul %38, %62, %cst_29 {dimension_numbers = #tpu.dot_dimension_numbers<[1], [0], [0], [1], [0, 0, 1, 1], [], []>} : vector<36x33xbf16>, vector<33x32xbf16>, vector<36x32xf32> -> vector<36x32xf32>
    %64 = vector.extract_strided_slice %63 {offsets = [0, 0], sizes = [9, 32], strides = [1, 1]} : vector<36x32xf32> to vector<9x32xf32>
    %65 = vector.extract_strided_slice %61 {offsets = [0, 0, 0], sizes = [1, 9, 32], strides = [1, 1, 1]} : vector<4x9x32xf32> to vector<1x9x32xf32>
    %66 = vector.shape_cast %65 : vector<1x9x32xf32> to vector<9x32xf32>
    %67 = arith.mulf %64, %66 : vector<9x32xf32>
    %68 = vector.extract_strided_slice %63 {offsets = [9, 0], sizes = [9, 32], strides = [1, 1]} : vector<36x32xf32> to vector<9x32xf32>
    %69 = vector.extract_strided_slice %61 {offsets = [1, 0, 0], sizes = [1, 9, 32], strides = [1, 1, 1]} : vector<4x9x32xf32> to vector<1x9x32xf32>
    %70 = vector.shape_cast %69 : vector<1x9x32xf32> to vector<9x32xf32>
    %71 = arith.mulf %68, %70 : vector<9x32xf32>
    %72 = arith.addf %67, %71 : vector<9x32xf32>
    %73 = vector.extract_strided_slice %63 {offsets = [18, 0], sizes = [9, 32], strides = [1, 1]} : vector<36x32xf32> to vector<9x32xf32>
    %74 = vector.extract_strided_slice %61 {offsets = [2, 0, 0], sizes = [1, 9, 32], strides = [1, 1, 1]} : vector<4x9x32xf32> to vector<1x9x32xf32>
    %75 = vector.shape_cast %74 : vector<1x9x32xf32> to vector<9x32xf32>
    %76 = arith.mulf %73, %75 : vector<9x32xf32>
    %77 = arith.addf %72, %76 : vector<9x32xf32>
    %78 = vector.extract_strided_slice %63 {offsets = [27, 0], sizes = [9, 32], strides = [1, 1]} : vector<36x32xf32> to vector<9x32xf32>
    %79 = vector.extract_strided_slice %61 {offsets = [3, 0, 0], sizes = [1, 9, 32], strides = [1, 1, 1]} : vector<4x9x32xf32> to vector<1x9x32xf32>
    %80 = vector.shape_cast %79 : vector<1x9x32xf32> to vector<9x32xf32>
    %81 = arith.mulf %78, %80 : vector<9x32xf32>
    %82 = arith.addf %77, %81 : vector<9x32xf32>
    %c0_30 = arith.constant 0 : index
    %c0_31 = arith.constant 0 : index
    %83 = vector.load %arg15[%c0_30, %c0_31] : memref<32x32xbf16, #tpu.memory_space<vmem>>, vector<32x32xbf16>
    %c0_32 = arith.constant 0 : index
    %c0_33 = arith.constant 0 : index
    %84 = vector.load %arg10[%c0_32, %c0_33] : memref<1x32xf32, #tpu.memory_space<vmem>>, vector<1x32xf32>
    %c0_34 = arith.constant 0 : index
    %c0_35 = arith.constant 0 : index
    %85 = vector.load %arg11[%c0_34, %c0_35] : memref<1x32xf32, #tpu.memory_space<vmem>>, vector<1x32xf32>
    %cst_36 = arith.constant dense<0.000000e+00> : vector<9xf32>
    %86 = vector.multi_reduction <add>, %60, %cst_36 [1] : vector<9x32xf32> to vector<9xf32>
    %87 = vector.shape_cast %86 : vector<9xf32> to vector<9x1xf32>
    %cst_37 = arith.constant 3.200000e+01 : f32
    %88 = vector.broadcast %cst_37 : f32 to vector<9x1xf32>
    %89 = arith.divf %87, %88 : vector<9x1xf32>
    %90 = vector.broadcast %89 : vector<9x1xf32> to vector<9x32xf32>
    %91 = arith.subf %60, %90 : vector<9x32xf32>
    %92 = arith.mulf %91, %91 : vector<9x32xf32>
    %cst_38 = arith.constant dense<0.000000e+00> : vector<9xf32>
    %93 = vector.multi_reduction <add>, %92, %cst_38 [1] : vector<9x32xf32> to vector<9xf32>
    %94 = vector.shape_cast %93 : vector<9xf32> to vector<9x1xf32>
    %cst_39 = arith.constant 3.200000e+01 : f32
    %95 = vector.broadcast %cst_39 : f32 to vector<9x1xf32>
    %96 = arith.divf %94, %95 : vector<9x1xf32>
    %cst_40 = arith.constant 9.99999997E-7 : f32
    %97 = vector.broadcast %cst_40 : f32 to vector<9x1xf32>
    %98 = arith.addf %96, %97 : vector<9x1xf32>
    %99 = math.rsqrt %98 : vector<9x1xf32>
    %100 = vector.broadcast %99 : vector<9x1xf32> to vector<9x32xf32>
    %101 = arith.mulf %91, %100 : vector<9x32xf32>
    %102 = vector.broadcast %84 : vector<1x32xf32> to vector<9x32xf32>
    %103 = arith.mulf %101, %102 : vector<9x32xf32>
    %104 = vector.broadcast %85 : vector<1x32xf32> to vector<9x32xf32>
    %105 = arith.addf %103, %104 : vector<9x32xf32>
    %c0_41 = arith.constant 0 : index
    %c0_42 = arith.constant 0 : index
    %106 = vector.load %arg13[%c0_41, %c0_42] : memref<1x32xf32, #tpu.memory_space<vmem>>, vector<1x32xf32>
    %c0_43 = arith.constant 0 : index
    %c0_44 = arith.constant 0 : index
    %107 = vector.load %arg14[%c0_43, %c0_44] : memref<1x32xf32, #tpu.memory_space<vmem>>, vector<1x32xf32>
    %cst_45 = arith.constant dense<0.000000e+00> : vector<9xf32>
    %108 = vector.multi_reduction <add>, %82, %cst_45 [1] : vector<9x32xf32> to vector<9xf32>
    %109 = vector.shape_cast %108 : vector<9xf32> to vector<9x1xf32>
    %cst_46 = arith.constant 3.200000e+01 : f32
    %110 = vector.broadcast %cst_46 : f32 to vector<9x1xf32>
    %111 = arith.divf %109, %110 : vector<9x1xf32>
    %112 = vector.broadcast %111 : vector<9x1xf32> to vector<9x32xf32>
    %113 = arith.subf %82, %112 : vector<9x32xf32>
    %114 = arith.mulf %113, %113 : vector<9x32xf32>
    %cst_47 = arith.constant dense<0.000000e+00> : vector<9xf32>
    %115 = vector.multi_reduction <add>, %114, %cst_47 [1] : vector<9x32xf32> to vector<9xf32>
    %116 = vector.shape_cast %115 : vector<9xf32> to vector<9x1xf32>
    %cst_48 = arith.constant 3.200000e+01 : f32
    %117 = vector.broadcast %cst_48 : f32 to vector<9x1xf32>
    %118 = arith.divf %116, %117 : vector<9x1xf32>
    %cst_49 = arith.constant 9.99999997E-7 : f32
    %119 = vector.broadcast %cst_49 : f32 to vector<9x1xf32>
    %120 = arith.addf %118, %119 : vector<9x1xf32>
    %121 = math.rsqrt %120 : vector<9x1xf32>
    %122 = vector.broadcast %121 : vector<9x1xf32> to vector<9x32xf32>
    %123 = arith.mulf %113, %122 : vector<9x32xf32>
    %124 = vector.broadcast %106 : vector<1x32xf32> to vector<9x32xf32>
    %125 = arith.mulf %123, %124 : vector<9x32xf32>
    %126 = vector.broadcast %107 : vector<1x32xf32> to vector<9x32xf32>
    %127 = arith.addf %125, %126 : vector<9x32xf32>
    %cst_50 = arith.constant 0.176776692 : f32
    %128 = vector.broadcast %cst_50 : f32 to vector<33x32xf32>
    %129 = arith.mulf %34, %128 : vector<33x32xf32>
    %130 = arith.truncf %129 : vector<33x32xf32> to vector<33x32xbf16>
    %131 = arith.truncf %105 : vector<9x32xf32> to vector<9x32xbf16>
    %cst_51 = arith.constant dense<0.000000e+00> : vector<33x9xf32>
    %132 = tpu.matmul %130, %131, %cst_51 {dimension_numbers = #tpu.dot_dimension_numbers<[1], [1], [0], [0], [0, 0, 1, 0], [], []>} : vector<33x32xbf16>, vector<9x32xbf16>, vector<33x9xf32> -> vector<33x9xf32>
    %cst_52 = arith.constant dense<0xFF800000> : vector<33xf32>
    %133 = vector.multi_reduction <maximumf>, %132, %cst_52 [1] : vector<33x9xf32> to vector<33xf32>
    %134 = vector.shape_cast %133 : vector<33xf32> to vector<33x1xf32>
    %135 = vector.broadcast %134 : vector<33x1xf32> to vector<33x9xf32>
    %136 = arith.subf %132, %135 : vector<33x9xf32>
    %137 = math.exp %136 : vector<33x9xf32>
    %cst_53 = arith.constant dense<0.000000e+00> : vector<33xf32>
    %138 = vector.multi_reduction <add>, %137, %cst_53 [1] : vector<33x9xf32> to vector<33xf32>
    %139 = vector.shape_cast %138 : vector<33xf32> to vector<33x1xf32>
    %140 = tpu.reciprocal %139 {approx = true} : vector<33x1xf32> -> vector<33x1xf32>
    %141 = vector.broadcast %140 : vector<33x1xf32> to vector<33x9xf32>
    %142 = arith.mulf %137, %141 : vector<33x9xf32>
    %143 = arith.truncf %127 : vector<9x32xf32> to vector<9x32xbf16>
    %144 = arith.truncf %142 : vector<33x9xf32> to vector<33x9xbf16>
    %cst_54 = arith.constant dense<0.000000e+00> : vector<33x32xf32>
    %145 = tpu.matmul %144, %143, %cst_54 {dimension_numbers = #tpu.dot_dimension_numbers<[1], [0], [0], [1], [0, 0, 1, 1], [], []>} : vector<33x9xbf16>, vector<9x32xbf16>, vector<33x32xf32> -> vector<33x32xf32>
    %146 = arith.truncf %145 : vector<33x32xf32> to vector<33x32xbf16>
    %cst_55 = arith.constant dense<0.000000e+00> : vector<33x32xf32>
    %147 = tpu.matmul %146, %83, %cst_55 {dimension_numbers = #tpu.dot_dimension_numbers<[1], [0], [0], [1], [0, 0, 1, 1], [], []>} : vector<33x32xbf16>, vector<32x32xbf16>, vector<33x32xf32> -> vector<33x32xf32>
    %c0_56 = arith.constant 0 : index
    %c0_57 = arith.constant 0 : index
    %148 = vector.load %arg16[%c0_56, %c0_57] : memref<1x32xf32, #tpu.memory_space<vmem>>, vector<1x32xf32>
    %149 = vector.broadcast %148 : vector<1x32xf32> to vector<33x32xf32>
    %150 = arith.addf %147, %149 : vector<33x32xf32>
    %151 = arith.addf %5, %150 : vector<33x32xf32>
    %c0_58 = arith.constant 0 : index
    %c0_59 = arith.constant 0 : index
    %152 = vector.load %arg17[%c0_58, %c0_59] : memref<1x32xf32, #tpu.memory_space<vmem>>, vector<1x32xf32>
    %c0_60 = arith.constant 0 : index
    %c0_61 = arith.constant 0 : index
    %153 = vector.load %arg18[%c0_60, %c0_61] : memref<1x32xf32, #tpu.memory_space<vmem>>, vector<1x32xf32>
    %cst_62 = arith.constant dense<0.000000e+00> : vector<33xf32>
    %154 = vector.multi_reduction <add>, %151, %cst_62 [1] : vector<33x32xf32> to vector<33xf32>
    %155 = vector.shape_cast %154 : vector<33xf32> to vector<33x1xf32>
    %cst_63 = arith.constant 3.200000e+01 : f32
    %156 = vector.broadcast %cst_63 : f32 to vector<33x1xf32>
    %157 = arith.divf %155, %156 : vector<33x1xf32>
    %158 = vector.broadcast %157 : vector<33x1xf32> to vector<33x32xf32>
    %159 = arith.subf %151, %158 : vector<33x32xf32>
    %160 = arith.mulf %159, %159 : vector<33x32xf32>
    %cst_64 = arith.constant dense<0.000000e+00> : vector<33xf32>
    %161 = vector.multi_reduction <add>, %160, %cst_64 [1] : vector<33x32xf32> to vector<33xf32>
    %162 = vector.shape_cast %161 : vector<33xf32> to vector<33x1xf32>
    %cst_65 = arith.constant 3.200000e+01 : f32
    %163 = vector.broadcast %cst_65 : f32 to vector<33x1xf32>
    %164 = arith.divf %162, %163 : vector<33x1xf32>
    %cst_66 = arith.constant 9.99999997E-7 : f32
    %165 = vector.broadcast %cst_66 : f32 to vector<33x1xf32>
    %166 = arith.addf %164, %165 : vector<33x1xf32>
    %167 = math.rsqrt %166 : vector<33x1xf32>
    %168 = vector.broadcast %167 : vector<33x1xf32> to vector<33x32xf32>
    %169 = arith.mulf %159, %168 : vector<33x32xf32>
    %170 = vector.broadcast %152 : vector<1x32xf32> to vector<33x32xf32>
    %171 = arith.mulf %169, %170 : vector<33x32xf32>
    %172 = vector.broadcast %153 : vector<1x32xf32> to vector<33x32xf32>
    %173 = arith.addf %171, %172 : vector<33x32xf32>
    %174 = arith.truncf %173 : vector<33x32xf32> to vector<33x32xbf16>
    %c0_67 = arith.constant 0 : index
    %c0_68 = arith.constant 0 : index
    %175 = vector.load %arg19[%c0_67, %c0_68] : memref<32x128xbf16, #tpu.memory_space<vmem>>, vector<32x128xbf16>
    %cst_69 = arith.constant dense<0.000000e+00> : vector<33x128xf32>
    %176 = tpu.matmul %174, %175, %cst_69 {dimension_numbers = #tpu.dot_dimension_numbers<[1], [0], [0], [1], [0, 0, 1, 1], [], []>} : vector<33x32xbf16>, vector<32x128xbf16>, vector<33x128xf32> -> vector<33x128xf32>
    %c0_70 = arith.constant 0 : index
    %c0_71 = arith.constant 0 : index
    %177 = vector.load %arg20[%c0_70, %c0_71] : memref<1x128xf32, #tpu.memory_space<vmem>>, vector<1x128xf32>
    %178 = vector.broadcast %177 : vector<1x128xf32> to vector<33x128xf32>
    %179 = arith.addf %176, %178 : vector<33x128xf32>
    %cst_72 = arith.constant 5.000000e-01 : f32
    %180 = vector.broadcast %cst_72 : f32 to vector<33x128xf32>
    %181 = arith.mulf %180, %179 : vector<33x128xf32>
    %cst_73 = arith.constant 4.471500e-02 : f32
    %182 = vector.broadcast %cst_73 : f32 to vector<33x128xf32>
    %183 = arith.mulf %182, %179 : vector<33x128xf32>
    %184 = arith.mulf %183, %179 : vector<33x128xf32>
    %185 = arith.mulf %184, %179 : vector<33x128xf32>
    %186 = arith.addf %179, %185 : vector<33x128xf32>
    %cst_74 = arith.constant 0.797884583 : f32
    %187 = vector.broadcast %cst_74 : f32 to vector<33x128xf32>
    %188 = arith.mulf %187, %186 : vector<33x128xf32>
    %189 = math.tanh %188 : vector<33x128xf32>
    %cst_75 = arith.constant 1.000000e+00 : f32
    %190 = vector.broadcast %cst_75 : f32 to vector<33x128xf32>
    %191 = arith.addf %190, %189 : vector<33x128xf32>
    %192 = arith.mulf %181, %191 : vector<33x128xf32>
    %c0_76 = arith.constant 0 : index
    %c0_77 = arith.constant 0 : index
    %193 = vector.load %arg21[%c0_76, %c0_77] : memref<128x32xbf16, #tpu.memory_space<vmem>>, vector<128x32xbf16>
    %194 = arith.truncf %192 : vector<33x128xf32> to vector<33x128xbf16>
    %cst_78 = arith.constant dense<0.000000e+00> : vector<33x32xf32>
    %195 = tpu.matmul %194, %193, %cst_78 {dimension_numbers = #tpu.dot_dimension_numbers<[1], [0], [0], [1], [0, 0, 1, 1], [], []>} : vector<33x128xbf16>, vector<128x32xbf16>, vector<33x32xf32> -> vector<33x32xf32>
    %c0_79 = arith.constant 0 : index
    %c0_80 = arith.constant 0 : index
    %196 = vector.load %arg22[%c0_79, %c0_80] : memref<1x32xf32, #tpu.memory_space<vmem>>, vector<1x32xf32>
    %197 = vector.broadcast %196 : vector<1x32xf32> to vector<33x32xf32>
    %198 = arith.addf %195, %197 : vector<33x32xf32>
    %199 = arith.addf %151, %198 : vector<33x32xf32>
    %c0_81 = arith.constant 0 : index
    %c0_82 = arith.constant 0 : index
    %200 = vector.load %arg23[%c0_81, %c0_82] : memref<1x32xf32, #tpu.memory_space<vmem>>, vector<1x32xf32>
    %c0_83 = arith.constant 0 : index
    %c0_84 = arith.constant 0 : index
    %201 = vector.load %arg24[%c0_83, %c0_84] : memref<1x32xf32, #tpu.memory_space<vmem>>, vector<1x32xf32>
    %cst_85 = arith.constant dense<0.000000e+00> : vector<33xf32>
    %202 = vector.multi_reduction <add>, %199, %cst_85 [1] : vector<33x32xf32> to vector<33xf32>
    %203 = vector.shape_cast %202 : vector<33xf32> to vector<33x1xf32>
    %cst_86 = arith.constant 3.200000e+01 : f32
    %204 = vector.broadcast %cst_86 : f32 to vector<33x1xf32>
    %205 = arith.divf %203, %204 : vector<33x1xf32>
    %206 = vector.broadcast %205 : vector<33x1xf32> to vector<33x32xf32>
    %207 = arith.subf %199, %206 : vector<33x32xf32>
    %208 = arith.mulf %207, %207 : vector<33x32xf32>
    %cst_87 = arith.constant dense<0.000000e+00> : vector<33xf32>
    %209 = vector.multi_reduction <add>, %208, %cst_87 [1] : vector<33x32xf32> to vector<33xf32>
    %210 = vector.shape_cast %209 : vector<33xf32> to vector<33x1xf32>
    %cst_88 = arith.constant 3.200000e+01 : f32
    %211 = vector.broadcast %cst_88 : f32 to vector<33x1xf32>
    %212 = arith.divf %210, %211 : vector<33x1xf32>
    %cst_89 = arith.constant 9.99999997E-7 : f32
    %213 = vector.broadcast %cst_89 : f32 to vector<33x1xf32>
    %214 = arith.addf %212, %213 : vector<33x1xf32>
    %215 = math.rsqrt %214 : vector<33x1xf32>
    %216 = vector.broadcast %215 : vector<33x1xf32> to vector<33x32xf32>
    %217 = arith.mulf %207, %216 : vector<33x32xf32>
    %218 = vector.broadcast %200 : vector<1x32xf32> to vector<33x32xf32>
    %219 = arith.mulf %217, %218 : vector<33x32xf32>
    %220 = vector.broadcast %201 : vector<1x32xf32> to vector<33x32xf32>
    %221 = arith.addf %219, %220 : vector<33x32xf32>
    %c0_90 = arith.constant 0 : index
    %c0_91 = arith.constant 0 : index
    %222 = vector.load %arg25[%c0_90, %c0_91] : memref<32x96xbf16, #tpu.memory_space<vmem>>, vector<32x96xbf16>
    %223 = arith.truncf %221 : vector<33x32xf32> to vector<33x32xbf16>
    %cst_92 = arith.constant dense<0.000000e+00> : vector<33x96xf32>
    %224 = tpu.matmul %223, %222, %cst_92 {dimension_numbers = #tpu.dot_dimension_numbers<[1], [0], [0], [1], [0, 0, 1, 1], [], []>} : vector<33x32xbf16>, vector<32x96xbf16>, vector<33x96xf32> -> vector<33x96xf32>
    %c0_93 = arith.constant 0 : index
    %c0_94 = arith.constant 0 : index
    %225 = vector.load %arg26[%c0_93, %c0_94] : memref<1x96xf32, #tpu.memory_space<vmem>>, vector<1x96xf32>
    %226 = vector.broadcast %225 : vector<1x96xf32> to vector<33x96xf32>
    %227 = arith.addf %224, %226 : vector<33x96xf32>
    %228 = vector.extract_strided_slice %227 {offsets = [0, 0], sizes = [33, 32], strides = [1, 1]} : vector<33x96xf32> to vector<33x32xf32>
    %229 = vector.extract_strided_slice %227 {offsets = [0, 32], sizes = [33, 32], strides = [1, 1]} : vector<33x96xf32> to vector<33x32xf32>
    %230 = vector.extract_strided_slice %227 {offsets = [0, 64], sizes = [33, 32], strides = [1, 1]} : vector<33x96xf32> to vector<33x32xf32>
    %c0_95 = arith.constant 0 : index
    %c0_96 = arith.constant 0 : index
    %231 = vector.load %arg31[%c0_95, %c0_96] : memref<36x33xf32, #tpu.memory_space<vmem>>, vector<36x33xf32>
    %232 = arith.truncf %231 : vector<36x33xf32> to vector<36x33xbf16>
    %c0_97 = arith.constant 0 : index
    %c0_98 = arith.constant 0 : index
    %c0_99 = arith.constant 0 : index
    %233 = vector.load %arg32[%c0_97, %c0_98, %c0_99] : memref<4x9x32xf32, #tpu.memory_space<vmem>>, vector<4x9x32xf32>
    %234 = arith.truncf %229 : vector<33x32xf32> to vector<33x32xbf16>
    %cst_100 = arith.constant dense<0.000000e+00> : vector<36x32xf32>
    %235 = tpu.matmul %232, %234, %cst_100 {dimension_numbers = #tpu.dot_dimension_numbers<[1], [0], [0], [1], [0, 0, 1, 1], [], []>} : vector<36x33xbf16>, vector<33x32xbf16>, vector<36x32xf32> -> vector<36x32xf32>
    %236 = vector.extract_strided_slice %235 {offsets = [0, 0], sizes = [9, 32], strides = [1, 1]} : vector<36x32xf32> to vector<9x32xf32>
    %237 = vector.extract_strided_slice %233 {offsets = [0, 0, 0], sizes = [1, 9, 32], strides = [1, 1, 1]} : vector<4x9x32xf32> to vector<1x9x32xf32>
    %238 = vector.shape_cast %237 : vector<1x9x32xf32> to vector<9x32xf32>
    %239 = arith.mulf %236, %238 : vector<9x32xf32>
    %240 = vector.extract_strided_slice %235 {offsets = [9, 0], sizes = [9, 32], strides = [1, 1]} : vector<36x32xf32> to vector<9x32xf32>
    %241 = vector.extract_strided_slice %233 {offsets = [1, 0, 0], sizes = [1, 9, 32], strides = [1, 1, 1]} : vector<4x9x32xf32> to vector<1x9x32xf32>
    %242 = vector.shape_cast %241 : vector<1x9x32xf32> to vector<9x32xf32>
    %243 = arith.mulf %240, %242 : vector<9x32xf32>
    %244 = arith.addf %239, %243 : vector<9x32xf32>
    %245 = vector.extract_strided_slice %235 {offsets = [18, 0], sizes = [9, 32], strides = [1, 1]} : vector<36x32xf32> to vector<9x32xf32>
    %246 = vector.extract_strided_slice %233 {offsets = [2, 0, 0], sizes = [1, 9, 32], strides = [1, 1, 1]} : vector<4x9x32xf32> to vector<1x9x32xf32>
    %247 = vector.shape_cast %246 : vector<1x9x32xf32> to vector<9x32xf32>
    %248 = arith.mulf %245, %247 : vector<9x32xf32>
    %249 = arith.addf %244, %248 : vector<9x32xf32>
    %250 = vector.extract_strided_slice %235 {offsets = [27, 0], sizes = [9, 32], strides = [1, 1]} : vector<36x32xf32> to vector<9x32xf32>
    %251 = vector.extract_strided_slice %233 {offsets = [3, 0, 0], sizes = [1, 9, 32], strides = [1, 1, 1]} : vector<4x9x32xf32> to vector<1x9x32xf32>
    %252 = vector.shape_cast %251 : vector<1x9x32xf32> to vector<9x32xf32>
    %253 = arith.mulf %250, %252 : vector<9x32xf32>
    %254 = arith.addf %249, %253 : vector<9x32xf32>
    %c0_101 = arith.constant 0 : index
    %c0_102 = arith.constant 0 : index
    %c0_103 = arith.constant 0 : index
    %255 = vector.load %arg35[%c0_101, %c0_102, %c0_103] : memref<4x9x32xf32, #tpu.memory_space<vmem>>, vector<4x9x32xf32>
    %256 = arith.truncf %230 : vector<33x32xf32> to vector<33x32xbf16>
    %cst_104 = arith.constant dense<0.000000e+00> : vector<36x32xf32>
    %257 = tpu.matmul %232, %256, %cst_104 {dimension_numbers = #tpu.dot_dimension_numbers<[1], [0], [0], [1], [0, 0, 1, 1], [], []>} : vector<36x33xbf16>, vector<33x32xbf16>, vector<36x32xf32> -> vector<36x32xf32>
    %258 = vector.extract_strided_slice %257 {offsets = [0, 0], sizes = [9, 32], strides = [1, 1]} : vector<36x32xf32> to vector<9x32xf32>
    %259 = vector.extract_strided_slice %255 {offsets = [0, 0, 0], sizes = [1, 9, 32], strides = [1, 1, 1]} : vector<4x9x32xf32> to vector<1x9x32xf32>
    %260 = vector.shape_cast %259 : vector<1x9x32xf32> to vector<9x32xf32>
    %261 = arith.mulf %258, %260 : vector<9x32xf32>
    %262 = vector.extract_strided_slice %257 {offsets = [9, 0], sizes = [9, 32], strides = [1, 1]} : vector<36x32xf32> to vector<9x32xf32>
    %263 = vector.extract_strided_slice %255 {offsets = [1, 0, 0], sizes = [1, 9, 32], strides = [1, 1, 1]} : vector<4x9x32xf32> to vector<1x9x32xf32>
    %264 = vector.shape_cast %263 : vector<1x9x32xf32> to vector<9x32xf32>
    %265 = arith.mulf %262, %264 : vector<9x32xf32>
    %266 = arith.addf %261, %265 : vector<9x32xf32>
    %267 = vector.extract_strided_slice %257 {offsets = [18, 0], sizes = [9, 32], strides = [1, 1]} : vector<36x32xf32> to vector<9x32xf32>
    %268 = vector.extract_strided_slice %255 {offsets = [2, 0, 0], sizes = [1, 9, 32], strides = [1, 1, 1]} : vector<4x9x32xf32> to vector<1x9x32xf32>
    %269 = vector.shape_cast %268 : vector<1x9x32xf32> to vector<9x32xf32>
    %270 = arith.mulf %267, %269 : vector<9x32xf32>
    %271 = arith.addf %266, %270 : vector<9x32xf32>
    %272 = vector.extract_strided_slice %257 {offsets = [27, 0], sizes = [9, 32], strides = [1, 1]} : vector<36x32xf32> to vector<9x32xf32>
    %273 = vector.extract_strided_slice %255 {offsets = [3, 0, 0], sizes = [1, 9, 32], strides = [1, 1, 1]} : vector<4x9x32xf32> to vector<1x9x32xf32>
    %274 = vector.shape_cast %273 : vector<1x9x32xf32> to vector<9x32xf32>
    %275 = arith.mulf %272, %274 : vector<9x32xf32>
    %276 = arith.addf %271, %275 : vector<9x32xf32>
    %c0_105 = arith.constant 0 : index
    %c0_106 = arith.constant 0 : index
    %277 = vector.load %arg27[%c0_105, %c0_106] : memref<36x33xf32, #tpu.memory_space<vmem>>, vector<36x33xf32>
    %278 = arith.truncf %277 : vector<36x33xf32> to vector<36x33xbf16>
    %c0_107 = arith.constant 0 : index
    %c0_108 = arith.constant 0 : index
    %c0_109 = arith.constant 0 : index
    %279 = vector.load %arg28[%c0_107, %c0_108, %c0_109] : memref<4x9x32xf32, #tpu.memory_space<vmem>>, vector<4x9x32xf32>
    %280 = arith.truncf %228 : vector<33x32xf32> to vector<33x32xbf16>
    %cst_110 = arith.constant dense<0.000000e+00> : vector<36x32xf32>
    %281 = tpu.matmul %278, %280, %cst_110 {dimension_numbers = #tpu.dot_dimension_numbers<[1], [0], [0], [1], [0, 0, 1, 1], [], []>} : vector<36x33xbf16>, vector<33x32xbf16>, vector<36x32xf32> -> vector<36x32xf32>
    %282 = vector.extract_strided_slice %281 {offsets = [0, 0], sizes = [9, 32], strides = [1, 1]} : vector<36x32xf32> to vector<9x32xf32>
    %283 = vector.extract_strided_slice %279 {offsets = [0, 0, 0], sizes = [1, 9, 32], strides = [1, 1, 1]} : vector<4x9x32xf32> to vector<1x9x32xf32>
    %284 = vector.shape_cast %283 : vector<1x9x32xf32> to vector<9x32xf32>
    %285 = arith.mulf %282, %284 : vector<9x32xf32>
    %286 = vector.extract_strided_slice %281 {offsets = [9, 0], sizes = [9, 32], strides = [1, 1]} : vector<36x32xf32> to vector<9x32xf32>
    %287 = vector.extract_strided_slice %279 {offsets = [1, 0, 0], sizes = [1, 9, 32], strides = [1, 1, 1]} : vector<4x9x32xf32> to vector<1x9x32xf32>
    %288 = vector.shape_cast %287 : vector<1x9x32xf32> to vector<9x32xf32>
    %289 = arith.mulf %286, %288 : vector<9x32xf32>
    %290 = arith.addf %285, %289 : vector<9x32xf32>
    %291 = vector.extract_strided_slice %281 {offsets = [18, 0], sizes = [9, 32], strides = [1, 1]} : vector<36x32xf32> to vector<9x32xf32>
    %292 = vector.extract_strided_slice %279 {offsets = [2, 0, 0], sizes = [1, 9, 32], strides = [1, 1, 1]} : vector<4x9x32xf32> to vector<1x9x32xf32>
    %293 = vector.shape_cast %292 : vector<1x9x32xf32> to vector<9x32xf32>
    %294 = arith.mulf %291, %293 : vector<9x32xf32>
    %295 = arith.addf %290, %294 : vector<9x32xf32>
    %296 = vector.extract_strided_slice %281 {offsets = [27, 0], sizes = [9, 32], strides = [1, 1]} : vector<36x32xf32> to vector<9x32xf32>
    %297 = vector.extract_strided_slice %279 {offsets = [3, 0, 0], sizes = [1, 9, 32], strides = [1, 1, 1]} : vector<4x9x32xf32> to vector<1x9x32xf32>
    %298 = vector.shape_cast %297 : vector<1x9x32xf32> to vector<9x32xf32>
    %299 = arith.mulf %296, %298 : vector<9x32xf32>
    %300 = arith.addf %295, %299 : vector<9x32xf32>
    %c0_111 = arith.constant 0 : index
    %c0_112 = arith.constant 0 : index
    %301 = vector.load %arg38[%c0_111, %c0_112] : memref<32x32xbf16, #tpu.memory_space<vmem>>, vector<32x32xbf16>
    %302 = vector.extract_strided_slice %300 {offsets = [0, 0], sizes = [9, 16], strides = [1, 1]} : vector<9x32xf32> to vector<9x16xf32>
    %303 = vector.extract_strided_slice %254 {offsets = [0, 0], sizes = [9, 16], strides = [1, 1]} : vector<9x32xf32> to vector<9x16xf32>
    %304 = vector.extract_strided_slice %276 {offsets = [0, 0], sizes = [9, 16], strides = [1, 1]} : vector<9x32xf32> to vector<9x16xf32>
    %c0_113 = arith.constant 0 : index
    %c0_114 = arith.constant 0 : index
    %305 = vector.load %arg29[%c0_113, %c0_114] : memref<1x16xf32, #tpu.memory_space<vmem>>, vector<1x16xf32>
    %c0_115 = arith.constant 0 : index
    %c0_116 = arith.constant 0 : index
    %306 = vector.load %arg30[%c0_115, %c0_116] : memref<1x16xf32, #tpu.memory_space<vmem>>, vector<1x16xf32>
    %cst_117 = arith.constant dense<0.000000e+00> : vector<9xf32>
    %307 = vector.multi_reduction <add>, %302, %cst_117 [1] : vector<9x16xf32> to vector<9xf32>
    %308 = vector.shape_cast %307 : vector<9xf32> to vector<9x1xf32>
    %cst_118 = arith.constant 1.600000e+01 : f32
    %309 = vector.broadcast %cst_118 : f32 to vector<9x1xf32>
    %310 = arith.divf %308, %309 : vector<9x1xf32>
    %311 = vector.broadcast %310 : vector<9x1xf32> to vector<9x16xf32>
    %312 = arith.subf %302, %311 : vector<9x16xf32>
    %313 = arith.mulf %312, %312 : vector<9x16xf32>
    %cst_119 = arith.constant dense<0.000000e+00> : vector<9xf32>
    %314 = vector.multi_reduction <add>, %313, %cst_119 [1] : vector<9x16xf32> to vector<9xf32>
    %315 = vector.shape_cast %314 : vector<9xf32> to vector<9x1xf32>
    %cst_120 = arith.constant 1.600000e+01 : f32
    %316 = vector.broadcast %cst_120 : f32 to vector<9x1xf32>
    %317 = arith.divf %315, %316 : vector<9x1xf32>
    %cst_121 = arith.constant 9.99999997E-7 : f32
    %318 = vector.broadcast %cst_121 : f32 to vector<9x1xf32>
    %319 = arith.addf %317, %318 : vector<9x1xf32>
    %320 = math.rsqrt %319 : vector<9x1xf32>
    %321 = vector.broadcast %320 : vector<9x1xf32> to vector<9x16xf32>
    %322 = arith.mulf %312, %321 : vector<9x16xf32>
    %323 = vector.broadcast %305 : vector<1x16xf32> to vector<9x16xf32>
    %324 = arith.mulf %322, %323 : vector<9x16xf32>
    %325 = vector.broadcast %306 : vector<1x16xf32> to vector<9x16xf32>
    %326 = arith.addf %324, %325 : vector<9x16xf32>
    %c0_122 = arith.constant 0 : index
    %c0_123 = arith.constant 0 : index
    %327 = vector.load %arg33[%c0_122, %c0_123] : memref<1x16xf32, #tpu.memory_space<vmem>>, vector<1x16xf32>
    %c0_124 = arith.constant 0 : index
    %c0_125 = arith.constant 0 : index
    %328 = vector.load %arg34[%c0_124, %c0_125] : memref<1x16xf32, #tpu.memory_space<vmem>>, vector<1x16xf32>
    %cst_126 = arith.constant dense<0.000000e+00> : vector<9xf32>
    %329 = vector.multi_reduction <add>, %303, %cst_126 [1] : vector<9x16xf32> to vector<9xf32>
    %330 = vector.shape_cast %329 : vector<9xf32> to vector<9x1xf32>
    %cst_127 = arith.constant 1.600000e+01 : f32
    %331 = vector.broadcast %cst_127 : f32 to vector<9x1xf32>
    %332 = arith.divf %330, %331 : vector<9x1xf32>
    %333 = vector.broadcast %332 : vector<9x1xf32> to vector<9x16xf32>
    %334 = arith.subf %303, %333 : vector<9x16xf32>
    %335 = arith.mulf %334, %334 : vector<9x16xf32>
    %cst_128 = arith.constant dense<0.000000e+00> : vector<9xf32>
    %336 = vector.multi_reduction <add>, %335, %cst_128 [1] : vector<9x16xf32> to vector<9xf32>
    %337 = vector.shape_cast %336 : vector<9xf32> to vector<9x1xf32>
    %cst_129 = arith.constant 1.600000e+01 : f32
    %338 = vector.broadcast %cst_129 : f32 to vector<9x1xf32>
    %339 = arith.divf %337, %338 : vector<9x1xf32>
    %cst_130 = arith.constant 9.99999997E-7 : f32
    %340 = vector.broadcast %cst_130 : f32 to vector<9x1xf32>
    %341 = arith.addf %339, %340 : vector<9x1xf32>
    %342 = math.rsqrt %341 : vector<9x1xf32>
    %343 = vector.broadcast %342 : vector<9x1xf32> to vector<9x16xf32>
    %344 = arith.mulf %334, %343 : vector<9x16xf32>
    %345 = vector.broadcast %327 : vector<1x16xf32> to vector<9x16xf32>
    %346 = arith.mulf %344, %345 : vector<9x16xf32>
    %347 = vector.broadcast %328 : vector<1x16xf32> to vector<9x16xf32>
    %348 = arith.addf %346, %347 : vector<9x16xf32>
    %c0_131 = arith.constant 0 : index
    %c0_132 = arith.constant 0 : index
    %349 = vector.load %arg36[%c0_131, %c0_132] : memref<1x16xf32, #tpu.memory_space<vmem>>, vector<1x16xf32>
    %c0_133 = arith.constant 0 : index
    %c0_134 = arith.constant 0 : index
    %350 = vector.load %arg37[%c0_133, %c0_134] : memref<1x16xf32, #tpu.memory_space<vmem>>, vector<1x16xf32>
    %cst_135 = arith.constant dense<0.000000e+00> : vector<9xf32>
    %351 = vector.multi_reduction <add>, %304, %cst_135 [1] : vector<9x16xf32> to vector<9xf32>
    %352 = vector.shape_cast %351 : vector<9xf32> to vector<9x1xf32>
    %cst_136 = arith.constant 1.600000e+01 : f32
    %353 = vector.broadcast %cst_136 : f32 to vector<9x1xf32>
    %354 = arith.divf %352, %353 : vector<9x1xf32>
    %355 = vector.broadcast %354 : vector<9x1xf32> to vector<9x16xf32>
    %356 = arith.subf %304, %355 : vector<9x16xf32>
    %357 = arith.mulf %356, %356 : vector<9x16xf32>
    %cst_137 = arith.constant dense<0.000000e+00> : vector<9xf32>
    %358 = vector.multi_reduction <add>, %357, %cst_137 [1] : vector<9x16xf32> to vector<9xf32>
    %359 = vector.shape_cast %358 : vector<9xf32> to vector<9x1xf32>
    %cst_138 = arith.constant 1.600000e+01 : f32
    %360 = vector.broadcast %cst_138 : f32 to vector<9x1xf32>
    %361 = arith.divf %359, %360 : vector<9x1xf32>
    %cst_139 = arith.constant 9.99999997E-7 : f32
    %362 = vector.broadcast %cst_139 : f32 to vector<9x1xf32>
    %363 = arith.addf %361, %362 : vector<9x1xf32>
    %364 = math.rsqrt %363 : vector<9x1xf32>
    %365 = vector.broadcast %364 : vector<9x1xf32> to vector<9x16xf32>
    %366 = arith.mulf %356, %365 : vector<9x16xf32>
    %367 = vector.broadcast %349 : vector<1x16xf32> to vector<9x16xf32>
    %368 = arith.mulf %366, %367 : vector<9x16xf32>
    %369 = vector.broadcast %350 : vector<1x16xf32> to vector<9x16xf32>
    %370 = arith.addf %368, %369 : vector<9x16xf32>
    %cst_140 = arith.constant 2.500000e-01 : f32
    %371 = vector.broadcast %cst_140 : f32 to vector<9x16xf32>
    %372 = arith.mulf %326, %371 : vector<9x16xf32>
    %373 = arith.truncf %372 : vector<9x16xf32> to vector<9x16xbf16>
    %374 = arith.truncf %348 : vector<9x16xf32> to vector<9x16xbf16>
    %cst_141 = arith.constant dense<0.000000e+00> : vector<9x9xf32>
    %375 = tpu.matmul %373, %374, %cst_141 {dimension_numbers = #tpu.dot_dimension_numbers<[1], [1], [0], [0], [0, 0, 1, 0], [], []>} : vector<9x16xbf16>, vector<9x16xbf16>, vector<9x9xf32> -> vector<9x9xf32>
    %cst_142 = arith.constant dense<0xFF800000> : vector<9xf32>
    %376 = vector.multi_reduction <maximumf>, %375, %cst_142 [1] : vector<9x9xf32> to vector<9xf32>
    %377 = vector.shape_cast %376 : vector<9xf32> to vector<9x1xf32>
    %378 = vector.broadcast %377 : vector<9x1xf32> to vector<9x9xf32>
    %379 = arith.subf %375, %378 : vector<9x9xf32>
    %380 = math.exp %379 : vector<9x9xf32>
    %cst_143 = arith.constant dense<0.000000e+00> : vector<9xf32>
    %381 = vector.multi_reduction <add>, %380, %cst_143 [1] : vector<9x9xf32> to vector<9xf32>
    %382 = vector.shape_cast %381 : vector<9xf32> to vector<9x1xf32>
    %383 = tpu.reciprocal %382 {approx = true} : vector<9x1xf32> -> vector<9x1xf32>
    %384 = vector.broadcast %383 : vector<9x1xf32> to vector<9x9xf32>
    %385 = arith.mulf %380, %384 : vector<9x9xf32>
    %386 = arith.truncf %370 : vector<9x16xf32> to vector<9x16xbf16>
    %387 = arith.truncf %385 : vector<9x9xf32> to vector<9x9xbf16>
    %cst_144 = arith.constant dense<0.000000e+00> : vector<9x16xf32>
    %388 = tpu.matmul %387, %386, %cst_144 {dimension_numbers = #tpu.dot_dimension_numbers<[1], [0], [0], [1], [0, 0, 1, 1], [], []>} : vector<9x9xbf16>, vector<9x16xbf16>, vector<9x16xf32> -> vector<9x16xf32>
    %389 = vector.extract_strided_slice %301 {offsets = [0, 0], sizes = [16, 32], strides = [1, 1]} : vector<32x32xbf16> to vector<16x32xbf16>
    %390 = arith.truncf %388 : vector<9x16xf32> to vector<9x16xbf16>
    %cst_145 = arith.constant dense<0.000000e+00> : vector<9x32xf32>
    %391 = tpu.matmul %390, %389, %cst_145 {dimension_numbers = #tpu.dot_dimension_numbers<[1], [0], [0], [1], [0, 0, 1, 1], [], []>} : vector<9x16xbf16>, vector<16x32xbf16>, vector<9x32xf32> -> vector<9x32xf32>
    %392 = vector.extract_strided_slice %300 {offsets = [0, 16], sizes = [9, 16], strides = [1, 1]} : vector<9x32xf32> to vector<9x16xf32>
    %393 = vector.extract_strided_slice %254 {offsets = [0, 16], sizes = [9, 16], strides = [1, 1]} : vector<9x32xf32> to vector<9x16xf32>
    %394 = vector.extract_strided_slice %276 {offsets = [0, 16], sizes = [9, 16], strides = [1, 1]} : vector<9x32xf32> to vector<9x16xf32>
    %c0_146 = arith.constant 0 : index
    %c0_147 = arith.constant 0 : index
    %395 = vector.load %arg29[%c0_146, %c0_147] : memref<1x16xf32, #tpu.memory_space<vmem>>, vector<1x16xf32>
    %c0_148 = arith.constant 0 : index
    %c0_149 = arith.constant 0 : index
    %396 = vector.load %arg30[%c0_148, %c0_149] : memref<1x16xf32, #tpu.memory_space<vmem>>, vector<1x16xf32>
    %cst_150 = arith.constant dense<0.000000e+00> : vector<9xf32>
    %397 = vector.multi_reduction <add>, %392, %cst_150 [1] : vector<9x16xf32> to vector<9xf32>
    %398 = vector.shape_cast %397 : vector<9xf32> to vector<9x1xf32>
    %cst_151 = arith.constant 1.600000e+01 : f32
    %399 = vector.broadcast %cst_151 : f32 to vector<9x1xf32>
    %400 = arith.divf %398, %399 : vector<9x1xf32>
    %401 = vector.broadcast %400 : vector<9x1xf32> to vector<9x16xf32>
    %402 = arith.subf %392, %401 : vector<9x16xf32>
    %403 = arith.mulf %402, %402 : vector<9x16xf32>
    %cst_152 = arith.constant dense<0.000000e+00> : vector<9xf32>
    %404 = vector.multi_reduction <add>, %403, %cst_152 [1] : vector<9x16xf32> to vector<9xf32>
    %405 = vector.shape_cast %404 : vector<9xf32> to vector<9x1xf32>
    %cst_153 = arith.constant 1.600000e+01 : f32
    %406 = vector.broadcast %cst_153 : f32 to vector<9x1xf32>
    %407 = arith.divf %405, %406 : vector<9x1xf32>
    %cst_154 = arith.constant 9.99999997E-7 : f32
    %408 = vector.broadcast %cst_154 : f32 to vector<9x1xf32>
    %409 = arith.addf %407, %408 : vector<9x1xf32>
    %410 = math.rsqrt %409 : vector<9x1xf32>
    %411 = vector.broadcast %410 : vector<9x1xf32> to vector<9x16xf32>
    %412 = arith.mulf %402, %411 : vector<9x16xf32>
    %413 = vector.broadcast %395 : vector<1x16xf32> to vector<9x16xf32>
    %414 = arith.mulf %412, %413 : vector<9x16xf32>
    %415 = vector.broadcast %396 : vector<1x16xf32> to vector<9x16xf32>
    %416 = arith.addf %414, %415 : vector<9x16xf32>
    %c0_155 = arith.constant 0 : index
    %c0_156 = arith.constant 0 : index
    %417 = vector.load %arg33[%c0_155, %c0_156] : memref<1x16xf32, #tpu.memory_space<vmem>>, vector<1x16xf32>
    %c0_157 = arith.constant 0 : index
    %c0_158 = arith.constant 0 : index
    %418 = vector.load %arg34[%c0_157, %c0_158] : memref<1x16xf32, #tpu.memory_space<vmem>>, vector<1x16xf32>
    %cst_159 = arith.constant dense<0.000000e+00> : vector<9xf32>
    %419 = vector.multi_reduction <add>, %393, %cst_159 [1] : vector<9x16xf32> to vector<9xf32>
    %420 = vector.shape_cast %419 : vector<9xf32> to vector<9x1xf32>
    %cst_160 = arith.constant 1.600000e+01 : f32
    %421 = vector.broadcast %cst_160 : f32 to vector<9x1xf32>
    %422 = arith.divf %420, %421 : vector<9x1xf32>
    %423 = vector.broadcast %422 : vector<9x1xf32> to vector<9x16xf32>
    %424 = arith.subf %393, %423 : vector<9x16xf32>
    %425 = arith.mulf %424, %424 : vector<9x16xf32>
    %cst_161 = arith.constant dense<0.000000e+00> : vector<9xf32>
    %426 = vector.multi_reduction <add>, %425, %cst_161 [1] : vector<9x16xf32> to vector<9xf32>
    %427 = vector.shape_cast %426 : vector<9xf32> to vector<9x1xf32>
    %cst_162 = arith.constant 1.600000e+01 : f32
    %428 = vector.broadcast %cst_162 : f32 to vector<9x1xf32>
    %429 = arith.divf %427, %428 : vector<9x1xf32>
    %cst_163 = arith.constant 9.99999997E-7 : f32
    %430 = vector.broadcast %cst_163 : f32 to vector<9x1xf32>
    %431 = arith.addf %429, %430 : vector<9x1xf32>
    %432 = math.rsqrt %431 : vector<9x1xf32>
    %433 = vector.broadcast %432 : vector<9x1xf32> to vector<9x16xf32>
    %434 = arith.mulf %424, %433 : vector<9x16xf32>
    %435 = vector.broadcast %417 : vector<1x16xf32> to vector<9x16xf32>
    %436 = arith.mulf %434, %435 : vector<9x16xf32>
    %437 = vector.broadcast %418 : vector<1x16xf32> to vector<9x16xf32>
    %438 = arith.addf %436, %437 : vector<9x16xf32>
    %c0_164 = arith.constant 0 : index
    %c0_165 = arith.constant 0 : index
    %439 = vector.load %arg36[%c0_164, %c0_165] : memref<1x16xf32, #tpu.memory_space<vmem>>, vector<1x16xf32>
    %c0_166 = arith.constant 0 : index
    %c0_167 = arith.constant 0 : index
    %440 = vector.load %arg37[%c0_166, %c0_167] : memref<1x16xf32, #tpu.memory_space<vmem>>, vector<1x16xf32>
    %cst_168 = arith.constant dense<0.000000e+00> : vector<9xf32>
    %441 = vector.multi_reduction <add>, %394, %cst_168 [1] : vector<9x16xf32> to vector<9xf32>
    %442 = vector.shape_cast %441 : vector<9xf32> to vector<9x1xf32>
    %cst_169 = arith.constant 1.600000e+01 : f32
    %443 = vector.broadcast %cst_169 : f32 to vector<9x1xf32>
    %444 = arith.divf %442, %443 : vector<9x1xf32>
    %445 = vector.broadcast %444 : vector<9x1xf32> to vector<9x16xf32>
    %446 = arith.subf %394, %445 : vector<9x16xf32>
    %447 = arith.mulf %446, %446 : vector<9x16xf32>
    %cst_170 = arith.constant dense<0.000000e+00> : vector<9xf32>
    %448 = vector.multi_reduction <add>, %447, %cst_170 [1] : vector<9x16xf32> to vector<9xf32>
    %449 = vector.shape_cast %448 : vector<9xf32> to vector<9x1xf32>
    %cst_171 = arith.constant 1.600000e+01 : f32
    %450 = vector.broadcast %cst_171 : f32 to vector<9x1xf32>
    %451 = arith.divf %449, %450 : vector<9x1xf32>
    %cst_172 = arith.constant 9.99999997E-7 : f32
    %452 = vector.broadcast %cst_172 : f32 to vector<9x1xf32>
    %453 = arith.addf %451, %452 : vector<9x1xf32>
    %454 = math.rsqrt %453 : vector<9x1xf32>
    %455 = vector.broadcast %454 : vector<9x1xf32> to vector<9x16xf32>
    %456 = arith.mulf %446, %455 : vector<9x16xf32>
    %457 = vector.broadcast %439 : vector<1x16xf32> to vector<9x16xf32>
    %458 = arith.mulf %456, %457 : vector<9x16xf32>
    %459 = vector.broadcast %440 : vector<1x16xf32> to vector<9x16xf32>
    %460 = arith.addf %458, %459 : vector<9x16xf32>
    %cst_173 = arith.constant 2.500000e-01 : f32
    %461 = vector.broadcast %cst_173 : f32 to vector<9x16xf32>
    %462 = arith.mulf %416, %461 : vector<9x16xf32>
    %463 = arith.truncf %462 : vector<9x16xf32> to vector<9x16xbf16>
    %464 = arith.truncf %438 : vector<9x16xf32> to vector<9x16xbf16>
    %cst_174 = arith.constant dense<0.000000e+00> : vector<9x9xf32>
    %465 = tpu.matmul %463, %464, %cst_174 {dimension_numbers = #tpu.dot_dimension_numbers<[1], [1], [0], [0], [0, 0, 1, 0], [], []>} : vector<9x16xbf16>, vector<9x16xbf16>, vector<9x9xf32> -> vector<9x9xf32>
    %cst_175 = arith.constant dense<0xFF800000> : vector<9xf32>
    %466 = vector.multi_reduction <maximumf>, %465, %cst_175 [1] : vector<9x9xf32> to vector<9xf32>
    %467 = vector.shape_cast %466 : vector<9xf32> to vector<9x1xf32>
    %468 = vector.broadcast %467 : vector<9x1xf32> to vector<9x9xf32>
    %469 = arith.subf %465, %468 : vector<9x9xf32>
    %470 = math.exp %469 : vector<9x9xf32>
    %cst_176 = arith.constant dense<0.000000e+00> : vector<9xf32>
    %471 = vector.multi_reduction <add>, %470, %cst_176 [1] : vector<9x9xf32> to vector<9xf32>
    %472 = vector.shape_cast %471 : vector<9xf32> to vector<9x1xf32>
    %473 = tpu.reciprocal %472 {approx = true} : vector<9x1xf32> -> vector<9x1xf32>
    %474 = vector.broadcast %473 : vector<9x1xf32> to vector<9x9xf32>
    %475 = arith.mulf %470, %474 : vector<9x9xf32>
    %476 = arith.truncf %460 : vector<9x16xf32> to vector<9x16xbf16>
    %477 = arith.truncf %475 : vector<9x9xf32> to vector<9x9xbf16>
    %cst_177 = arith.constant dense<0.000000e+00> : vector<9x16xf32>
    %478 = tpu.matmul %477, %476, %cst_177 {dimension_numbers = #tpu.dot_dimension_numbers<[1], [0], [0], [1], [0, 0, 1, 1], [], []>} : vector<9x9xbf16>, vector<9x16xbf16>, vector<9x16xf32> -> vector<9x16xf32>
    %479 = vector.extract_strided_slice %301 {offsets = [16, 0], sizes = [16, 32], strides = [1, 1]} : vector<32x32xbf16> to vector<16x32xbf16>
    %480 = arith.truncf %478 : vector<9x16xf32> to vector<9x16xbf16>
    %cst_178 = arith.constant dense<0.000000e+00> : vector<9x32xf32>
    %481 = tpu.matmul %480, %479, %cst_178 {dimension_numbers = #tpu.dot_dimension_numbers<[1], [0], [0], [1], [0, 0, 1, 1], [], []>} : vector<9x16xbf16>, vector<16x32xbf16>, vector<9x32xf32> -> vector<9x32xf32>
    %482 = arith.addf %391, %481 : vector<9x32xf32>
    %c0_179 = arith.constant 0 : index
    %c0_180 = arith.constant 0 : index
    %483 = vector.load %arg39[%c0_179, %c0_180] : memref<1x32xf32, #tpu.memory_space<vmem>>, vector<1x32xf32>
    %484 = vector.broadcast %483 : vector<1x32xf32> to vector<9x32xf32>
    %485 = arith.addf %482, %484 : vector<9x32xf32>
    %cst_181 = arith.constant dense<0.000000e+00> : vector<36x32xf32>
    %486 = tpu.matmul %277, %199, %cst_181 {dimension_numbers = #tpu.dot_dimension_numbers<[1], [0], [0], [1], [0, 0, 1, 1], [], []>} : vector<36x33xf32>, vector<33x32xf32>, vector<36x32xf32> -> vector<36x32xf32>
    %487 = vector.extract_strided_slice %486 {offsets = [0, 0], sizes = [9, 32], strides = [1, 1]} : vector<36x32xf32> to vector<9x32xf32>
    %488 = vector.extract_strided_slice %486 {offsets = [9, 0], sizes = [9, 32], strides = [1, 1]} : vector<36x32xf32> to vector<9x32xf32>
    %489 = arith.maximumf %487, %488 : vector<9x32xf32>
    %490 = vector.extract_strided_slice %486 {offsets = [18, 0], sizes = [9, 32], strides = [1, 1]} : vector<36x32xf32> to vector<9x32xf32>
    %491 = arith.maximumf %489, %490 : vector<9x32xf32>
    %492 = vector.extract_strided_slice %486 {offsets = [27, 0], sizes = [9, 32], strides = [1, 1]} : vector<36x32xf32> to vector<9x32xf32>
    %493 = arith.maximumf %491, %492 : vector<9x32xf32>
    %494 = arith.addf %493, %485 : vector<9x32xf32>
    %c0_182 = arith.constant 0 : index
    %c0_183 = arith.constant 0 : index
    %495 = vector.load %arg40[%c0_182, %c0_183] : memref<1x32xf32, #tpu.memory_space<vmem>>, vector<1x32xf32>
    %c0_184 = arith.constant 0 : index
    %c0_185 = arith.constant 0 : index
    %496 = vector.load %arg41[%c0_184, %c0_185] : memref<1x32xf32, #tpu.memory_space<vmem>>, vector<1x32xf32>
    %cst_186 = arith.constant dense<0.000000e+00> : vector<9xf32>
    %497 = vector.multi_reduction <add>, %494, %cst_186 [1] : vector<9x32xf32> to vector<9xf32>
    %498 = vector.shape_cast %497 : vector<9xf32> to vector<9x1xf32>
    %cst_187 = arith.constant 3.200000e+01 : f32
    %499 = vector.broadcast %cst_187 : f32 to vector<9x1xf32>
    %500 = arith.divf %498, %499 : vector<9x1xf32>
    %501 = vector.broadcast %500 : vector<9x1xf32> to vector<9x32xf32>
    %502 = arith.subf %494, %501 : vector<9x32xf32>
    %503 = arith.mulf %502, %502 : vector<9x32xf32>
    %cst_188 = arith.constant dense<0.000000e+00> : vector<9xf32>
    %504 = vector.multi_reduction <add>, %503, %cst_188 [1] : vector<9x32xf32> to vector<9xf32>
    %505 = vector.shape_cast %504 : vector<9xf32> to vector<9x1xf32>
    %cst_189 = arith.constant 3.200000e+01 : f32
    %506 = vector.broadcast %cst_189 : f32 to vector<9x1xf32>
    %507 = arith.divf %505, %506 : vector<9x1xf32>
    %cst_190 = arith.constant 9.99999997E-7 : f32
    %508 = vector.broadcast %cst_190 : f32 to vector<9x1xf32>
    %509 = arith.addf %507, %508 : vector<9x1xf32>
    %510 = math.rsqrt %509 : vector<9x1xf32>
    %511 = vector.broadcast %510 : vector<9x1xf32> to vector<9x32xf32>
    %512 = arith.mulf %502, %511 : vector<9x32xf32>
    %513 = vector.broadcast %495 : vector<1x32xf32> to vector<9x32xf32>
    %514 = arith.mulf %512, %513 : vector<9x32xf32>
    %515 = vector.broadcast %496 : vector<1x32xf32> to vector<9x32xf32>
    %516 = arith.addf %514, %515 : vector<9x32xf32>
    %517 = arith.truncf %516 : vector<9x32xf32> to vector<9x32xbf16>
    %c0_191 = arith.constant 0 : index
    %c0_192 = arith.constant 0 : index
    %518 = vector.load %arg42[%c0_191, %c0_192] : memref<32x128xbf16, #tpu.memory_space<vmem>>, vector<32x128xbf16>
    %cst_193 = arith.constant dense<0.000000e+00> : vector<9x128xf32>
    %519 = tpu.matmul %517, %518, %cst_193 {dimension_numbers = #tpu.dot_dimension_numbers<[1], [0], [0], [1], [0, 0, 1, 1], [], []>} : vector<9x32xbf16>, vector<32x128xbf16>, vector<9x128xf32> -> vector<9x128xf32>
    %c0_194 = arith.constant 0 : index
    %c0_195 = arith.constant 0 : index
    %520 = vector.load %arg43[%c0_194, %c0_195] : memref<1x128xf32, #tpu.memory_space<vmem>>, vector<1x128xf32>
    %521 = vector.broadcast %520 : vector<1x128xf32> to vector<9x128xf32>
    %522 = arith.addf %519, %521 : vector<9x128xf32>
    %cst_196 = arith.constant 5.000000e-01 : f32
    %523 = vector.broadcast %cst_196 : f32 to vector<9x128xf32>
    %524 = arith.mulf %523, %522 : vector<9x128xf32>
    %cst_197 = arith.constant 4.471500e-02 : f32
    %525 = vector.broadcast %cst_197 : f32 to vector<9x128xf32>
    %526 = arith.mulf %525, %522 : vector<9x128xf32>
    %527 = arith.mulf %526, %522 : vector<9x128xf32>
    %528 = arith.mulf %527, %522 : vector<9x128xf32>
    %529 = arith.addf %522, %528 : vector<9x128xf32>
    %cst_198 = arith.constant 0.797884583 : f32
    %530 = vector.broadcast %cst_198 : f32 to vector<9x128xf32>
    %531 = arith.mulf %530, %529 : vector<9x128xf32>
    %532 = math.tanh %531 : vector<9x128xf32>
    %cst_199 = arith.constant 1.000000e+00 : f32
    %533 = vector.broadcast %cst_199 : f32 to vector<9x128xf32>
    %534 = arith.addf %533, %532 : vector<9x128xf32>
    %535 = arith.mulf %524, %534 : vector<9x128xf32>
    %c0_200 = arith.constant 0 : index
    %c0_201 = arith.constant 0 : index
    %536 = vector.load %arg44[%c0_200, %c0_201] : memref<128x64xbf16, #tpu.memory_space<vmem>>, vector<128x64xbf16>
    %537 = arith.truncf %535 : vector<9x128xf32> to vector<9x128xbf16>
    %cst_202 = arith.constant dense<0.000000e+00> : vector<9x64xf32>
    %538 = tpu.matmul %537, %536, %cst_202 {dimension_numbers = #tpu.dot_dimension_numbers<[1], [0], [0], [1], [0, 0, 1, 1], [], []>} : vector<9x128xbf16>, vector<128x64xbf16>, vector<9x64xf32> -> vector<9x64xf32>
    %c0_203 = arith.constant 0 : index
    %c0_204 = arith.constant 0 : index
    %539 = vector.load %arg45[%c0_203, %c0_204] : memref<1x64xf32, #tpu.memory_space<vmem>>, vector<1x64xf32>
    %540 = vector.broadcast %539 : vector<1x64xf32> to vector<9x64xf32>
    %541 = arith.addf %538, %540 : vector<9x64xf32>
    %c0_205 = arith.constant 0 : index
    %c0_206 = arith.constant 0 : index
    %542 = vector.load %arg46[%c0_205, %c0_206] : memref<32x64xbf16, #tpu.memory_space<vmem>>, vector<32x64xbf16>
    %cst_207 = arith.constant dense<0.000000e+00> : vector<9x64xf32>
    %543 = tpu.matmul %517, %542, %cst_207 {dimension_numbers = #tpu.dot_dimension_numbers<[1], [0], [0], [1], [0, 0, 1, 1], [], []>} : vector<9x32xbf16>, vector<32x64xbf16>, vector<9x64xf32> -> vector<9x64xf32>
    %c0_208 = arith.constant 0 : index
    %c0_209 = arith.constant 0 : index
    %544 = vector.load %arg47[%c0_208, %c0_209] : memref<1x64xf32, #tpu.memory_space<vmem>>, vector<1x64xf32>
    %545 = vector.broadcast %544 : vector<1x64xf32> to vector<9x64xf32>
    %546 = arith.addf %543, %545 : vector<9x64xf32>
    %547 = arith.addf %546, %541 : vector<9x64xf32>
    %548 = vector.extract_strided_slice %547 {offsets = [0, 0], sizes = [1, 64], strides = [1, 1]} : vector<9x64xf32> to vector<1x64xf32>
    %c0_210 = arith.constant 0 : index
    %c0_211 = arith.constant 0 : index
    %549 = vector.load %arg48[%c0_210, %c0_211] : memref<1x64xf32, #tpu.memory_space<vmem>>, vector<1x64xf32>
    %c0_212 = arith.constant 0 : index
    %c0_213 = arith.constant 0 : index
    %550 = vector.load %arg49[%c0_212, %c0_213] : memref<1x64xf32, #tpu.memory_space<vmem>>, vector<1x64xf32>
    %cst_214 = arith.constant dense<0.000000e+00> : vector<1xf32>
    %551 = vector.multi_reduction <add>, %548, %cst_214 [1] : vector<1x64xf32> to vector<1xf32>
    %552 = vector.shape_cast %551 : vector<1xf32> to vector<1x1xf32>
    %cst_215 = arith.constant 6.400000e+01 : f32
    %553 = vector.broadcast %cst_215 : f32 to vector<1x1xf32>
    %554 = arith.divf %552, %553 : vector<1x1xf32>
    %555 = vector.broadcast %554 : vector<1x1xf32> to vector<1x64xf32>
    %556 = arith.subf %548, %555 : vector<1x64xf32>
    %557 = arith.mulf %556, %556 : vector<1x64xf32>
    %cst_216 = arith.constant dense<0.000000e+00> : vector<1xf32>
    %558 = vector.multi_reduction <add>, %557, %cst_216 [1] : vector<1x64xf32> to vector<1xf32>
    %559 = vector.shape_cast %558 : vector<1xf32> to vector<1x1xf32>
    %cst_217 = arith.constant 6.400000e+01 : f32
    %560 = vector.broadcast %cst_217 : f32 to vector<1x1xf32>
    %561 = arith.divf %559, %560 : vector<1x1xf32>
    %cst_218 = arith.constant 9.99999997E-7 : f32
    %562 = vector.broadcast %cst_218 : f32 to vector<1x1xf32>
    %563 = arith.addf %561, %562 : vector<1x1xf32>
    %564 = math.rsqrt %563 : vector<1x1xf32>
    %565 = vector.broadcast %564 : vector<1x1xf32> to vector<1x64xf32>
    %566 = arith.mulf %556, %565 : vector<1x64xf32>
    %567 = arith.mulf %566, %549 : vector<1x64xf32>
    %568 = arith.addf %567, %550 : vector<1x64xf32>
    %c0_219 = arith.constant 0 : index
    %c0_220 = arith.constant 0 : index
    %c0_221 = arith.constant 0 : index
    %569 = vector.load %arg50[%c0_219, %c0_220, %c0_221] : memref<1x1x64xf32, #tpu.memory_space<vmem>>, vector<1x1x64xf32>
    %570 = vector.shape_cast %569 : vector<1x1x64xf32> to vector<1x64xf32>
    %571 = vector.shape_cast %568 : vector<1x64xf32> to vector<1x1x64xf32>
    tpu.vector_store %arg50[%c0_219, %c0_220, %c0_221], %571 {strides = array<i32>} : memref<1x1x64xf32, #tpu.memory_space<vmem>>, vector<1x1x64xf32>,
    return
  }
  func.func @transform_0(%arg0: i32) -> (i32, i32, i32) {
    %c0_i32 = arith.constant 0 : i32
    %c0_i32_0 = arith.constant 0 : i32
    %c0_i32_1 = arith.constant 0 : i32
    return %arg0, %c0_i32, %c0_i32_0 : i32, i32, i32
  }
  func.func @transform_1(%arg0: i32) -> (i32, i32) {
    %c0_i32 = arith.constant 0 : i32
    %c0_i32_0 = arith.constant 0 : i32
    %c0_i32_1 = arith.constant 0 : i32
    return %c0_i32, %c0_i32_0 : i32, i32
  }
  func.func @transform_2(%arg0: i32) -> (i32, i32) {
    %c0_i32 = arith.constant 0 : i32
    %c0_i32_0 = arith.constant 0 : i32
    %c0_i32_1 = arith.constant 0 : i32
    return %c0_i32, %c0_i32_0 : i32, i32
  }
  func.func @transform_3(%arg0: i32) -> (i32, i32) {
    %c0_i32 = arith.constant 0 : i32
    %c0_i32_0 = arith.constant 0 : i32
    %c0_i32_1 = arith.constant 0 : i32
    return %c0_i32, %c0_i32_0 : i32, i32
  }
  func.func @transform_4(%arg0: i32) -> (i32, i32) {
    %c0_i32 = arith.constant 0 : i32
    %c0_i32_0 = arith.constant 0 : i32
    %c0_i32_1 = arith.constant 0 : i32
    return %c0_i32, %c0_i32_0 : i32, i32
  }
  func.func @transform_5(%arg0: i32) -> (i32, i32) {
    %c0_i32 = arith.constant 0 : i32
    %c0_i32_0 = arith.constant 0 : i32
    %c0_i32_1 = arith.constant 0 : i32
    return %c0_i32, %c0_i32_0 : i32, i32
  }
  func.func @transform_6(%arg0: i32) -> (i32, i32) {
    %c0_i32 = arith.constant 0 : i32
    %c0_i32_0 = arith.constant 0 : i32
    %c0_i32_1 = arith.constant 0 : i32
    return %c0_i32, %c0_i32_0 : i32, i32
  }
  func.func @transform_7(%arg0: i32) -> (i32, i32) {
    %c0_i32 = arith.constant 0 : i32
    %c0_i32_0 = arith.constant 0 : i32
    %c0_i32_1 = arith.constant 0 : i32
    return %c0_i32, %c0_i32_0 : i32, i32
  }
  func.func @transform_8(%arg0: i32) -> (i32, i32, i32) {
    %c0_i32 = arith.constant 0 : i32
    %c0_i32_0 = arith.constant 0 : i32
    %c0_i32_1 = arith.constant 0 : i32
    %c0_i32_2 = arith.constant 0 : i32
    return %c0_i32, %c0_i32_0, %c0_i32_1 : i32, i32, i32
  }
  func.func @transform_9(%arg0: i32) -> (i32, i32) {
    %c0_i32 = arith.constant 0 : i32
    %c0_i32_0 = arith.constant 0 : i32
    %c0_i32_1 = arith.constant 0 : i32
    return %c0_i32, %c0_i32_0 : i32, i32
  }
  func.func @transform_10(%arg0: i32) -> (i32, i32) {
    %c0_i32 = arith.constant 0 : i32
    %c0_i32_0 = arith.constant 0 : i32
    %c0_i32_1 = arith.constant 0 : i32
    return %c0_i32, %c0_i32_0 : i32, i32
  }
  func.func @transform_11(%arg0: i32) -> (i32, i32, i32) {
    %c0_i32 = arith.constant 0 : i32
    %c0_i32_0 = arith.constant 0 : i32
    %c0_i32_1 = arith.constant 0 : i32
    %c0_i32_2 = arith.constant 0 : i32
    return %c0_i32, %c0_i32_0, %c0_i32_1 : i32, i32, i32
  }
  func.func @transform_12(%arg0: i32) -> (i32, i32) {
    %c0_i32 = arith.constant 0 : i32
    %c0_i32_0 = arith.constant 0 : i32
    %c0_i32_1 = arith.constant 0 : i32
    return %c0_i32, %c0_i32_0 : i32, i32
  }
  func.func @transform_13(%arg0: i32) -> (i32, i32) {
    %c0_i32 = arith.constant 0 : i32
    %c0_i32_0 = arith.constant 0 : i32
    %c0_i32_1 = arith.constant 0 : i32
    return %c0_i32, %c0_i32_0 : i32, i32
  }
  func.func @transform_14(%arg0: i32) -> (i32, i32) {
    %c0_i32 = arith.constant 0 : i32
    %c0_i32_0 = arith.constant 0 : i32
    %c0_i32_1 = arith.constant 0 : i32
    return %c0_i32, %c0_i32_0 : i32, i32
  }
  func.func @transform_15(%arg0: i32) -> (i32, i32) {
    %c0_i32 = arith.constant 0 : i32
    %c0_i32_0 = arith.constant 0 : i32
    %c0_i32_1 = arith.constant 0 : i32
    return %c0_i32, %c0_i32_0 : i32, i32
  }
  func.func @transform_16(%arg0: i32) -> (i32, i32) {
    %c0_i32 = arith.constant 0 : i32
    %c0_i32_0 = arith.constant 0 : i32
    %c0_i32_1 = arith.constant 0 : i32
    return %c0_i32, %c0_i32_0 : i32, i32
  }
  func.func @transform_17(%arg0: i32) -> (i32, i32) {
    %c0_i32 = arith.constant 0 : i32
    %c0_i32_0 = arith.constant 0 : i32
    %c0_i32_1 = arith.constant 0 : i32
    return %c0_i32, %c0_i32_0 : i32, i32
  }
  func.func @transform_18(%arg0: i32) -> (i32, i32) {
    %c0_i32 = arith.constant 0 : i32
    %c0_i32_0 = arith.constant 0 : i32
    %c0_i32_1 = arith.constant 0 : i32
    return %c0_i32, %c0_i32_0 : i32, i32
  }
  func.func @transform_19(%arg0: i32) -> (i32, i32) {
    %c0_i32 = arith.constant 0 : i32
    %c0_i32_0 = arith.constant 0 : i32
    %c0_i32_1 = arith.constant 0 : i32
    return %c0_i32, %c0_i32_0 : i32, i32
  }
  func.func @transform_20(%arg0: i32) -> (i32, i32) {
    %c0_i32 = arith.constant 0 : i32
    %c0_i32_0 = arith.constant 0 : i32
    %c0_i32_1 = arith.constant 0 : i32
    return %c0_i32, %c0_i32_0 : i32, i32
  }
  func.func @transform_21(%arg0: i32) -> (i32, i32) {
    %c0_i32 = arith.constant 0 : i32
    %c0_i32_0 = arith.constant 0 : i32
    %c0_i32_1 = arith.constant 0 : i32
    return %c0_i32, %c0_i32_0 : i32, i32
  }
  func.func @transform_22(%arg0: i32) -> (i32, i32) {
    %c0_i32 = arith.constant 0 : i32
    %c0_i32_0 = arith.constant 0 : i32
    %c0_i32_1 = arith.constant 0 : i32
    return %c0_i32, %c0_i32_0 : i32, i32
  }
  func.func @transform_23(%arg0: i32) -> (i32, i32) {
    %c0_i32 = arith.constant 0 : i32
    %c0_i32_0 = arith.constant 0 : i32
    %c0_i32_1 = arith.constant 0 : i32
    return %c0_i32, %c0_i32_0 : i32, i32
  }
  func.func @transform_24(%arg0: i32) -> (i32, i32) {
    %c0_i32 = arith.constant 0 : i32
    %c0_i32_0 = arith.constant 0 : i32
    %c0_i32_1 = arith.constant 0 : i32
    return %c0_i32, %c0_i32_0 : i32, i32
  }
  func.func @transform_25(%arg0: i32) -> (i32, i32) {
    %c0_i32 = arith.constant 0 : i32
    %c0_i32_0 = arith.constant 0 : i32
    %c0_i32_1 = arith.constant 0 : i32
    return %c0_i32, %c0_i32_0 : i32, i32
  }
  func.func @transform_26(%arg0: i32) -> (i32, i32) {
    %c0_i32 = arith.constant 0 : i32
    %c0_i32_0 = arith.constant 0 : i32
    %c0_i32_1 = arith.constant 0 : i32
    return %c0_i32, %c0_i32_0 : i32, i32
  }
  func.func @transform_27(%arg0: i32) -> (i32, i32, i32) {
    %c0_i32 = arith.constant 0 : i32
    %c0_i32_0 = arith.constant 0 : i32
    %c0_i32_1 = arith.constant 0 : i32
    %c0_i32_2 = arith.constant 0 : i32
    return %c0_i32, %c0_i32_0, %c0_i32_1 : i32, i32, i32
  }
  func.func @transform_28(%arg0: i32) -> (i32, i32) {
    %c0_i32 = arith.constant 0 : i32
    %c0_i32_0 = arith.constant 0 : i32
    %c0_i32_1 = arith.constant 0 : i32
    return %c0_i32, %c0_i32_0 : i32, i32
  }
  func.func @transform_29(%arg0: i32) -> (i32, i32) {
    %c0_i32 = arith.constant 0 : i32
    %c0_i32_0 = arith.constant 0 : i32
    %c0_i32_1 = arith.constant 0 : i32
    return %c0_i32, %c0_i32_0 : i32, i32
  }
  func.func @transform_30(%arg0: i32) -> (i32, i32) {
    %c0_i32 = arith.constant 0 : i32
    %c0_i32_0 = arith.constant 0 : i32
    %c0_i32_1 = arith.constant 0 : i32
    return %c0_i32, %c0_i32_0 : i32, i32
  }
  func.func @transform_31(%arg0: i32) -> (i32, i32, i32) {
    %c0_i32 = arith.constant 0 : i32
    %c0_i32_0 = arith.constant 0 : i32
    %c0_i32_1 = arith.constant 0 : i32
    %c0_i32_2 = arith.constant 0 : i32
    return %c0_i32, %c0_i32_0, %c0_i32_1 : i32, i32, i32
  }
  func.func @transform_32(%arg0: i32) -> (i32, i32) {
    %c0_i32 = arith.constant 0 : i32
    %c0_i32_0 = arith.constant 0 : i32
    %c0_i32_1 = arith.constant 0 : i32
    return %c0_i32, %c0_i32_0 : i32, i32
  }
  func.func @transform_33(%arg0: i32) -> (i32, i32) {
    %c0_i32 = arith.constant 0 : i32
    %c0_i32_0 = arith.constant 0 : i32
    %c0_i32_1 = arith.constant 0 : i32
    return %c0_i32, %c0_i32_0 : i32, i32
  }
  func.func @transform_34(%arg0: i32) -> (i32, i32, i32) {
    %c0_i32 = arith.constant 0 : i32
    %c0_i32_0 = arith.constant 0 : i32
    %c0_i32_1 = arith.constant 0 : i32
    %c0_i32_2 = arith.constant 0 : i32
    return %c0_i32, %c0_i32_0, %c0_i32_1 : i32, i32, i32
  }
  func.func @transform_35(%arg0: i32) -> (i32, i32) {
    %c0_i32 = arith.constant 0 : i32
    %c0_i32_0 = arith.constant 0 : i32
    %c0_i32_1 = arith.constant 0 : i32
    return %c0_i32, %c0_i32_0 : i32, i32
  }
  func.func @transform_36(%arg0: i32) -> (i32, i32) {
    %c0_i32 = arith.constant 0 : i32
    %c0_i32_0 = arith.constant 0 : i32
    %c0_i32_1 = arith.constant 0 : i32
    return %c0_i32, %c0_i32_0 : i32, i32
  }
  func.func @transform_37(%arg0: i32) -> (i32, i32) {
    %c0_i32 = arith.constant 0 : i32
    %c0_i32_0 = arith.constant 0 : i32
    %c0_i32_1 = arith.constant 0 : i32
    return %c0_i32, %c0_i32_0 : i32, i32
  }
  func.func @transform_38(%arg0: i32) -> (i32, i32) {
    %c0_i32 = arith.constant 0 : i32
    %c0_i32_0 = arith.constant 0 : i32
    %c0_i32_1 = arith.constant 0 : i32
    return %c0_i32, %c0_i32_0 : i32, i32
  }
  func.func @transform_39(%arg0: i32) -> (i32, i32) {
    %c0_i32 = arith.constant 0 : i32
    %c0_i32_0 = arith.constant 0 : i32
    %c0_i32_1 = arith.constant 0 : i32
    return %c0_i32, %c0_i32_0 : i32, i32
  }
  func.func @transform_40(%arg0: i32) -> (i32, i32) {
    %c0_i32 = arith.constant 0 : i32
    %c0_i32_0 = arith.constant 0 : i32
    %c0_i32_1 = arith.constant 0 : i32
    return %c0_i32, %c0_i32_0 : i32, i32
  }
  func.func @transform_41(%arg0: i32) -> (i32, i32) {
    %c0_i32 = arith.constant 0 : i32
    %c0_i32_0 = arith.constant 0 : i32
    %c0_i32_1 = arith.constant 0 : i32
    return %c0_i32, %c0_i32_0 : i32, i32
  }
  func.func @transform_42(%arg0: i32) -> (i32, i32) {
    %c0_i32 = arith.constant 0 : i32
    %c0_i32_0 = arith.constant 0 : i32
    %c0_i32_1 = arith.constant 0 : i32
    return %c0_i32, %c0_i32_0 : i32, i32
  }
  func.func @transform_43(%arg0: i32) -> (i32, i32) {
    %c0_i32 = arith.constant 0 : i32
    %c0_i32_0 = arith.constant 0 : i32
    %c0_i32_1 = arith.constant 0 : i32
    return %c0_i32, %c0_i32_0 : i32, i32
  }
  func.func @transform_44(%arg0: i32) -> (i32, i32) {
    %c0_i32 = arith.constant 0 : i32
    %c0_i32_0 = arith.constant 0 : i32
    %c0_i32_1 = arith.constant 0 : i32
    return %c0_i32, %c0_i32_0 : i32, i32
  }
  func.func @transform_45(%arg0: i32) -> (i32, i32) {
    %c0_i32 = arith.constant 0 : i32
    %c0_i32_0 = arith.constant 0 : i32
    %c0_i32_1 = arith.constant 0 : i32
    return %c0_i32, %c0_i32_0 : i32, i32
  }
  func.func @transform_46(%arg0: i32) -> (i32, i32) {
    %c0_i32 = arith.constant 0 : i32
    %c0_i32_0 = arith.constant 0 : i32
    %c0_i32_1 = arith.constant 0 : i32
    return %c0_i32, %c0_i32_0 : i32, i32
  }
  func.func @transform_47(%arg0: i32) -> (i32, i32) {
    %c0_i32 = arith.constant 0 : i32
    %c0_i32_0 = arith.constant 0 : i32
    %c0_i32_1 = arith.constant 0 : i32
    return %c0_i32, %c0_i32_0 : i32, i32
  }
  func.func @transform_48(%arg0: i32) -> (i32, i32) {
    %c0_i32 = arith.constant 0 : i32
    %c0_i32_0 = arith.constant 0 : i32
    %c0_i32_1 = arith.constant 0 : i32
    return %c0_i32, %c0_i32_0 : i32, i32
  }
  func.func @transform_49(%arg0: i32) -> (i32, i32, i32) {
    %c0_i32 = arith.constant 0 : i32
    %c0_i32_0 = arith.constant 0 : i32
    %c0_i32_1 = arith.constant 0 : i32
    return %arg0, %c0_i32, %c0_i32_0 : i32, i32, i32
  }
}

</mosaic_0001>

<llo_original>
// kernel: mvit_forward.1
$region0: #{mvit_forward.1}
  #allocation0 [shape = 'u32[]', space=smem, size = 0x4, offset = 0x4, fixed_abs, tag = 'smem constant byte address 0x4 - core index']
  #allocation1 [shape = 'u32[72,128]{1,0:T(1,128)}', space=vmem, size = 0x9000, scoped, tag = 'internal scratch']
  %s0 = inlined_call_operand.smem [shape: u32[50], index: -1, kind: input, shape index: {}]
  %s1 = sld [smem:[%s0]]
  %s2 = scalar_lea.smem %s0, 1
  %s3 = sld [smem:[%s2]]
  %s4 = scalar_lea.smem %s0, 2
  %s5 = sld [smem:[%s4]]
  %s6 = scalar_lea.smem %s0, 3
  %s7 = sld [smem:[%s6]]
  %s8 = scalar_lea.smem %s0, 4
  %s9 = sld [smem:[%s8]]
  %s10 = scalar_lea.smem %s0, 5
  %s11 = sld [smem:[%s10]]
  %s12 = scalar_lea.smem %s0, 6
  %s13 = sld [smem:[%s12]]
  %s14 = scalar_lea.smem %s0, 7
  %s15 = sld [smem:[%s14]]
  %s16 = scalar_lea.smem %s0, 8
  %s17 = sld [smem:[%s16]]
  %s18 = scalar_lea.smem %s0, 9
  %s19 = sld [smem:[%s18]]
  %s20 = scalar_lea.smem %s0, 10
  %s21 = sld [smem:[%s20]]
  %s22 = scalar_lea.smem %s0, 11
  %s23 = sld [smem:[%s22]]
  %s24 = scalar_lea.smem %s0, 12
  %s25 = sld [smem:[%s24]]
  %s26 = scalar_lea.smem %s0, 13
  %s27 = sld [smem:[%s26]]
  %s28 = scalar_lea.smem %s0, 14
  %s29 = sld [smem:[%s28]]
  %s30 = scalar_lea.smem %s0, 15
  %s31 = sld [smem:[%s30]]
  %s32 = scalar_lea.smem %s0, 16
  %s33 = sld [smem:[%s32]]
  %s34 = scalar_lea.smem %s0, 17
  %s35 = sld [smem:[%s34]]
  %s36 = scalar_lea.smem %s0, 18
  %s37 = sld [smem:[%s36]]
  %s38 = scalar_lea.smem %s0, 19
  %s39 = sld [smem:[%s38]]
  %s40 = scalar_lea.smem %s0, 20
  %s41 = sld [smem:[%s40]]
  %s42 = scalar_lea.smem %s0, 21
  %s43 = sld [smem:[%s42]]
  %s44 = scalar_lea.smem %s0, 22
  %s45 = sld [smem:[%s44]]
  %s46 = scalar_lea.smem %s0, 23
  %s47 = sld [smem:[%s46]]
  %s48 = scalar_lea.smem %s0, 24
  %s49 = sld [smem:[%s48]]
  %s50 = scalar_lea.smem %s0, 25
  %s51 = sld [smem:[%s50]]
  %s52 = scalar_lea.smem %s0, 26
  %s53 = sld [smem:[%s52]]
  %s54 = scalar_lea.smem %s0, 27
  %s55 = sld [smem:[%s54]]
  %s56 = scalar_lea.smem %s0, 28
  %s57 = sld [smem:[%s56]]
  %s58 = scalar_lea.smem %s0, 29
  %s59 = sld [smem:[%s58]]
  %s60 = scalar_lea.smem %s0, 30
  %s61 = sld [smem:[%s60]]
  %s62 = scalar_lea.smem %s0, 31
  %s63 = sld [smem:[%s62]]
  %s64 = scalar_lea.smem %s0, 32
  %s65 = sld [smem:[%s64]]
  %s66 = scalar_lea.smem %s0, 33
  %s67 = sld [smem:[%s66]]
  %s68 = scalar_lea.smem %s0, 34
  %s69 = sld [smem:[%s68]]
  %s70 = scalar_lea.smem %s0, 35
  %s71 = sld [smem:[%s70]]
  %s72 = scalar_lea.smem %s0, 36
  %s73 = sld [smem:[%s72]]
  %s74 = scalar_lea.smem %s0, 37
  %s75 = sld [smem:[%s74]]
  %s76 = scalar_lea.smem %s0, 38
  %s77 = sld [smem:[%s76]]
  %s78 = scalar_lea.smem %s0, 39
  %s79 = sld [smem:[%s78]]
  %s80 = scalar_lea.smem %s0, 40
  %s81 = sld [smem:[%s80]]
  %s82 = scalar_lea.smem %s0, 41
  %s83 = sld [smem:[%s82]]
  %s84 = scalar_lea.smem %s0, 42
  %s85 = sld [smem:[%s84]]
  %s86 = scalar_lea.smem %s0, 43
  %s87 = sld [smem:[%s86]]
  %s88 = scalar_lea.smem %s0, 44
  %s89 = sld [smem:[%s88]]
  %s90 = scalar_lea.smem %s0, 45
  %s91 = sld [smem:[%s90]]
  %s92 = scalar_lea.smem %s0, 46
  %s93 = sld [smem:[%s92]]
  %s94 = scalar_lea.smem %s0, 47
  %s95 = sld [smem:[%s94]]
  %s96 = scalar_lea.smem %s0, 48
  %s97 = sld [smem:[%s96]]
  %s98 = scalar_lea.smem %s0, 49
  %s99 = sld [smem:[%s98]]
  %s100 = sld [smem:[#allocation0]]
  $region277: #{mvit_forward.1} parent=0
    _
  %s102 = ssub.s32 1, %s100
  %s103 = scalar_select 0, %s102, %s100
  $region1: #{mvit_forward.1} parent=0
    #allocation2 [shape = 'u8[512]{0}', space=vmem, size = 0x400, scoped, tag = 'input window, operand 32, single buffered']
    #allocation3 [shape = 's32[2]{0}', space=sflag, size = 0x8, scoped, tag = 'scoped memory for mvit_forward.1']
    #allocation4 [shape = 's32[2]{0}', space=sflag, size = 0x8, scoped, tag = 'scoped memory for mvit_forward.1']
    #allocation5 [shape = 'u8[512]{0}', space=vmem, size = 0x400, scoped, tag = 'input window, operand 33, single buffered']
    #allocation6 [shape = 's32[1]{0}', space=sflag, size = 0x4, scoped, tag = 'scoped memory for mvit_forward.1']
    #allocation7 [shape = 'u8[512]{0}', space=vmem, size = 0x400, scoped, tag = 'input window, operand 35, single buffered']
    #allocation8 [shape = 'u8[512]{0}', space=vmem, size = 0x400, scoped, tag = 'input window, operand 36, single buffered']
    #allocation9 [shape = 's32[1]{0}', space=sflag, size = 0x4, scoped, tag = 'scoped memory for mvit_forward.1']
    #allocation10 [shape = 'u8[512]{0}', space=vmem, size = 0x400, scoped, tag = 'input window, operand 38, single buffered']
    #allocation11 [shape = 'u8[512]{0}', space=vmem, size = 0x400, scoped, tag = 'input window, operand 39, single buffered']
    #allocation12 [shape = 's32[1]{0}', space=sflag, size = 0x4, scoped, tag = 'scoped memory for mvit_forward.1']
    #allocation13 [shape = 'u8[512]{0}', space=vmem, size = 0x400, scoped, tag = 'input window, operand 40, single buffered']
    #allocation14 [shape = 'u8[512]{0}', space=vmem, size = 0x400, scoped, tag = 'input window, operand 42, single buffered']
    #allocation15 [shape = 's32[1]{0}', space=sflag, size = 0x4, scoped, tag = 'scoped memory for mvit_forward.1']
    #allocation16 [shape = 'u8[512]{0}', space=vmem, size = 0x400, scoped, tag = 'input window, operand 44, single buffered']
    #allocation17 [shape = 'u8[512]{0}', space=vmem, size = 0x400, scoped, tag = 'input window, operand 46, single buffered']
    #allocation18 [shape = 's32[1]{0}', space=sflag, size = 0x4, scoped, tag = 'scoped memory for mvit_forward.1']
    #allocation19 [shape = 'u8[512]{0}', space=vmem, size = 0x400, scoped, tag = 'input window, operand 47, single buffered']
    #allocation20 [shape = 'u8[512]{0}', space=vmem, size = 0x400, scoped, tag = 'input window, operand 48, single buffered']
    #allocation21 [shape = 's32[1]{0}', space=sflag, size = 0x4, scoped, tag = 'scoped memory for mvit_forward.1']
    #allocation22 [shape = 'u8[1024]{0}', space=vmem, size = 0x400, scoped, tag = 'output window, operand 0']
    %104 = vsyncpa [#allocation3], 0
    %105 = vsyncpa [#allocation6], 0
    %106 = vsyncpa [#allocation9], 0
    %107 = vsyncpa [#allocation12], 0
    %108 = vsyncpa [#allocation15], 0
    %109 = vsyncpa [#allocation18], 0
    %110 = vsyncpa [#allocation21], 0
    %111 = vsyncpa [#allocation4], 0
    %s112 = scalar_lea.sflag [#allocation4], 1
    %113 = vsyncpa %s112, 0
    loop: start=0, step=1, limit=4
    $region2: #{mvit_forward.1} parent=1 // loop_pre_header
      _
    $region3: #{mvit_forward.1} parent=1 // loop_header
      %s115 = sphi 0, %s119
      %p116 = scmp.ge.s32.totalorder %s115, 4
      %s125 = sphi 0, %s127
      %s128 = sphi 0, %s125
      %s129 = sphi 0, %s128
      %s145 = sphi 0, %s129
      %s149 = sphi 0, %s149
      %s151 = sphi 0, %s149
      %s152 = sphi 0, %s151
      %s166 = sphi 0, %s152
      %s170 = sphi 0, %s170
      %s172 = sphi 0, %s170
      %s173 = sphi 0, %s172
      %s187 = sphi 0, %s173
      %s191 = sphi 0, %s191
      %s193 = sphi 0, %s191
      %s194 = sphi 0, %s193
      %s208 = sphi 0, %s194
      %s212 = sphi 0, %s212
      %s214 = sphi 0, %s212
      %s215 = sphi 0, %s214
      %s229 = sphi 0, %s215
      %s233 = sphi 0, %s233
      %s235 = sphi 0, %s233
      %s236 = sphi 0, %s235
      %s250 = sphi 0, %s236
      %s254 = sphi 0, %s254
      %s256 = sphi 0, %s254
      %s257 = sphi 0, %s256
      %s271 = sphi 0, %s257
      %s275 = sphi 0, %s275
      %s277 = sphi 0, %s275
      %s278 = sphi 0, %s277
      %s292 = sphi 0, %s278
      %s296 = sphi 0, %s296
      %s298 = sphi 0, %s296
      %s299 = sphi 0, %s298
      %s313 = sphi 0, %s299
      %s317 = sphi 0, %s317
      %s319 = sphi 0, %s317
      %s320 = sphi 0, %s319
      %s334 = sphi 0, %s320
      %s338 = sphi 0, %s338
      %s340 = sphi 0, %s338
      %s341 = sphi 0, %s340
      %s355 = sphi 0, %s341
      %s359 = sphi 0, %s359
      %s361 = sphi 0, %s359
      %s362 = sphi 0, %s361
      %s376 = sphi 0, %s362
      %s380 = sphi 0, %s380
      %s382 = sphi 0, %s380
      %s383 = sphi 0, %s382
      %s397 = sphi 0, %s383
      %s401 = sphi 0, %s401
      %s403 = sphi 0, %s401
      %s404 = sphi 0, %s403
      %s418 = sphi 0, %s404
      %s422 = sphi 0, %s422
      %s424 = sphi 0, %s422
      %s425 = sphi 0, %s424
      %s439 = sphi 0, %s425
      %s443 = sphi 0, %s443
      %s445 = sphi 0, %s443
      %s446 = sphi 0, %s445
      %s460 = sphi 0, %s446
      %s464 = sphi 0, %s464
      %s466 = sphi 0, %s464
      %s467 = sphi 0, %s466
      %s481 = sphi 0, %s467
      %s485 = sphi 0, %s485
      %s487 = sphi 0, %s485
      %s488 = sphi 0, %s487
      %s502 = sphi 0, %s488
      %s506 = sphi 0, %s506
      %s508 = sphi 0, %s506
      %s509 = sphi 0, %s508
      %s523 = sphi 0, %s509
      %s527 = sphi 0, %s527
      %s529 = sphi 0, %s527
      %s530 = sphi 0, %s529
      %s544 = sphi 0, %s530
      %s548 = sphi 0, %s548
      %s550 = sphi 0, %s548
      %s551 = sphi 0, %s550
      %s565 = sphi 0, %s551
      %s569 = sphi 0, %s569
      %s571 = sphi 0, %s569
      %s572 = sphi 0, %s571
      %s586 = sphi 0, %s572
      %s590 = sphi 0, %s590
      %s592 = sphi 0, %s590
      %s593 = sphi 0, %s592
      %s607 = sphi 0, %s593
      %s611 = sphi 0, %s611
      %s613 = sphi 0, %s611
      %s614 = sphi 0, %s613
      %s628 = sphi 0, %s614
      %s632 = sphi 0, %s632
      %s634 = sphi 0, %s632
      %s635 = sphi 0, %s634
      %s649 = sphi 0, %s635
      %s653 = sphi 0, %s653
      %s655 = sphi 0, %s653
      %s656 = sphi 0, %s655
      %s670 = sphi 0, %s656
      %s674 = sphi 0, %s674
      %s676 = sphi 0, %s674
      %s677 = sphi 0, %s676
      %s691 = sphi 0, %s677
      %s695 = sphi 0, %s695
      %s697 = sphi 0, %s695
      %s698 = sphi 0, %s697
      %s712 = sphi 0, %s698
      %s716 = sphi 0, %s716
      %s718 = sphi 0, %s716
      %s719 = sphi 0, %s718
      %s733 = sphi 0, %s719
      %s737 = sphi 0, %s737
      %s739 = sphi 0, %s737
      %s740 = sphi 0, %s739
      %s754 = sphi 0, %s740
      %s758 = sphi 0, %s758
      %s760 = sphi 0, %s758
      %s761 = sphi 0, %s760
      %s775 = sphi 0, %s761
      %s779 = sphi 0, %s779
      %s781 = sphi 0, %s779
      %s782 = sphi 0, %s781
      %s796 = sphi 0, %s782
      %s800 = sphi 0, %s800
      %s802 = sphi 0, %s800
      %s803 = sphi 0, %s802
      %s817 = sphi 0, %s803
      %s821 = sphi 0, %s821
      %s823 = sphi 0, %s821
      %s824 = sphi 0, %s823
      %s838 = sphi 0, %s824
      %s842 = sphi 0, %s842
      %s844 = sphi 0, %s842
      %s845 = sphi 0, %s844
      %s859 = sphi 0, %s845
      %s863 = sphi 0, %s863
      %s865 = sphi 0, %s863
      %s866 = sphi 0, %s865
      %s880 = sphi 0, %s866
      %s884 = sphi 0, %s884
      %s886 = sphi 0, %s884
      %s887 = sphi 0, %s886
      %s901 = sphi 0, %s887
      %s905 = sphi 0, %s905
      %s907 = sphi 0, %s905
      %s908 = sphi 0, %s907
      %s922 = sphi 0, %s908
      %s926 = sphi 0, %s926
      %s928 = sphi 0, %s926
      %s929 = sphi 0, %s928
      %s943 = sphi 0, %s929
      %s947 = sphi 0, %s947
      %s949 = sphi 0, %s947
      %s950 = sphi 0, %s949
      %s964 = sphi 0, %s950
      %s968 = sphi 0, %s968
      %s970 = sphi 0, %s968
      %s971 = sphi 0, %s970
      %s985 = sphi 0, %s971
      %s989 = sphi 0, %s989
      %s991 = sphi 0, %s989
      %s992 = sphi 0, %s991
      %s1006 = sphi 0, %s992
      %s1010 = sphi 0, %s1010
      %s1012 = sphi 0, %s1010
      %s1013 = sphi 0, %s1012
      %s1027 = sphi 0, %s1013
      %s1031 = sphi 0, %s1031
      %s1033 = sphi 0, %s1031
      %s1034 = sphi 0, %s1033
      %s1048 = sphi 0, %s1034
      %s1052 = sphi 0, %s1052
      %s1054 = sphi 0, %s1052
      %s1055 = sphi 0, %s1054
      %s1069 = sphi 0, %s1055
      %s1073 = sphi 0, %s1073
      %s1075 = sphi 0, %s1073
      %s1076 = sphi 0, %s1075
      %s1090 = sphi 0, %s1076
      %s1094 = sphi 0, %s1094
      %s1096 = sphi 0, %s1094
      %s1097 = sphi 0, %s1096
      %s1111 = sphi 0, %s1097
      %s1115 = sphi 0, %s1115
      %s1117 = sphi 0, %s1115
      %s1118 = sphi 0, %s1117
      %s1132 = sphi 0, %s1118
      %s1136 = sphi 0, %s1136
      %s1138 = sphi 0, %s1136
      %s1139 = sphi 0, %s1138
      %s1153 = sphi 0, %s1139
      %s1159 = sphi 0, %s1161
      %s1162 = sphi 0, %s1159
      %s1163 = sphi 0, %s1162
      %s1179 = sphi 0, %s1163
    $region4: #{mvit_forward.1} parent=1 // loop_header_branch
      %118 = sbr.rel (%p116) target = $region8
    $region5: #{mvit_forward.1} parent=1 // loop_body
      %s120 = ssub.s32 %s115, 1
      %s121 = ssub.s32 %s115, 2
      %s122 = sadd.s32 %s115, 1
      %s123 = ssub.s32 %s115, %s122
      %p124 = scmp.eq.s32.totalorder %s123, 0
      %s126 = sadd.s32 %s125, 1
      %s127 = scalar_select %p124, %s125, %s126
      %p130 = pneg %p124
      %p131 = scmp.eq.s32.totalorder %s115, 1
      %p132 = por %p130, %p131
      %p133 = scmp.ne.s32.totalorder %s125, %s128
      %p134 = scmp.eq.s32.totalorder %s115, 0
      %p135 = por %p133, %p134
      %p136 = scmp.ne.s32.totalorder %s125, %s128
      %p137 = scmp.eq.s32.totalorder %s120, 1
      %p138 = por %p136, %p137
      %p139 = scmp.ne.s32.totalorder %s128, %s129
      %p140 = scmp.eq.s32.totalorder %s120, 0
      %p141 = por %p139, %p140
      %p142 = scmp.ne.s32.totalorder %s128, %s129
      %p143 = scmp.eq.s32.totalorder %s121, 1
      %p144 = por %p142, %p143
      %p146 = scmp.ne.s32.totalorder %s129, %s145
      %p147 = scmp.eq.s32.totalorder %s121, 0
      %p148 = por %p146, %p147
      %s150 = sadd.s32 %s149, 1
      %p153 = scmp.eq.s32.totalorder %s115, 1
      %p154 = scmp.ne.s32.totalorder %s149, %s151
      %p155 = scmp.eq.s32.totalorder %s115, 0
      %p156 = por %p154, %p155
      %p157 = scmp.ne.s32.totalorder %s149, %s151
      %p158 = scmp.eq.s32.totalorder %s120, 1
      %p159 = por %p157, %p158
      %p160 = scmp.ne.s32.totalorder %s151, %s152
      %p161 = scmp.eq.s32.totalorder %s120, 0
      %p162 = por %p160, %p161
      %p163 = scmp.ne.s32.totalorder %s151, %s152
      %p164 = scmp.eq.s32.totalorder %s121, 1
      %p165 = por %p163, %p164
      %p167 = scmp.ne.s32.totalorder %s152, %s166
      %p168 = scmp.eq.s32.totalorder %s121, 0
      %p169 = por %p167, %p168
      %s171 = sadd.s32 %s170, 1
      %p174 = scmp.eq.s32.totalorder %s115, 1
      %p175 = scmp.ne.s32.totalorder %s170, %s172
      %p176 = scmp.eq.s32.totalorder %s115, 0
      %p177 = por %p175, %p176
      %p178 = scmp.ne.s32.totalorder %s170, %s172
      %p179 = scmp.eq.s32.totalorder %s120, 1
      %p180 = por %p178, %p179
      %p181 = scmp.ne.s32.totalorder %s172, %s173
      %p182 = scmp.eq.s32.totalorder %s120, 0
      %p183 = por %p181, %p182
      %p184 = scmp.ne.s32.totalorder %s172, %s173
      %p185 = scmp.eq.s32.totalorder %s121, 1
      %p186 = por %p184, %p185
      %p188 = scmp.ne.s32.totalorder %s173, %s187
      %p189 = scmp.eq.s32.totalorder %s121, 0
      %p190 = por %p188, %p189
      %s192 = sadd.s32 %s191, 1
      %p195 = scmp.eq.s32.totalorder %s115, 1
      %p196 = scmp.ne.s32.totalorder %s191, %s193
      %p197 = scmp.eq.s32.totalorder %s115, 0
      %p198 = por %p196, %p197
      %p199 = scmp.ne.s32.totalorder %s191, %s193
      %p200 = scmp.eq.s32.totalorder %s120, 1
      %p201 = por %p199, %p200
      %p202 = scmp.ne.s32.totalorder %s193, %s194
      %p203 = scmp.eq.s32.totalorder %s120, 0
      %p204 = por %p202, %p203
      %p205 = scmp.ne.s32.totalorder %s193, %s194
      %p206 = scmp.eq.s32.totalorder %s121, 1
      %p207 = por %p205, %p206
      %p209 = scmp.ne.s32.totalorder %s194, %s208
      %p210 = scmp.eq.s32.totalorder %s121, 0
      %p211 = por %p209, %p210
      %s213 = sadd.s32 %s212, 1
      %p216 = scmp.eq.s32.totalorder %s115, 1
      %p217 = scmp.ne.s32.totalorder %s212, %s214
      %p218 = scmp.eq.s32.totalorder %s115, 0
      %p219 = por %p217, %p218
      %p220 = scmp.ne.s32.totalorder %s212, %s214
      %p221 = scmp.eq.s32.totalorder %s120, 1
      %p222 = por %p220, %p221
      %p223 = scmp.ne.s32.totalorder %s214, %s215
      %p224 = scmp.eq.s32.totalorder %s120, 0
      %p225 = por %p223, %p224
      %p226 = scmp.ne.s32.totalorder %s214, %s215
      %p227 = scmp.eq.s32.totalorder %s121, 1
      %p228 = por %p226, %p227
      %p230 = scmp.ne.s32.totalorder %s215, %s229
      %p231 = scmp.eq.s32.totalorder %s121, 0
      %p232 = por %p230, %p231
      %s234 = sadd.s32 %s233, 1
      %p237 = scmp.eq.s32.totalorder %s115, 1
      %p238 = scmp.ne.s32.totalorder %s233, %s235
      %p239 = scmp.eq.s32.totalorder %s115, 0
      %p240 = por %p238, %p239
      %p241 = scmp.ne.s32.totalorder %s233, %s235
      %p242 = scmp.eq.s32.totalorder %s120, 1
      %p243 = por %p241, %p242
      %p244 = scmp.ne.s32.totalorder %s235, %s236
      %p245 = scmp.eq.s32.totalorder %s120, 0
      %p246 = por %p244, %p245
      %p247 = scmp.ne.s32.totalorder %s235, %s236
      %p248 = scmp.eq.s32.totalorder %s121, 1
      %p249 = por %p247, %p248
      %p251 = scmp.ne.s32.totalorder %s236, %s250
      %p252 = scmp.eq.s32.totalorder %s121, 0
      %p253 = por %p251, %p252
      %s255 = sadd.s32 %s254, 1
      %p258 = scmp.eq.s32.totalorder %s115, 1
      %p259 = scmp.ne.s32.totalorder %s254, %s256
      %p260 = scmp.eq.s32.totalorder %s115, 0
      %p261 = por %p259, %p260
      %p262 = scmp.ne.s32.totalorder %s254, %s256
      %p263 = scmp.eq.s32.totalorder %s120, 1
      %p264 = por %p262, %p263
      %p265 = scmp.ne.s32.totalorder %s256, %s257
      %p266 = scmp.eq.s32.totalorder %s120, 0
      %p267 = por %p265, %p266
      %p268 = scmp.ne.s32.totalorder %s256, %s257
      %p269 = scmp.eq.s32.totalorder %s121, 1
      %p270 = por %p268, %p269
      %p272 = scmp.ne.s32.totalorder %s257, %s271
      %p273 = scmp.eq.s32.totalorder %s121, 0
      %p274 = por %p272, %p273
      %s276 = sadd.s32 %s275, 1
      %p279 = scmp.eq.s32.totalorder %s115, 1
      %p280 = scmp.ne.s32.totalorder %s275, %s277
      %p281 = scmp.eq.s32.totalorder %s115, 0
      %p282 = por %p280, %p281
      %p283 = scmp.ne.s32.totalorder %s275, %s277
      %p284 = scmp.eq.s32.totalorder %s120, 1
      %p285 = por %p283, %p284
      %p286 = scmp.ne.s32.totalorder %s277, %s278
      %p287 = scmp.eq.s32.totalorder %s120, 0
      %p288 = por %p286, %p287
      %p289 = scmp.ne.s32.totalorder %s277, %s278
      %p290 = scmp.eq.s32.totalorder %s121, 1
      %p291 = por %p289, %p290
      %p293 = scmp.ne.s32.totalorder %s278, %s292
      %p294 = scmp.eq.s32.totalorder %s121, 0
      %p295 = por %p293, %p294
      %s297 = sadd.s32 %s296, 1
      %p300 = scmp.eq.s32.totalorder %s115, 1
      %p301 = scmp.ne.s32.totalorder %s296, %s298
      %p302 = scmp.eq.s32.totalorder %s115, 0
      %p303 = por %p301, %p302
      %p304 = scmp.ne.s32.totalorder %s296, %s298
      %p305 = scmp.eq.s32.totalorder %s120, 1
      %p306 = por %p304, %p305
      %p307 = scmp.ne.s32.totalorder %s298, %s299
      %p308 = scmp.eq.s32.totalorder %s120, 0
      %p309 = por %p307, %p308
      %p310 = scmp.ne.s32.totalorder %s298, %s299
      %p311 = scmp.eq.s32.totalorder %s121, 1
      %p312 = por %p310, %p311
      %p314 = scmp.ne.s32.totalorder %s299, %s313
      %p315 = scmp.eq.s32.totalorder %s121, 0
      %p316 = por %p314, %p315
      %s318 = sadd.s32 %s317, 1
      %p321 = scmp.eq.s32.totalorder %s115, 1
      %p322 = scmp.ne.s32.totalorder %s317, %s319
      %p323 = scmp.eq.s32.totalorder %s115, 0
      %p324 = por %p322, %p323
      %p325 = scmp.ne.s32.totalorder %s317, %s319
      %p326 = scmp.eq.s32.totalorder %s120, 1
      %p327 = por %p325, %p326
      %p328 = scmp.ne.s32.totalorder %s319, %s320
      %p329 = scmp.eq.s32.totalorder %s120, 0
      %p330 = por %p328, %p329
      %p331 = scmp.ne.s32.totalorder %s319, %s320
      %p332 = scmp.eq.s32.totalorder %s121, 1
      %p333 = por %p331, %p332
      %p335 = scmp.ne.s32.totalorder %s320, %s334
      %p336 = scmp.eq.s32.totalorder %s121, 0
      %p337 = por %p335, %p336
      %s339 = sadd.s32 %s338, 1
      %p342 = scmp.eq.s32.totalorder %s115, 1
      %p343 = scmp.ne.s32.totalorder %s338, %s340
      %p344 = scmp.eq.s32.totalorder %s115, 0
      %p345 = por %p343, %p344
      %p346 = scmp.ne.s32.totalorder %s338, %s340
      %p347 = scmp.eq.s32.totalorder %s120, 1
      %p348 = por %p346, %p347
      %p349 = scmp.ne.s32.totalorder %s340, %s341
      %p350 = scmp.eq.s32.totalorder %s120, 0
      %p351 = por %p349, %p350
      %p352 = scmp.ne.s32.totalorder %s340, %s341
      %p353 = scmp.eq.s32.totalorder %s121, 1
      %p354 = por %p352, %p353
      %p356 = scmp.ne.s32.totalorder %s341, %s355
      %p357 = scmp.eq.s32.totalorder %s121, 0
      %p358 = por %p356, %p357
      %s360 = sadd.s32 %s359, 1
      %p363 = scmp.eq.s32.totalorder %s115, 1
      %p364 = scmp.ne.s32.totalorder %s359, %s361
      %p365 = scmp.eq.s32.totalorder %s115, 0
      %p366 = por %p364, %p365
      %p367 = scmp.ne.s32.totalorder %s359, %s361
      %p368 = scmp.eq.s32.totalorder %s120, 1
      %p369 = por %p367, %p368
      %p370 = scmp.ne.s32.totalorder %s361, %s362
      %p371 = scmp.eq.s32.totalorder %s120, 0
      %p372 = por %p370, %p371
      %p373 = scmp.ne.s32.totalorder %s361, %s362
      %p374 = scmp.eq.s32.totalorder %s121, 1
      %p375 = por %p373, %p374
      %p377 = scmp.ne.s32.totalorder %s362, %s376
      %p378 = scmp.eq.s32.totalorder %s121, 0
      %p379 = por %p377, %p378
      %s381 = sadd.s32 %s380, 1
      %p384 = scmp.eq.s32.totalorder %s115, 1
      %p385 = scmp.ne.s32.totalorder %s380, %s382
      %p386 = scmp.eq.s32.totalorder %s115, 0
      %p387 = por %p385, %p386
      %p388 = scmp.ne.s32.totalorder %s380, %s382
      %p389 = scmp.eq.s32.totalorder %s120, 1
      %p390 = por %p388, %p389
      %p391 = scmp.ne.s32.totalorder %s382, %s383
      %p392 = scmp.eq.s32.totalorder %s120, 0
      %p393 = por %p391, %p392
      %p394 = scmp.ne.s32.totalorder %s382, %s383
      %p395 = scmp.eq.s32.totalorder %s121, 1
      %p396 = por %p394, %p395
      %p398 = scmp.ne.s32.totalorder %s383, %s397
      %p399 = scmp.eq.s32.totalorder %s121, 0
      %p400 = por %p398, %p399
      %s402 = sadd.s32 %s401, 1
      %p405 = scmp.eq.s32.totalorder %s115, 1
      %p406 = scmp.ne.s32.totalorder %s401, %s403
      %p407 = scmp.eq.s32.totalorder %s115, 0
      %p408 = por %p406, %p407
      %p409 = scmp.ne.s32.totalorder %s401, %s403
      %p410 = scmp.eq.s32.totalorder %s120, 1
      %p411 = por %p409, %p410
      %p412 = scmp.ne.s32.totalorder %s403, %s404
      %p413 = scmp.eq.s32.totalorder %s120, 0
      %p414 = por %p412, %p413
      %p415 = scmp.ne.s32.totalorder %s403, %s404
      %p416 = scmp.eq.s32.totalorder %s121, 1
      %p417 = por %p415, %p416
      %p419 = scmp.ne.s32.totalorder %s404, %s418
      %p420 = scmp.eq.s32.totalorder %s121, 0
      %p421 = por %p419, %p420
      %s423 = sadd.s32 %s422, 1
      %p426 = scmp.eq.s32.totalorder %s115, 1
      %p427 = scmp.ne.s32.totalorder %s422, %s424
      %p428 = scmp.eq.s32.totalorder %s115, 0
      %p429 = por %p427, %p428
      %p430 = scmp.ne.s32.totalorder %s422, %s424
      %p431 = scmp.eq.s32.totalorder %s120, 1
      %p432 = por %p430, %p431
      %p433 = scmp.ne.s32.totalorder %s424, %s425
      %p434 = scmp.eq.s32.totalorder %s120, 0
      %p435 = por %p433, %p434
      %p436 = scmp.ne.s32.totalorder %s424, %s425
      %p437 = scmp.eq.s32.totalorder %s121, 1
      %p438 = por %p436, %p437
      %p440 = scmp.ne.s32.totalorder %s425, %s439
      %p441 = scmp.eq.s32.totalorder %s121, 0
      %p442 = por %p440, %p441
      %s444 = sadd.s32 %s443, 1
      %p447 = scmp.eq.s32.totalorder %s115, 1
      %p448 = scmp.ne.s32.totalorder %s443, %s445
      %p449 = scmp.eq.s32.totalorder %s115, 0
      %p450 = por %p448, %p449
      %p451 = scmp.ne.s32.totalorder %s443, %s445
      %p452 = scmp.eq.s32.totalorder %s120, 1
      %p453 = por %p451, %p452
      %p454 = scmp.ne.s32.totalorder %s445, %s446
      %p455 = scmp.eq.s32.totalorder %s120, 0
      %p456 = por %p454, %p455
      %p457 = scmp.ne.s32.totalorder %s445, %s446
      %p458 = scmp.eq.s32.totalorder %s121, 1
      %p459 = por %p457, %p458
      %p461 = scmp.ne.s32.totalorder %s446, %s460
      %p462 = scmp.eq.s32.totalorder %s121, 0
      %p463 = por %p461, %p462
      %s465 = sadd.s32 %s464, 1
      %p468 = scmp.eq.s32.totalorder %s115, 1
      %p469 = scmp.ne.s32.totalorder %s464, %s466
      %p470 = scmp.eq.s32.totalorder %s115, 0
      %p471 = por %p469, %p470
      %p472 = scmp.ne.s32.totalorder %s464, %s466
      %p473 = scmp.eq.s32.totalorder %s120, 1
      %p474 = por %p472, %p473
      %p475 = scmp.ne.s32.totalorder %s466, %s467
      %p476 = scmp.eq.s32.totalorder %s120, 0
      %p477 = por %p475, %p476
      %p478 = scmp.ne.s32.totalorder %s466, %s467
      %p479 = scmp.eq.s32.totalorder %s121, 1
      %p480 = por %p478, %p479
      %p482 = scmp.ne.s32.totalorder %s467, %s481
      %p483 = scmp.eq.s32.totalorder %s121, 0
      %p484 = por %p482, %p483
      %s486 = sadd.s32 %s485, 1
      %p489 = scmp.eq.s32.totalorder %s115, 1
      %p490 = scmp.ne.s32.totalorder %s485, %s487
      %p491 = scmp.eq.s32.totalorder %s115, 0
      %p492 = por %p490, %p491
      %p493 = scmp.ne.s32.totalorder %s485, %s487
      %p494 = scmp.eq.s32.totalorder %s120, 1
      %p495 = por %p493, %p494
      %p496 = scmp.ne.s32.totalorder %s487, %s488
      %p497 = scmp.eq.s32.totalorder %s120, 0
      %p498 = por %p496, %p497
      %p499 = scmp.ne.s32.totalorder %s487, %s488
      %p500 = scmp.eq.s32.totalorder %s121, 1
      %p501 = por %p499, %p500
      %p503 = scmp.ne.s32.totalorder %s488, %s502
      %p504 = scmp.eq.s32.totalorder %s121, 0
      %p505 = por %p503, %p504
      %s507 = sadd.s32 %s506, 1
      %p510 = scmp.eq.s32.totalorder %s115, 1
      %p511 = scmp.ne.s32.totalorder %s506, %s508
      %p512 = scmp.eq.s32.totalorder %s115, 0
      %p513 = por %p511, %p512
      %p514 = scmp.ne.s32.totalorder %s506, %s508
      %p515 = scmp.eq.s32.totalorder %s120, 1
      %p516 = por %p514, %p515
      %p517 = scmp.ne.s32.totalorder %s508, %s509
      %p518 = scmp.eq.s32.totalorder %s120, 0
      %p519 = por %p517, %p518
      %p520 = scmp.ne.s32.totalorder %s508, %s509
      %p521 = scmp.eq.s32.totalorder %s121, 1
      %p522 = por %p520, %p521
      %p524 = scmp.ne.s32.totalorder %s509, %s523
      %p525 = scmp.eq.s32.totalorder %s121, 0
      %p526 = por %p524, %p525
      %s528 = sadd.s32 %s527, 1
      %p531 = scmp.eq.s32.totalorder %s115, 1
      %p532 = scmp.ne.s32.totalorder %s527, %s529
      %p533 = scmp.eq.s32.totalorder %s115, 0
      %p534 = por %p532, %p533
      %p535 = scmp.ne.s32.totalorder %s527, %s529
      %p536 = scmp.eq.s32.totalorder %s120, 1
      %p537 = por %p535, %p536
      %p538 = scmp.ne.s32.totalorder %s529, %s530
      %p539 = scmp.eq.s32.totalorder %s120, 0
      %p540 = por %p538, %p539
      %p541 = scmp.ne.s32.totalorder %s529, %s530
      %p542 = scmp.eq.s32.totalorder %s121, 1
      %p543 = por %p541, %p542
      %p545 = scmp.ne.s32.totalorder %s530, %s544
      %p546 = scmp.eq.s32.totalorder %s121, 0
      %p547 = por %p545, %p546
      %s549 = sadd.s32 %s548, 1
      %p552 = scmp.eq.s32.totalorder %s115, 1
      %p553 = scmp.ne.s32.totalorder %s548, %s550
      %p554 = scmp.eq.s32.totalorder %s115, 0
      %p555 = por %p553, %p554
      %p556 = scmp.ne.s32.totalorder %s548, %s550
      %p557 = scmp.eq.s32.totalorder %s120, 1
      %p558 = por %p556, %p557
      %p559 = scmp.ne.s32.totalorder %s550, %s551
      %p560 = scmp.eq.s32.totalorder %s120, 0
      %p561 = por %p559, %p560
      %p562 = scmp.ne.s32.totalorder %s550, %s551
      %p563 = scmp.eq.s32.totalorder %s121, 1
      %p564 = por %p562, %p563
      %p566 = scmp.ne.s32.totalorder %s551, %s565
      %p567 = scmp.eq.s32.totalorder %s121, 0
      %p568 = por %p566, %p567
      %s570 = sadd.s32 %s569, 1
      %p573 = scmp.eq.s32.totalorder %s115, 1
      %p574 = scmp.ne.s32.totalorder %s569, %s571
      %p575 = scmp.eq.s32.totalorder %s115, 0
      %p576 = por %p574, %p575
      %p577 = scmp.ne.s32.totalorder %s569, %s571
      %p578 = scmp.eq.s32.totalorder %s120, 1
      %p579 = por %p577, %p578
      %p580 = scmp.ne.s32.totalorder %s571, %s572
      %p581 = scmp.eq.s32.totalorder %s120, 0
      %p582 = por %p580, %p581
      %p583 = scmp.ne.s32.totalorder %s571, %s572
      %p584 = scmp.eq.s32.totalorder %s121, 1
      %p585 = por %p583, %p584
      %p587 = scmp.ne.s32.totalorder %s572, %s586
      %p588 = scmp.eq.s32.totalorder %s121, 0
      %p589 = por %p587, %p588
      %s591 = sadd.s32 %s590, 1
      %p594 = scmp.eq.s32.totalorder %s115, 1
      %p595 = scmp.ne.s32.totalorder %s590, %s592
      %p596 = scmp.eq.s32.totalorder %s115, 0
      %p597 = por %p595, %p596
      %p598 = scmp.ne.s32.totalorder %s590, %s592
      %p599 = scmp.eq.s32.totalorder %s120, 1
      %p600 = por %p598, %p599
      %p601 = scmp.ne.s32.totalorder %s592, %s593
      %p602 = scmp.eq.s32.totalorder %s120, 0
      %p603 = por %p601, %p602
      %p604 = scmp.ne.s32.totalorder %s592, %s593
      %p605 = scmp.eq.s32.totalorder %s121, 1
      %p606 = por %p604, %p605
      %p608 = scmp.ne.s32.totalorder %s593, %s607
      %p609 = scmp.eq.s32.totalorder %s121, 0
      %p610 = por %p608, %p609
      %s612 = sadd.s32 %s611, 1
      %p615 = scmp.eq.s32.totalorder %s115, 1
      %p616 = scmp.ne.s32.totalorder %s611, %s613
      %p617 = scmp.eq.s32.totalorder %s115, 0
      %p618 = por %p616, %p617
      %p619 = scmp.ne.s32.totalorder %s611, %s613
      %p620 = scmp.eq.s32.totalorder %s120, 1
      %p621 = por %p619, %p620
      %p622 = scmp.ne.s32.totalorder %s613, %s614
      %p623 = scmp.eq.s32.totalorder %s120, 0
      %p624 = por %p622, %p623
      %p625 = scmp.ne.s32.totalorder %s613, %s614
      %p626 = scmp.eq.s32.totalorder %s121, 1
      %p627 = por %p625, %p626
      %p629 = scmp.ne.s32.totalorder %s614, %s628
      %p630 = scmp.eq.s32.totalorder %s121, 0
      %p631 = por %p629, %p630
      %s633 = sadd.s32 %s632, 1
      %p636 = scmp.eq.s32.totalorder %s115, 1
      %p637 = scmp.ne.s32.totalorder %s632, %s634
      %p638 = scmp.eq.s32.totalorder %s115, 0
      %p639 = por %p637, %p638
      %p640 = scmp.ne.s32.totalorder %s632, %s634
      %p641 = scmp.eq.s32.totalorder %s120, 1
      %p642 = por %p640, %p641
      %p643 = scmp.ne.s32.totalorder %s634, %s635
      %p644 = scmp.eq.s32.totalorder %s120, 0
      %p645 = por %p643, %p644
      %p646 = scmp.ne.s32.totalorder %s634, %s635
      %p647 = scmp.eq.s32.totalorder %s121, 1
      %p648 = por %p646, %p647
      %p650 = scmp.ne.s32.totalorder %s635, %s649
      %p651 = scmp.eq.s32.totalorder %s121, 0
      %p652 = por %p650, %p651
      %s654 = sadd.s32 %s653, 1
      %p657 = scmp.eq.s32.totalorder %s115, 1
      %p658 = scmp.ne.s32.totalorder %s653, %s655
      %p659 = scmp.eq.s32.totalorder %s115, 0
      %p660 = por %p658, %p659
      %p661 = scmp.ne.s32.totalorder %s653, %s655
      %p662 = scmp.eq.s32.totalorder %s120, 1
      %p663 = por %p661, %p662
      %p664 = scmp.ne.s32.totalorder %s655, %s656
      %p665 = scmp.eq.s32.totalorder %s120, 0
      %p666 = por %p664, %p665
      %p667 = scmp.ne.s32.totalorder %s655, %s656
      %p668 = scmp.eq.s32.totalorder %s121, 1
      %p669 = por %p667, %p668
      %p671 = scmp.ne.s32.totalorder %s656, %s670
      %p672 = scmp.eq.s32.totalorder %s121, 0
      %p673 = por %p671, %p672
      %s675 = sadd.s32 %s674, 1
      %p678 = scmp.eq.s32.totalorder %s115, 1
      %p679 = scmp.ne.s32.totalorder %s674, %s676
      %p680 = scmp.eq.s32.totalorder %s115, 0
      %p681 = por %p679, %p680
      %p682 = scmp.ne.s32.totalorder %s674, %s676
      %p683 = scmp.eq.s32.totalorder %s120, 1
      %p684 = por %p682, %p683
      %p685 = scmp.ne.s32.totalorder %s676, %s677
      %p686 = scmp.eq.s32.totalorder %s120, 0
      %p687 = por %p685, %p686
      %p688 = scmp.ne.s32.totalorder %s676, %s677
      %p689 = scmp.eq.s32.totalorder %s121, 1
      %p690 = por %p688, %p689
      %p692 = scmp.ne.s32.totalorder %s677, %s691
      %p693 = scmp.eq.s32.totalorder %s121, 0
      %p694 = por %p692, %p693
      %s696 = sadd.s32 %s695, 1
      %p699 = scmp.eq.s32.totalorder %s115, 1
      %p700 = scmp.ne.s32.totalorder %s695, %s697
      %p701 = scmp.eq.s32.totalorder %s115, 0
      %p702 = por %p700, %p701
      %p703 = scmp.ne.s32.totalorder %s695, %s697
      %p704 = scmp.eq.s32.totalorder %s120, 1
      %p705 = por %p703, %p704
      %p706 = scmp.ne.s32.totalorder %s697, %s698
      %p707 = scmp.eq.s32.totalorder %s120, 0
      %p708 = por %p706, %p707
      %p709 = scmp.ne.s32.totalorder %s697, %s698
      %p710 = scmp.eq.s32.totalorder %s121, 1
      %p711 = por %p709, %p710
      %p713 = scmp.ne.s32.totalorder %s698, %s712
      %p714 = scmp.eq.s32.totalorder %s121, 0
      %p715 = por %p713, %p714
      %s717 = sadd.s32 %s716, 1
      %p720 = scmp.eq.s32.totalorder %s115, 1
      %p721 = scmp.ne.s32.totalorder %s716, %s718
      %p722 = scmp.eq.s32.totalorder %s115, 0
      %p723 = por %p721, %p722
      %p724 = scmp.ne.s32.totalorder %s716, %s718
      %p725 = scmp.eq.s32.totalorder %s120, 1
      %p726 = por %p724, %p725
      %p727 = scmp.ne.s32.totalorder %s718, %s719
      %p728 = scmp.eq.s32.totalorder %s120, 0
      %p729 = por %p727, %p728
      %p730 = scmp.ne.s32.totalorder %s718, %s719
      %p731 = scmp.eq.s32.totalorder %s121, 1
      %p732 = por %p730, %p731
      %p734 = scmp.ne.s32.totalorder %s719, %s733
      %p735 = scmp.eq.s32.totalorder %s121, 0
      %p736 = por %p734, %p735
      %s738 = sadd.s32 %s737, 1
      %p741 = scmp.eq.s32.totalorder %s115, 1
      %p742 = scmp.ne.s32.totalorder %s737, %s739
      %p743 = scmp.eq.s32.totalorder %s115, 0
      %p744 = por %p742, %p743
      %p745 = scmp.ne.s32.totalorder %s737, %s739
      %p746 = scmp.eq.s32.totalorder %s120, 1
      %p747 = por %p745, %p746
      %p748 = scmp.ne.s32.totalorder %s739, %s740
      %p749 = scmp.eq.s32.totalorder %s120, 0
      %p750 = por %p748, %p749
      %p751 = scmp.ne.s32.totalorder %s739, %s740
      %p752 = scmp.eq.s32.totalorder %s121, 1
      %p753 = por %p751, %p752
      %p755 = scmp.ne.s32.totalorder %s740, %s754
      %p756 = scmp.eq.s32.totalorder %s121, 0
      %p757 = por %p755, %p756
      %s759 = sadd.s32 %s758, 1
      %p762 = scmp.eq.s32.totalorder %s115, 1
      %p763 = scmp.ne.s32.totalorder %s758, %s760
      %p764 = scmp.eq.s32.totalorder %s115, 0
      %p765 = por %p763, %p764
      %p766 = scmp.ne.s32.totalorder %s758, %s760
      %p767 = scmp.eq.s32.totalorder %s120, 1
      %p768 = por %p766, %p767
      %p769 = scmp.ne.s32.totalorder %s760, %s761
      %p770 = scmp.eq.s32.totalorder %s120, 0
      %p771 = por %p769, %p770
      %p772 = scmp.ne.s32.totalorder %s760, %s761
      %p773 = scmp.eq.s32.totalorder %s121, 1
      %p774 = por %p772, %p773
      %p776 = scmp.ne.s32.totalorder %s761, %s775
      %p777 = scmp.eq.s32.totalorder %s121, 0
      %p778 = por %p776, %p777
      %s780 = sadd.s32 %s779, 1
      %p783 = scmp.eq.s32.totalorder %s115, 1
      %p784 = scmp.ne.s32.totalorder %s779, %s781
      %p785 = scmp.eq.s32.totalorder %s115, 0
      %p786 = por %p784, %p785
      %p787 = scmp.ne.s32.totalorder %s779, %s781
      %p788 = scmp.eq.s32.totalorder %s120, 1
      %p789 = por %p787, %p788
      %p790 = scmp.ne.s32.totalorder %s781, %s782
      %p791 = scmp.eq.s32.totalorder %s120, 0
      %p792 = por %p790, %p791
      %p793 = scmp.ne.s32.totalorder %s781, %s782
      %p794 = scmp.eq.s32.totalorder %s121, 1
      %p795 = por %p793, %p794
      %p797 = scmp.ne.s32.totalorder %s782, %s796
      %p798 = scmp.eq.s32.totalorder %s121, 0
      %p799 = por %p797, %p798
      %s801 = sadd.s32 %s800, 1
      %p804 = scmp.eq.s32.totalorder %s115, 1
      %p805 = scmp.ne.s32.totalorder %s800, %s802
      %p806 = scmp.eq.s32.totalorder %s115, 0
      %p807 = por %p805, %p806
      %p808 = scmp.ne.s32.totalorder %s800, %s802
      %p809 = scmp.eq.s32.totalorder %s120, 1
      %p810 = por %p808, %p809
      %p811 = scmp.ne.s32.totalorder %s802, %s803
      %p812 = scmp.eq.s32.totalorder %s120, 0
      %p813 = por %p811, %p812
      %p814 = scmp.ne.s32.totalorder %s802, %s803
      %p815 = scmp.eq.s32.totalorder %s121, 1
      %p816 = por %p814, %p815
      %p818 = scmp.ne.s32.totalorder %s803, %s817
      %p819 = scmp.eq.s32.totalorder %s121, 0
      %p820 = por %p818, %p819
      %s822 = sadd.s32 %s821, 1
      %p825 = scmp.eq.s32.totalorder %s115, 1
      %p826 = scmp.ne.s32.totalorder %s821, %s823
      %p827 = scmp.eq.s32.totalorder %s115, 0
      %p828 = por %p826, %p827
      %p829 = scmp.ne.s32.totalorder %s821, %s823
      %p830 = scmp.eq.s32.totalorder %s120, 1
      %p831 = por %p829, %p830
      %p832 = scmp.ne.s32.totalorder %s823, %s824
      %p833 = scmp.eq.s32.totalorder %s120, 0
      %p834 = por %p832, %p833
      %p835 = scmp.ne.s32.totalorder %s823, %s824
      %p836 = scmp.eq.s32.totalorder %s121, 1
      %p837 = por %p835, %p836
      %p839 = scmp.ne.s32.totalorder %s824, %s838
      %p840 = scmp.eq.s32.totalorder %s121, 0
      %p841 = por %p839, %p840
      %s843 = sadd.s32 %s842, 1
      %p846 = scmp.eq.s32.totalorder %s115, 1
      %p847 = scmp.ne.s32.totalorder %s842, %s844
      %p848 = scmp.eq.s32.totalorder %s115, 0
      %p849 = por %p847, %p848
      %p850 = scmp.ne.s32.totalorder %s842, %s844
      %p851 = scmp.eq.s32.totalorder %s120, 1
      %p852 = por %p850, %p851
      %p853 = scmp.ne.s32.totalorder %s844, %s845
      %p854 = scmp.eq.s32.totalorder %s120, 0
      %p855 = por %p853, %p854
      %p856 = scmp.ne.s32.totalorder %s844, %s845
      %p857 = scmp.eq.s32.totalorder %s121, 1
      %p858 = por %p856, %p857
      %p860 = scmp.ne.s32.totalorder %s845, %s859
      %p861 = scmp.eq.s32.totalorder %s121, 0
      %p862 = por %p860, %p861
      %s864 = sadd.s32 %s863, 1
      %p867 = scmp.eq.s32.totalorder %s115, 1
      %p868 = scmp.ne.s32.totalorder %s863, %s865
      %p869 = scmp.eq.s32.totalorder %s115, 0
      %p870 = por %p868, %p869
      %p871 = scmp.ne.s32.totalorder %s863, %s865
      %p872 = scmp.eq.s32.totalorder %s120, 1
      %p873 = por %p871, %p872
      %p874 = scmp.ne.s32.totalorder %s865, %s866
      %p875 = scmp.eq.s32.totalorder %s120, 0
      %p876 = por %p874, %p875
      %p877 = scmp.ne.s32.totalorder %s865, %s866
      %p878 = scmp.eq.s32.totalorder %s121, 1
      %p879 = por %p877, %p878
      %p881 = scmp.ne.s32.totalorder %s866, %s880
      %p882 = scmp.eq.s32.totalorder %s121, 0
      %p883 = por %p881, %p882
      %s885 = sadd.s32 %s884, 1
      %p888 = scmp.eq.s32.totalorder %s115, 1
      %p889 = scmp.ne.s32.totalorder %s884, %s886
      %p890 = scmp.eq.s32.totalorder %s115, 0
      %p891 = por %p889, %p890
      %p892 = scmp.ne.s32.totalorder %s884, %s886
      %p893 = scmp.eq.s32.totalorder %s120, 1
      %p894 = por %p892, %p893
      %p895 = scmp.ne.s32.totalorder %s886, %s887
      %p896 = scmp.eq.s32.totalorder %s120, 0
      %p897 = por %p895, %p896
      %p898 = scmp.ne.s32.totalorder %s886, %s887
      %p899 = scmp.eq.s32.totalorder %s121, 1
      %p900 = por %p898, %p899
      %p902 = scmp.ne.s32.totalorder %s887, %s901
      %p903 = scmp.eq.s32.totalorder %s121, 0
      %p904 = por %p902, %p903
      %s906 = sadd.s32 %s905, 1
      %p909 = scmp.eq.s32.totalorder %s115, 1
      %p910 = scmp.ne.s32.totalorder %s905, %s907
      %p911 = scmp.eq.s32.totalorder %s115, 0
      %p912 = por %p910, %p911
      %p913 = scmp.ne.s32.totalorder %s905, %s907
      %p914 = scmp.eq.s32.totalorder %s120, 1
      %p915 = por %p913, %p914
      %p916 = scmp.ne.s32.totalorder %s907, %s908
      %p917 = scmp.eq.s32.totalorder %s120, 0
      %p918 = por %p916, %p917
      %p919 = scmp.ne.s32.totalorder %s907, %s908
      %p920 = scmp.eq.s32.totalorder %s121, 1
      %p921 = por %p919, %p920
      %p923 = scmp.ne.s32.totalorder %s908, %s922
      %p924 = scmp.eq.s32.totalorder %s121, 0
      %p925 = por %p923, %p924
      %s927 = sadd.s32 %s926, 1
      %p930 = scmp.eq.s32.totalorder %s115, 1
      %p931 = scmp.ne.s32.totalorder %s926, %s928
      %p932 = scmp.eq.s32.totalorder %s115, 0
      %p933 = por %p931, %p932
      %p934 = scmp.ne.s32.totalorder %s926, %s928
      %p935 = scmp.eq.s32.totalorder %s120, 1
      %p936 = por %p934, %p935
      %p937 = scmp.ne.s32.totalorder %s928, %s929
      %p938 = scmp.eq.s32.totalorder %s120, 0
      %p939 = por %p937, %p938
      %p940 = scmp.ne.s32.totalorder %s928, %s929
      %p941 = scmp.eq.s32.totalorder %s121, 1
      %p942 = por %p940, %p941
      %p944 = scmp.ne.s32.totalorder %s929, %s943
      %p945 = scmp.eq.s32.totalorder %s121, 0
      %p946 = por %p944, %p945
      %s948 = sadd.s32 %s947, 1
      %p951 = scmp.eq.s32.totalorder %s115, 1
      %p952 = scmp.ne.s32.totalorder %s947, %s949
      %p953 = scmp.eq.s32.totalorder %s115, 0
      %p954 = por %p952, %p953
      %p955 = scmp.ne.s32.totalorder %s947, %s949
      %p956 = scmp.eq.s32.totalorder %s120, 1
      %p957 = por %p955, %p956
      %p958 = scmp.ne.s32.totalorder %s949, %s950
      %p959 = scmp.eq.s32.totalorder %s120, 0
      %p960 = por %p958, %p959
      %p961 = scmp.ne.s32.totalorder %s949, %s950
      %p962 = scmp.eq.s32.totalorder %s121, 1
      %p963 = por %p961, %p962
      %p965 = scmp.ne.s32.totalorder %s950, %s964
      %p966 = scmp.eq.s32.totalorder %s121, 0
      %p967 = por %p965, %p966
      %s969 = sadd.s32 %s968, 1
      %p972 = scmp.eq.s32.totalorder %s115, 1
      %p973 = scmp.ne.s32.totalorder %s968, %s970
      %p974 = scmp.eq.s32.totalorder %s115, 0
      %p975 = por %p973, %p974
      %p976 = scmp.ne.s32.totalorder %s968, %s970
      %p977 = scmp.eq.s32.totalorder %s120, 1
      %p978 = por %p976, %p977
      %p979 = scmp.ne.s32.totalorder %s970, %s971
      %p980 = scmp.eq.s32.totalorder %s120, 0
      %p981 = por %p979, %p980
      %p982 = scmp.ne.s32.totalorder %s970, %s971
      %p983 = scmp.eq.s32.totalorder %s121, 1
      %p984 = por %p982, %p983
      %p986 = scmp.ne.s32.totalorder %s971, %s985
      %p987 = scmp.eq.s32.totalorder %s121, 0
      %p988 = por %p986, %p987
      %s990 = sadd.s32 %s989, 1
      %p993 = scmp.eq.s32.totalorder %s115, 1
      %p994 = scmp.ne.s32.totalorder %s989, %s991
      %p995 = scmp.eq.s32.totalorder %s115, 0
      %p996 = por %p994, %p995
      %p997 = scmp.ne.s32.totalorder %s989, %s991
      %p998 = scmp.eq.s32.totalorder %s120, 1
      %p999 = por %p997, %p998
      %p1000 = scmp.ne.s32.totalorder %s991, %s992
      %p1001 = scmp.eq.s32.totalorder %s120, 0
      %p1002 = por %p1000, %p1001
      %p1003 = scmp.ne.s32.totalorder %s991, %s992
      %p1004 = scmp.eq.s32.totalorder %s121, 1
      %p1005 = por %p1003, %p1004
      %p1007 = scmp.ne.s32.totalorder %s992, %s1006
      %p1008 = scmp.eq.s32.totalorder %s121, 0
      %p1009 = por %p1007, %p1008
      %s1011 = sadd.s32 %s1010, 1
      %p1014 = scmp.eq.s32.totalorder %s115, 1
      %p1015 = scmp.ne.s32.totalorder %s1010, %s1012
      %p1016 = scmp.eq.s32.totalorder %s115, 0
      %p1017 = por %p1015, %p1016
      %p1018 = scmp.ne.s32.totalorder %s1010, %s1012
      %p1019 = scmp.eq.s32.totalorder %s120, 1
      %p1020 = por %p1018, %p1019
      %p1021 = scmp.ne.s32.totalorder %s1012, %s1013
      %p1022 = scmp.eq.s32.totalorder %s120, 0
      %p1023 = por %p1021, %p1022
      %p1024 = scmp.ne.s32.totalorder %s1012, %s1013
      %p1025 = scmp.eq.s32.totalorder %s121, 1
      %p1026 = por %p1024, %p1025
      %p1028 = scmp.ne.s32.totalorder %s1013, %s1027
      %p1029 = scmp.eq.s32.totalorder %s121, 0
      %p1030 = por %p1028, %p1029
      %s1032 = sadd.s32 %s1031, 1
      %p1035 = scmp.eq.s32.totalorder %s115, 1
      %p1036 = scmp.ne.s32.totalorder %s1031, %s1033
      %p1037 = scmp.eq.s32.totalorder %s115, 0
      %p1038 = por %p1036, %p1037
      %p1039 = scmp.ne.s32.totalorder %s1031, %s1033
      %p1040 = scmp.eq.s32.totalorder %s120, 1
      %p1041 = por %p1039, %p1040
      %p1042 = scmp.ne.s32.totalorder %s1033, %s1034
      %p1043 = scmp.eq.s32.totalorder %s120, 0
      %p1044 = por %p1042, %p1043
      %p1045 = scmp.ne.s32.totalorder %s1033, %s1034
      %p1046 = scmp.eq.s32.totalorder %s121, 1
      %p1047 = por %p1045, %p1046
      %p1049 = scmp.ne.s32.totalorder %s1034, %s1048
      %p1050 = scmp.eq.s32.totalorder %s121, 0
      %p1051 = por %p1049, %p1050
      %s1053 = sadd.s32 %s1052, 1
      %p1056 = scmp.eq.s32.totalorder %s115, 1
      %p1057 = scmp.ne.s32.totalorder %s1052, %s1054
      %p1058 = scmp.eq.s32.totalorder %s115, 0
      %p1059 = por %p1057, %p1058
      %p1060 = scmp.ne.s32.totalorder %s1052, %s1054
      %p1061 = scmp.eq.s32.totalorder %s120, 1
      %p1062 = por %p1060, %p1061
      %p1063 = scmp.ne.s32.totalorder %s1054, %s1055
      %p1064 = scmp.eq.s32.totalorder %s120, 0
      %p1065 = por %p1063, %p1064
      %p1066 = scmp.ne.s32.totalorder %s1054, %s1055
      %p1067 = scmp.eq.s32.totalorder %s121, 1
      %p1068 = por %p1066, %p1067
      %p1070 = scmp.ne.s32.totalorder %s1055, %s1069
      %p1071 = scmp.eq.s32.totalorder %s121, 0
      %p1072 = por %p1070, %p1071
      %s1074 = sadd.s32 %s1073, 1
      %p1077 = scmp.eq.s32.totalorder %s115, 1
      %p1078 = scmp.ne.s32.totalorder %s1073, %s1075
      %p1079 = scmp.eq.s32.totalorder %s115, 0
      %p1080 = por %p1078, %p1079
      %p1081 = scmp.ne.s32.totalorder %s1073, %s1075
      %p1082 = scmp.eq.s32.totalorder %s120, 1
      %p1083 = por %p1081, %p1082
      %p1084 = scmp.ne.s32.totalorder %s1075, %s1076
      %p1085 = scmp.eq.s32.totalorder %s120, 0
      %p1086 = por %p1084, %p1085
      %p1087 = scmp.ne.s32.totalorder %s1075, %s1076
      %p1088 = scmp.eq.s32.totalorder %s121, 1
      %p1089 = por %p1087, %p1088
      %p1091 = scmp.ne.s32.totalorder %s1076, %s1090
      %p1092 = scmp.eq.s32.totalorder %s121, 0
      %p1093 = por %p1091, %p1092
      %s1095 = sadd.s32 %s1094, 1
      %p1098 = scmp.eq.s32.totalorder %s115, 1
      %p1099 = scmp.ne.s32.totalorder %s1094, %s1096
      %p1100 = scmp.eq.s32.totalorder %s115, 0
      %p1101 = por %p1099, %p1100
      %p1102 = scmp.ne.s32.totalorder %s1094, %s1096
      %p1103 = scmp.eq.s32.totalorder %s120, 1
      %p1104 = por %p1102, %p1103
      %p1105 = scmp.ne.s32.totalorder %s1096, %s1097
      %p1106 = scmp.eq.s32.totalorder %s120, 0
      %p1107 = por %p1105, %p1106
      %p1108 = scmp.ne.s32.totalorder %s1096, %s1097
      %p1109 = scmp.eq.s32.totalorder %s121, 1
      %p1110 = por %p1108, %p1109
      %p1112 = scmp.ne.s32.totalorder %s1097, %s1111
      %p1113 = scmp.eq.s32.totalorder %s121, 0
      %p1114 = por %p1112, %p1113
      %s1116 = sadd.s32 %s1115, 1
      %p1119 = scmp.eq.s32.totalorder %s115, 1
      %p1120 = scmp.ne.s32.totalorder %s1115, %s1117
      %p1121 = scmp.eq.s32.totalorder %s115, 0
      %p1122 = por %p1120, %p1121
      %p1123 = scmp.ne.s32.totalorder %s1115, %s1117
      %p1124 = scmp.eq.s32.totalorder %s120, 1
      %p1125 = por %p1123, %p1124
      %p1126 = scmp.ne.s32.totalorder %s1117, %s1118
      %p1127 = scmp.eq.s32.totalorder %s120, 0
      %p1128 = por %p1126, %p1127
      %p1129 = scmp.ne.s32.totalorder %s1117, %s1118
      %p1130 = scmp.eq.s32.totalorder %s121, 1
      %p1131 = por %p1129, %p1130
      %p1133 = scmp.ne.s32.totalorder %s1118, %s1132
      %p1134 = scmp.eq.s32.totalorder %s121, 0
      %p1135 = por %p1133, %p1134
      %s1137 = sadd.s32 %s1136, 1
      %p1140 = scmp.eq.s32.totalorder %s115, 1
      %p1141 = scmp.ne.s32.totalorder %s1136, %s1138
      %p1142 = scmp.eq.s32.totalorder %s115, 0
      %p1143 = por %p1141, %p1142
      %p1144 = scmp.ne.s32.totalorder %s1136, %s1138
      %p1145 = scmp.eq.s32.totalorder %s120, 1
      %p1146 = por %p1144, %p1145
      %p1147 = scmp.ne.s32.totalorder %s1138, %s1139
      %p1148 = scmp.eq.s32.totalorder %s120, 0
      %p1149 = por %p1147, %p1148
      %p1150 = scmp.ne.s32.totalorder %s1138, %s1139
      %p1151 = scmp.eq.s32.totalorder %s121, 1
      %p1152 = por %p1150, %p1151
      %p1154 = scmp.ne.s32.totalorder %s1139, %s1153
      %p1155 = scmp.eq.s32.totalorder %s121, 0
      %p1156 = por %p1154, %p1155
      %s1157 = ssub.s32 %s115, %s122
      %p1158 = scmp.eq.s32.totalorder %s1157, 0
      %s1160 = sadd.s32 %s1159, 1
      %s1161 = scalar_select %p1158, %s1159, %s1160
      %p1164 = pneg %p1158
      %p1165 = scmp.eq.s32.totalorder %s115, 1
      %p1166 = por %p1164, %p1165
      %p1167 = scmp.ne.s32.totalorder %s1159, %s1162
      %p1168 = scmp.eq.s32.totalorder %s115, 0
      %p1169 = por %p1167, %p1168
      %p1170 = scmp.ne.s32.totalorder %s1159, %s1162
      %p1171 = scmp.eq.s32.totalorder %s120, 1
      %p1172 = por %p1170, %p1171
      %p1173 = scmp.ne.s32.totalorder %s1162, %s1163
      %p1174 = scmp.eq.s32.totalorder %s120, 0
      %p1175 = por %p1173, %p1174
      %p1176 = scmp.ne.s32.totalorder %s1162, %s1163
      %p1177 = scmp.eq.s32.totalorder %s121, 1
      %p1178 = por %p1176, %p1177
      %p1180 = scmp.ne.s32.totalorder %s1163, %s1179
      %p1181 = scmp.eq.s32.totalorder %s121, 0
      %p1182 = por %p1180, %p1181
      %p1183 = scmp.le.s32.totalorder 1, %s115
      %p1184 = scmp.lt.s32.totalorder %s115, 3
      %p1185 = pnand %p1183, %p1184
      %p1186 = pneg %p1185
      // Predicated region
      $region9: #{mvit_forward.1} parent=5 // pred_check
        _
      $region10: #{mvit_forward.1} parent=5 // pred_check_branch
        %1188 = sbr.rel (%p1185) target = $region12
      $region11: #{mvit_forward.1} parent=5 // pred_region
        %s1189 = ssub.s32 %s115, 1
        // Predicated region
        $region13: #{mvit_forward.1} parent=11 // pred_check
          %p1190 = pneg %p162
        $region14: #{mvit_forward.1} parent=11 // pred_check_branch
          %1192 = sbr.rel (%p1190) target = $region16
        $region15: #{mvit_forward.1} parent=11 // pred_region
          _
        $region16: #{mvit_forward.1} parent=11 // pred_fallthru
          _
        // Predicated region
        $region17: #{mvit_forward.1} parent=11 // pred_check
          %p1193 = pneg %p183
        $region18: #{mvit_forward.1} parent=11 // pred_check_branch
          %1195 = sbr.rel (%p1193) target = $region20
        $region19: #{mvit_forward.1} parent=11 // pred_region
          _
        $region20: #{mvit_forward.1} parent=11 // pred_fallthru
          _
        // Predicated region
        $region21: #{mvit_forward.1} parent=11 // pred_check
          %p1196 = pneg %p204
        $region22: #{mvit_forward.1} parent=11 // pred_check_branch
          %1198 = sbr.rel (%p1196) target = $region24
        $region23: #{mvit_forward.1} parent=11 // pred_region
          _
        $region24: #{mvit_forward.1} parent=11 // pred_fallthru
          _
        // Predicated region
        $region25: #{mvit_forward.1} parent=11 // pred_check
          %p1199 = pneg %p225
        $region26: #{mvit_forward.1} parent=11 // pred_check_branch
          %1201 = sbr.rel (%p1199) target = $region28
        $region27: #{mvit_forward.1} parent=11 // pred_region
          _
        $region28: #{mvit_forward.1} parent=11 // pred_fallthru
          _
        // Predicated region
        $region29: #{mvit_forward.1} parent=11 // pred_check
          %p1202 = pneg %p246
        $region30: #{mvit_forward.1} parent=11 // pred_check_branch
          %1204 = sbr.rel (%p1202) target = $region32
        $region31: #{mvit_forward.1} parent=11 // pred_region
          _
        $region32: #{mvit_forward.1} parent=11 // pred_fallthru
          _
        // Predicated region
        $region33: #{mvit_forward.1} parent=11 // pred_check
          %p1205 = pneg %p267
        $region34: #{mvit_forward.1} parent=11 // pred_check_branch
          %1207 = sbr.rel (%p1205) target = $region36
        $region35: #{mvit_forward.1} parent=11 // pred_region
          _
        $region36: #{mvit_forward.1} parent=11 // pred_fallthru
          _
        // Predicated region
        $region37: #{mvit_forward.1} parent=11 // pred_check
          %p1208 = pneg %p288
        $region38: #{mvit_forward.1} parent=11 // pred_check_branch
          %1210 = sbr.rel (%p1208) target = $region40
        $region39: #{mvit_forward.1} parent=11 // pred_region
          _
        $region40: #{mvit_forward.1} parent=11 // pred_fallthru
          _
        // Predicated region
        $region41: #{mvit_forward.1} parent=11 // pred_check
          %p1211 = pneg %p309
        $region42: #{mvit_forward.1} parent=11 // pred_check_branch
          %1213 = sbr.rel (%p1211) target = $region44
        $region43: #{mvit_forward.1} parent=11 // pred_region
          _
        $region44: #{mvit_forward.1} parent=11 // pred_fallthru
          _
        // Predicated region
        $region45: #{mvit_forward.1} parent=11 // pred_check
          %p1214 = pneg %p330
        $region46: #{mvit_forward.1} parent=11 // pred_check_branch
          %1216 = sbr.rel (%p1214) target = $region48
        $region47: #{mvit_forward.1} parent=11 // pred_region
          _
        $region48: #{mvit_forward.1} parent=11 // pred_fallthru
          _
        // Predicated region
        $region49: #{mvit_forward.1} parent=11 // pred_check
          %p1217 = pneg %p351
        $region50: #{mvit_forward.1} parent=11 // pred_check_branch
          %1219 = sbr.rel (%p1217) target = $region52
        $region51: #{mvit_forward.1} parent=11 // pred_region
          _
        $region52: #{mvit_forward.1} parent=11 // pred_fallthru
          _
        // Predicated region
        $region53: #{mvit_forward.1} parent=11 // pred_check
          %p1220 = pneg %p372
        $region54: #{mvit_forward.1} parent=11 // pred_check_branch
          %1222 = sbr.rel (%p1220) target = $region56
        $region55: #{mvit_forward.1} parent=11 // pred_region
          _
        $region56: #{mvit_forward.1} parent=11 // pred_fallthru
          _
        // Predicated region
        $region57: #{mvit_forward.1} parent=11 // pred_check
          %p1223 = pneg %p393
        $region58: #{mvit_forward.1} parent=11 // pred_check_branch
          %1225 = sbr.rel (%p1223) target = $region60
        $region59: #{mvit_forward.1} parent=11 // pred_region
          _
        $region60: #{mvit_forward.1} parent=11 // pred_fallthru
          _
        // Predicated region
        $region61: #{mvit_forward.1} parent=11 // pred_check
          %p1226 = pneg %p414
        $region62: #{mvit_forward.1} parent=11 // pred_check_branch
          %1228 = sbr.rel (%p1226) target = $region64
        $region63: #{mvit_forward.1} parent=11 // pred_region
          _
        $region64: #{mvit_forward.1} parent=11 // pred_fallthru
          _
        // Predicated region
        $region65: #{mvit_forward.1} parent=11 // pred_check
          %p1229 = pneg %p435
        $region66: #{mvit_forward.1} parent=11 // pred_check_branch
          %1231 = sbr.rel (%p1229) target = $region68
        $region67: #{mvit_forward.1} parent=11 // pred_region
          _
        $region68: #{mvit_forward.1} parent=11 // pred_fallthru
          _
        // Predicated region
        $region69: #{mvit_forward.1} parent=11 // pred_check
          %p1232 = pneg %p456
        $region70: #{mvit_forward.1} parent=11 // pred_check_branch
          %1234 = sbr.rel (%p1232) target = $region72
        $region71: #{mvit_forward.1} parent=11 // pred_region
          _
        $region72: #{mvit_forward.1} parent=11 // pred_fallthru
          _
        // Predicated region
        $region73: #{mvit_forward.1} parent=11 // pred_check
          %p1235 = pneg %p477
        $region74: #{mvit_forward.1} parent=11 // pred_check_branch
          %1237 = sbr.rel (%p1235) target = $region76
        $region75: #{mvit_forward.1} parent=11 // pred_region
          _
        $region76: #{mvit_forward.1} parent=11 // pred_fallthru
          _
        // Predicated region
        $region77: #{mvit_forward.1} parent=11 // pred_check
          %p1238 = pneg %p498
        $region78: #{mvit_forward.1} parent=11 // pred_check_branch
          %1240 = sbr.rel (%p1238) target = $region80
        $region79: #{mvit_forward.1} parent=11 // pred_region
          _
        $region80: #{mvit_forward.1} parent=11 // pred_fallthru
          _
        // Predicated region
        $region81: #{mvit_forward.1} parent=11 // pred_check
          %p1241 = pneg %p519
        $region82: #{mvit_forward.1} parent=11 // pred_check_branch
          %1243 = sbr.rel (%p1241) target = $region84
        $region83: #{mvit_forward.1} parent=11 // pred_region
          _
        $region84: #{mvit_forward.1} parent=11 // pred_fallthru
          _
        // Predicated region
        $region85: #{mvit_forward.1} parent=11 // pred_check
          %p1244 = pneg %p540
        $region86: #{mvit_forward.1} parent=11 // pred_check_branch
          %1246 = sbr.rel (%p1244) target = $region88
        $region87: #{mvit_forward.1} parent=11 // pred_region
          _
        $region88: #{mvit_forward.1} parent=11 // pred_fallthru
          _
        // Predicated region
        $region89: #{mvit_forward.1} parent=11 // pred_check
          %p1247 = pneg %p561
        $region90: #{mvit_forward.1} parent=11 // pred_check_branch
          %1249 = sbr.rel (%p1247) target = $region92
        $region91: #{mvit_forward.1} parent=11 // pred_region
          _
        $region92: #{mvit_forward.1} parent=11 // pred_fallthru
          _
        // Predicated region
        $region93: #{mvit_forward.1} parent=11 // pred_check
          %p1250 = pneg %p582
        $region94: #{mvit_forward.1} parent=11 // pred_check_branch
          %1252 = sbr.rel (%p1250) target = $region96
        $region95: #{mvit_forward.1} parent=11 // pred_region
          _
        $region96: #{mvit_forward.1} parent=11 // pred_fallthru
          _
        // Predicated region
        $region97: #{mvit_forward.1} parent=11 // pred_check
          %p1253 = pneg %p603
        $region98: #{mvit_forward.1} parent=11 // pred_check_branch
          %1255 = sbr.rel (%p1253) target = $region100
        $region99: #{mvit_forward.1} parent=11 // pred_region
          _
        $region100: #{mvit_forward.1} parent=11 // pred_fallthru
          _
        // Predicated region
        $region101: #{mvit_forward.1} parent=11 // pred_check
          %p1256 = pneg %p624
        $region102: #{mvit_forward.1} parent=11 // pred_check_branch
          %1258 = sbr.rel (%p1256) target = $region104
        $region103: #{mvit_forward.1} parent=11 // pred_region
          _
        $region104: #{mvit_forward.1} parent=11 // pred_fallthru
          _
        // Predicated region
        $region105: #{mvit_forward.1} parent=11 // pred_check
          %p1259 = pneg %p645
        $region106: #{mvit_forward.1} parent=11 // pred_check_branch
          %1261 = sbr.rel (%p1259) target = $region108
        $region107: #{mvit_forward.1} parent=11 // pred_region
          _
        $region108: #{mvit_forward.1} parent=11 // pred_fallthru
          _
        // Predicated region
        $region109: #{mvit_forward.1} parent=11 // pred_check
          %p1262 = pneg %p666
        $region110: #{mvit_forward.1} parent=11 // pred_check_branch
          %1264 = sbr.rel (%p1262) target = $region112
        $region111: #{mvit_forward.1} parent=11 // pred_region
          _
        $region112: #{mvit_forward.1} parent=11 // pred_fallthru
          _
        // Predicated region
        $region113: #{mvit_forward.1} parent=11 // pred_check
          %p1265 = pneg %p687
        $region114: #{mvit_forward.1} parent=11 // pred_check_branch
          %1267 = sbr.rel (%p1265) target = $region116
        $region115: #{mvit_forward.1} parent=11 // pred_region
          _
        $region116: #{mvit_forward.1} parent=11 // pred_fallthru
          _
        // Predicated region
        $region117: #{mvit_forward.1} parent=11 // pred_check
          %p1268 = pneg %p708
        $region118: #{mvit_forward.1} parent=11 // pred_check_branch
          %1270 = sbr.rel (%p1268) target = $region120
        $region119: #{mvit_forward.1} parent=11 // pred_region
          _
        $region120: #{mvit_forward.1} parent=11 // pred_fallthru
          _
        // Predicated region
        $region121: #{mvit_forward.1} parent=11 // pred_check
          %p1271 = pneg %p729
        $region122: #{mvit_forward.1} parent=11 // pred_check_branch
          %1273 = sbr.rel (%p1271) target = $region124
        $region123: #{mvit_forward.1} parent=11 // pred_region
          _
        $region124: #{mvit_forward.1} parent=11 // pred_fallthru
          _
        // Predicated region
        $region125: #{mvit_forward.1} parent=11 // pred_check
          %p1274 = pneg %p750
        $region126: #{mvit_forward.1} parent=11 // pred_check_branch
          %1276 = sbr.rel (%p1274) target = $region128
        $region127: #{mvit_forward.1} parent=11 // pred_region
          _
        $region128: #{mvit_forward.1} parent=11 // pred_fallthru
          _
        // Predicated region
        $region129: #{mvit_forward.1} parent=11 // pred_check
          %p1277 = pneg %p771
        $region130: #{mvit_forward.1} parent=11 // pred_check_branch
          %1279 = sbr.rel (%p1277) target = $region132
        $region131: #{mvit_forward.1} parent=11 // pred_region
          _
        $region132: #{mvit_forward.1} parent=11 // pred_fallthru
          _
        // Predicated region
        $region133: #{mvit_forward.1} parent=11 // pred_check
          %p1280 = pneg %p792
        $region134: #{mvit_forward.1} parent=11 // pred_check_branch
          %1282 = sbr.rel (%p1280) target = $region136
        $region135: #{mvit_forward.1} parent=11 // pred_region
          _
        $region136: #{mvit_forward.1} parent=11 // pred_fallthru
          _
        // Predicated region
        $region137: #{mvit_forward.1} parent=11 // pred_check
          %p1283 = pneg %p813
        $region138: #{mvit_forward.1} parent=11 // pred_check_branch
          %1285 = sbr.rel (%p1283) target = $region140
        $region139: #{mvit_forward.1} parent=11 // pred_region
          %1287 = vsyncadd [#allocation3], 0
          %s1289 = sshll.u32 %s65, 4
          %s1290 = int_to_ptr.hbm [resolvable:$true] %s1289
          %s1291 = sshll.u32 [#allocation2], 4
          %s1292 = int_to_ptr.vmem [resolvable:$true] %s1291
          %1294 = dma.hbm_to_vmem [thread:$0]  %s1290, 16, %s1292, [#allocation3]
        $region140: #{mvit_forward.1} parent=11 // pred_fallthru
          _
        // Predicated region
        $region141: #{mvit_forward.1} parent=11 // pred_check
          %p1295 = pneg %p834
        $region142: #{mvit_forward.1} parent=11 // pred_check_branch
          %1297 = sbr.rel (%p1295) target = $region144
        $region143: #{mvit_forward.1} parent=11 // pred_region
          %1299 = vsyncadd [#allocation6], 0
          %s1301 = sshll.u32 %s67, 4
          %s1302 = int_to_ptr.hbm [resolvable:$true] %s1301
          %s1303 = sshll.u32 [#allocation5], 4
          %s1304 = int_to_ptr.vmem [resolvable:$true] %s1303
          %1306 = dma.hbm_to_vmem [thread:$0]  %s1302, 16, %s1304, [#allocation6]
        $region144: #{mvit_forward.1} parent=11 // pred_fallthru
          _
        // Predicated region
        $region145: #{mvit_forward.1} parent=11 // pred_check
          %p1307 = pneg %p855
        $region146: #{mvit_forward.1} parent=11 // pred_check_branch
          %1309 = sbr.rel (%p1307) target = $region148
        $region147: #{mvit_forward.1} parent=11 // pred_region
          _
        $region148: #{mvit_forward.1} parent=11 // pred_fallthru
          _
        // Predicated region
        $region149: #{mvit_forward.1} parent=11 // pred_check
          %p1310 = pneg %p876
        $region150: #{mvit_forward.1} parent=11 // pred_check_branch
          %1312 = sbr.rel (%p1310) target = $region152
        $region151: #{mvit_forward.1} parent=11 // pred_region
          %1314 = vsyncadd [#allocation6], 0
          %s1316 = sshll.u32 %s71, 4
          %s1317 = int_to_ptr.hbm [resolvable:$true] %s1316
          %s1318 = sshll.u32 [#allocation7], 4
          %s1319 = int_to_ptr.vmem [resolvable:$true] %s1318
          %1321 = dma.hbm_to_vmem [thread:$0]  %s1317, 16, %s1319, [#allocation6]
        $region152: #{mvit_forward.1} parent=11 // pred_fallthru
          _
        // Predicated region
        $region153: #{mvit_forward.1} parent=11 // pred_check
          %p1322 = pneg %p897
        $region154: #{mvit_forward.1} parent=11 // pred_check_branch
          %1324 = sbr.rel (%p1322) target = $region156
        $region155: #{mvit_forward.1} parent=11 // pred_region
          %1326 = vsyncadd [#allocation9], 0
          %s1328 = sshll.u32 %s73, 4
          %s1329 = int_to_ptr.hbm [resolvable:$true] %s1328
          %s1330 = sshll.u32 [#allocation8], 4
          %s1331 = int_to_ptr.vmem [resolvable:$true] %s1330
          %1333 = dma.hbm_to_vmem [thread:$0]  %s1329, 16, %s1331, [#allocation9]
        $region156: #{mvit_forward.1} parent=11 // pred_fallthru
          _
        // Predicated region
        $region157: #{mvit_forward.1} parent=11 // pred_check
          %p1334 = pneg %p918
        $region158: #{mvit_forward.1} parent=11 // pred_check_branch
          %1336 = sbr.rel (%p1334) target = $region160
        $region159: #{mvit_forward.1} parent=11 // pred_region
          _
        $region160: #{mvit_forward.1} parent=11 // pred_fallthru
          _
        // Predicated region
        $region161: #{mvit_forward.1} parent=11 // pred_check
          %p1337 = pneg %p939
        $region162: #{mvit_forward.1} parent=11 // pred_check_branch
          %1339 = sbr.rel (%p1337) target = $region164
        $region163: #{mvit_forward.1} parent=11 // pred_region
          %1341 = vsyncadd [#allocation9], 0
          %s1343 = sshll.u32 %s77, 4
          %s1344 = int_to_ptr.hbm [resolvable:$true] %s1343
          %s1345 = sshll.u32 [#allocation10], 4
          %s1346 = int_to_ptr.vmem [resolvable:$true] %s1345
          %1348 = dma.hbm_to_vmem [thread:$0]  %s1344, 16, %s1346, [#allocation9]
        $region164: #{mvit_forward.1} parent=11 // pred_fallthru
          _
        // Predicated region
        $region165: #{mvit_forward.1} parent=11 // pred_check
          %p1349 = pneg %p960
        $region166: #{mvit_forward.1} parent=11 // pred_check_branch
          %1351 = sbr.rel (%p1349) target = $region168
        $region167: #{mvit_forward.1} parent=11 // pred_region
          %1353 = vsyncadd [#allocation12], 0
          %s1355 = sshll.u32 %s79, 4
          %s1356 = int_to_ptr.hbm [resolvable:$true] %s1355
          %s1357 = sshll.u32 [#allocation11], 4
          %s1358 = int_to_ptr.vmem [resolvable:$true] %s1357
          %1360 = dma.hbm_to_vmem [thread:$0]  %s1356, 16, %s1358, [#allocation12]
        $region168: #{mvit_forward.1} parent=11 // pred_fallthru
          _
        // Predicated region
        $region169: #{mvit_forward.1} parent=11 // pred_check
          %p1361 = pneg %p981
        $region170: #{mvit_forward.1} parent=11 // pred_check_branch
          %1363 = sbr.rel (%p1361) target = $region172
        $region171: #{mvit_forward.1} parent=11 // pred_region
          %1365 = vsyncadd [#allocation12], 0
          %s1367 = sshll.u32 %s81, 4
          %s1368 = int_to_ptr.hbm [resolvable:$true] %s1367
          %s1369 = sshll.u32 [#allocation13], 4
          %s1370 = int_to_ptr.vmem [resolvable:$true] %s1369
          %1372 = dma.hbm_to_vmem [thread:$0]  %s1368, 16, %s1370, [#allocation12]
        $region172: #{mvit_forward.1} parent=11 // pred_fallthru
          _
        // Predicated region
        $region173: #{mvit_forward.1} parent=11 // pred_check
          %p1373 = pneg %p1002
        $region174: #{mvit_forward.1} parent=11 // pred_check_branch
          %1375 = sbr.rel (%p1373) target = $region176
        $region175: #{mvit_forward.1} parent=11 // pred_region
          _
        $region176: #{mvit_forward.1} parent=11 // pred_fallthru
          _
        // Predicated region
        $region177: #{mvit_forward.1} parent=11 // pred_check
          %p1376 = pneg %p1023
        $region178: #{mvit_forward.1} parent=11 // pred_check_branch
          %1378 = sbr.rel (%p1376) target = $region180
        $region179: #{mvit_forward.1} parent=11 // pred_region
          %1380 = vsyncadd [#allocation15], 0
          %s1382 = sshll.u32 %s85, 4
          %s1383 = int_to_ptr.hbm [resolvable:$true] %s1382
          %s1384 = sshll.u32 [#allocation14], 4
          %s1385 = int_to_ptr.vmem [resolvable:$true] %s1384
          %1387 = dma.hbm_to_vmem [thread:$0]  %s1383, 16, %s1385, [#allocation15]
        $region180: #{mvit_forward.1} parent=11 // pred_fallthru
          _
        // Predicated region
        $region181: #{mvit_forward.1} parent=11 // pred_check
          %p1388 = pneg %p1044
        $region182: #{mvit_forward.1} parent=11 // pred_check_branch
          %1390 = sbr.rel (%p1388) target = $region184
        $region183: #{mvit_forward.1} parent=11 // pred_region
          _
        $region184: #{mvit_forward.1} parent=11 // pred_fallthru
          _
        // Predicated region
        $region185: #{mvit_forward.1} parent=11 // pred_check
          %p1391 = pneg %p1065
        $region186: #{mvit_forward.1} parent=11 // pred_check_branch
          %1393 = sbr.rel (%p1391) target = $region188
        $region187: #{mvit_forward.1} parent=11 // pred_region
          %1395 = vsyncadd [#allocation15], 0
          %s1397 = sshll.u32 %s89, 4
          %s1398 = int_to_ptr.hbm [resolvable:$true] %s1397
          %s1399 = sshll.u32 [#allocation16], 4
          %s1400 = int_to_ptr.vmem [resolvable:$true] %s1399
          %1402 = dma.hbm_to_vmem [thread:$0]  %s1398, 16, %s1400, [#allocation15]
        $region188: #{mvit_forward.1} parent=11 // pred_fallthru
          _
        // Predicated region
        $region189: #{mvit_forward.1} parent=11 // pred_check
          %p1403 = pneg %p1086
        $region190: #{mvit_forward.1} parent=11 // pred_check_branch
          %1405 = sbr.rel (%p1403) target = $region192
        $region191: #{mvit_forward.1} parent=11 // pred_region
          _
        $region192: #{mvit_forward.1} parent=11 // pred_fallthru
          _
        // Predicated region
        $region193: #{mvit_forward.1} parent=11 // pred_check
          %p1406 = pneg %p1107
        $region194: #{mvit_forward.1} parent=11 // pred_check_branch
          %1408 = sbr.rel (%p1406) target = $region196
        $region195: #{mvit_forward.1} parent=11 // pred_region
          %1410 = vsyncadd [#allocation18], 0
          %s1412 = sshll.u32 %s93, 4
          %s1413 = int_to_ptr.hbm [resolvable:$true] %s1412
          %s1414 = sshll.u32 [#allocation17], 4
          %s1415 = int_to_ptr.vmem [resolvable:$true] %s1414
          %1417 = dma.hbm_to_vmem [thread:$0]  %s1413, 16, %s1415, [#allocation18]
        $region196: #{mvit_forward.1} parent=11 // pred_fallthru
          _
        // Predicated region
        $region197: #{mvit_forward.1} parent=11 // pred_check
          %p1418 = pneg %p1128
        $region198: #{mvit_forward.1} parent=11 // pred_check_branch
          %1420 = sbr.rel (%p1418) target = $region200
        $region199: #{mvit_forward.1} parent=11 // pred_region
          %1422 = vsyncadd [#allocation18], 0
          %s1424 = sshll.u32 %s95, 4
          %s1425 = int_to_ptr.hbm [resolvable:$true] %s1424
          %s1426 = sshll.u32 [#allocation19], 4
          %s1427 = int_to_ptr.vmem [resolvable:$true] %s1426
          %1429 = dma.hbm_to_vmem [thread:$0]  %s1425, 16, %s1427, [#allocation18]
        $region200: #{mvit_forward.1} parent=11 // pred_fallthru
          _
        // Predicated region
        $region201: #{mvit_forward.1} parent=11 // pred_check
          %p1430 = pneg %p1149
        $region202: #{mvit_forward.1} parent=11 // pred_check_branch
          %1432 = sbr.rel (%p1430) target = $region204
        $region203: #{mvit_forward.1} parent=11 // pred_region
          %1434 = vsyncadd [#allocation21], 0
          %s1436 = sshll.u32 %s97, 4
          %s1437 = int_to_ptr.hbm [resolvable:$true] %s1436
          %s1438 = sshll.u32 [#allocation20], 4
          %s1439 = int_to_ptr.vmem [resolvable:$true] %s1438
          %1441 = dma.hbm_to_vmem [thread:$0]  %s1437, 16, %s1439, [#allocation21]
        $region204: #{mvit_forward.1} parent=11 // pred_fallthru
          _
      $region12: #{mvit_forward.1} parent=5 // pred_fallthru
        _
      %p1442 = scmp.lt.s32.totalorder %s115, 2
      // Predicated region
      $region205: #{mvit_forward.1} parent=5 // pred_check
        %p1443 = pneg %p1442
      $region206: #{mvit_forward.1} parent=5 // pred_check_branch
        %1445 = sbr.rel (%p1443) target = $region208
      $region207: #{mvit_forward.1} parent=5 // pred_region
        // Predicated region
        $region209: #{mvit_forward.1} parent=207 // pred_check
          %p1446 = pneg %p135
        $region210: #{mvit_forward.1} parent=207 // pred_check_branch
          %1448 = sbr.rel (%p1446) target = $region212
        $region211: #{mvit_forward.1} parent=207 // pred_region
          %p1449 = scmp.lt.s32.totalorder %s115, 1
          %s1450 = scalar_select %p1449, %s115, 1
          %s1451 = smul.addr %s1450, 20
          %s1452 = smul.addr %s1451, 4
          %s1453 = scalar_lea.vmem %s1, %s1452
        $region212: #{mvit_forward.1} parent=207 // pred_fallthru
          _
      $region208: #{mvit_forward.1} parent=5 // pred_fallthru
        _
      %p1454 = scmp.le.s32.totalorder 1, %s115
      %p1455 = scmp.lt.s32.totalorder %s115, 3
      %p1456 = pnand %p1454, %p1455
      %p1457 = pneg %p1456
      // Predicated region
      $region213: #{mvit_forward.1} parent=5 // pred_check
        _
      $region214: #{mvit_forward.1} parent=5 // pred_check_branch
        %1459 = sbr.rel (%p1456) target = $region216
      $region215: #{mvit_forward.1} parent=5 // pred_region
        %s1460 = ssub.s32 %s115, 1
        // Predicated region
        $region217: #{mvit_forward.1} parent=215 // pred_check
          %p1461 = pneg %p813
        $region218: #{mvit_forward.1} parent=215 // pred_check_branch
          %1463 = sbr.rel (%p1461) target = $region220
        $region219: #{mvit_forward.1} parent=215 // pred_region
          %1465 = dma.done [#allocation3], 16
        $region220: #{mvit_forward.1} parent=215 // pred_fallthru
          _
        // Predicated region
        $region221: #{mvit_forward.1} parent=215 // pred_check
          %p1466 = pneg %p834
        $region222: #{mvit_forward.1} parent=215 // pred_check_branch
          %1468 = sbr.rel (%p1466) target = $region224
        $region223: #{mvit_forward.1} parent=215 // pred_region
          %1470 = dma.done [#allocation6], 16
        $region224: #{mvit_forward.1} parent=215 // pred_fallthru
          _
        // Predicated region
        $region225: #{mvit_forward.1} parent=215 // pred_check
          %p1471 = pneg %p876
        $region226: #{mvit_forward.1} parent=215 // pred_check_branch
          %1473 = sbr.rel (%p1471) target = $region228
        $region227: #{mvit_forward.1} parent=215 // pred_region
          %1475 = dma.done [#allocation6], 16
        $region228: #{mvit_forward.1} parent=215 // pred_fallthru
          _
        // Predicated region
        $region229: #{mvit_forward.1} parent=215 // pred_check
          %p1476 = pneg %p897
        $region230: #{mvit_forward.1} parent=215 // pred_check_branch
          %1478 = sbr.rel (%p1476) target = $region232
        $region231: #{mvit_forward.1} parent=215 // pred_region
          %1480 = dma.done [#allocation9], 16
        $region232: #{mvit_forward.1} parent=215 // pred_fallthru
          _
        // Predicated region
        $region233: #{mvit_forward.1} parent=215 // pred_check
          %p1481 = pneg %p939
        $region234: #{mvit_forward.1} parent=215 // pred_check_branch
          %1483 = sbr.rel (%p1481) target = $region236
        $region235: #{mvit_forward.1} parent=215 // pred_region
          %1485 = dma.done [#allocation9], 16
        $region236: #{mvit_forward.1} parent=215 // pred_fallthru
          _
        // Predicated region
        $region237: #{mvit_forward.1} parent=215 // pred_check
          %p1486 = pneg %p960
        $region238: #{mvit_forward.1} parent=215 // pred_check_branch
          %1488 = sbr.rel (%p1486) target = $region240
        $region239: #{mvit_forward.1} parent=215 // pred_region
          %1490 = dma.done [#allocation12], 16
        $region240: #{mvit_forward.1} parent=215 // pred_fallthru
          _
        // Predicated region
        $region241: #{mvit_forward.1} parent=215 // pred_check
          %p1491 = pneg %p981
        $region242: #{mvit_forward.1} parent=215 // pred_check_branch
          %1493 = sbr.rel (%p1491) target = $region244
        $region243: #{mvit_forward.1} parent=215 // pred_region
          %1495 = dma.done [#allocation12], 16
        $region244: #{mvit_forward.1} parent=215 // pred_fallthru
          _
        // Predicated region
        $region245: #{mvit_forward.1} parent=215 // pred_check
          %p1496 = pneg %p1023
        $region246: #{mvit_forward.1} parent=215 // pred_check_branch
          %1498 = sbr.rel (%p1496) target = $region248
        $region247: #{mvit_forward.1} parent=215 // pred_region
          %1500 = dma.done [#allocation15], 16
        $region248: #{mvit_forward.1} parent=215 // pred_fallthru
          _
        // Predicated region
        $region249: #{mvit_forward.1} parent=215 // pred_check
          %p1501 = pneg %p1065
        $region250: #{mvit_forward.1} parent=215 // pred_check_branch
          %1503 = sbr.rel (%p1501) target = $region252
        $region251: #{mvit_forward.1} parent=215 // pred_region
          %1505 = dma.done [#allocation15], 16
        $region252: #{mvit_forward.1} parent=215 // pred_fallthru
          _
        // Predicated region
        $region253: #{mvit_forward.1} parent=215 // pred_check
          %p1506 = pneg %p1107
        $region254: #{mvit_forward.1} parent=215 // pred_check_branch
          %1508 = sbr.rel (%p1506) target = $region256
        $region255: #{mvit_forward.1} parent=215 // pred_region
          %1510 = dma.done [#allocation18], 16
        $region256: #{mvit_forward.1} parent=215 // pred_fallthru
          _
        // Predicated region
        $region257: #{mvit_forward.1} parent=215 // pred_check
          %p1511 = pneg %p1128
        $region258: #{mvit_forward.1} parent=215 // pred_check_branch
          %1513 = sbr.rel (%p1511) target = $region260
        $region259: #{mvit_forward.1} parent=215 // pred_region
          %1515 = dma.done [#allocation18], 16
        $region260: #{mvit_forward.1} parent=215 // pred_fallthru
          _
        // Predicated region
        $region261: #{mvit_forward.1} parent=215 // pred_check
          %p1516 = pneg %p1149
        $region262: #{mvit_forward.1} parent=215 // pred_check_branch
          %1518 = sbr.rel (%p1516) target = $region264
        $region263: #{mvit_forward.1} parent=215 // pred_region
          %1520 = dma.done [#allocation21], 16
        $region264: #{mvit_forward.1} parent=215 // pred_fallthru
          _
        %p1521 = scmp.lt.s32.totalorder %s120, 1
        %s1522 = scalar_select %p1521, %s120, 1
        %s1523 = smul.addr %s1522, 20
        %s1524 = smul.addr %s1523, 4
        %s1525 = scalar_lea.vmem %s1, %s1524
        %p1526 = pneg %p141
        %p1527 = pneg %p138
        %p1528 = pneg %p162
        %p1529 = pneg %p159
        %p1530 = pneg %p183
        %p1531 = pneg %p180
        %p1532 = pneg %p204
        %p1533 = pneg %p201
        %p1534 = pneg %p225
        %p1535 = pneg %p222
        %p1536 = pneg %p246
        %p1537 = pneg %p243
        %p1538 = pneg %p267
        %p1539 = pneg %p264
        %p1540 = pneg %p288
        %p1541 = pneg %p285
        %p1542 = pneg %p309
        %p1543 = pneg %p306
        %p1544 = pneg %p330
        %p1545 = pneg %p327
        %p1546 = pneg %p351
        %p1547 = pneg %p348
        %p1548 = pneg %p372
        %p1549 = pneg %p369
        %p1550 = pneg %p393
        %p1551 = pneg %p390
        %p1552 = pneg %p414
        %p1553 = pneg %p411
        %p1554 = pneg %p435
        %p1555 = pneg %p432
        %p1556 = pneg %p456
        %p1557 = pneg %p453
        %p1558 = pneg %p477
        %p1559 = pneg %p474
        %p1560 = pneg %p498
        %p1561 = pneg %p495
        %p1562 = pneg %p519
        %p1563 = pneg %p516
        %p1564 = pneg %p540
        %p1565 = pneg %p537
        %p1566 = pneg %p561
        %p1567 = pneg %p558
        %p1568 = pneg %p582
        %p1569 = pneg %p579
        %p1570 = pneg %p603
        %p1571 = pneg %p600
        %p1572 = pneg %p624
        %p1573 = pneg %p621
        %p1574 = pneg %p645
        %p1575 = pneg %p642
        %p1576 = pneg %p666
        %p1577 = pneg %p663
        %p1578 = pneg %p687
        %p1579 = pneg %p684
        %p1580 = pneg %p708
        %p1581 = pneg %p705
        %p1582 = pneg %p729
        %p1583 = pneg %p726
        %p1584 = pneg %p750
        %p1585 = pneg %p747
        %p1586 = pneg %p771
        %p1587 = pneg %p768
        %p1588 = pneg %p792
        %p1589 = pneg %p789
        %p1590 = pneg %p813
        %p1591 = pneg %p810
        %p1592 = pneg %p834
        %p1593 = pneg %p831
        %p1594 = pneg %p855
        %p1595 = pneg %p852
        %p1596 = pneg %p876
        %p1597 = pneg %p873
        %p1598 = pneg %p897
        %p1599 = pneg %p894
        %p1600 = pneg %p918
        %p1601 = pneg %p915
        %p1602 = pneg %p939
        %p1603 = pneg %p936
        %p1604 = pneg %p960
        %p1605 = pneg %p957
        %p1606 = pneg %p981
        %p1607 = pneg %p978
        %p1608 = pneg %p1002
        %p1609 = pneg %p999
        %p1610 = pneg %p1023
        %p1611 = pneg %p1020
        %p1612 = pneg %p1044
        %p1613 = pneg %p1041
        %p1614 = pneg %p1065
        %p1615 = pneg %p1062
        %p1616 = pneg %p1086
        %p1617 = pneg %p1083
        %p1618 = pneg %p1107
        %p1619 = pneg %p1104
        %p1620 = pneg %p1128
        %p1621 = pneg %p1125
        %p1622 = pneg %p1149
        %p1623 = pneg %p1146
        %p1624 = pneg %p1175
        %p1625 = pneg %p1172
        %s1626 = sand.u32 %s1162, 1
        %s1627 = scalar_lea.sflag [#allocation4], %s1626
        %s1628 = sand.u32 %s1162, 1
        %s1629 = scalar_lea.vmem [#allocation22], %s1628
        %p1630 = scmp.lt.s32.totalorder %s120, 1
        %s1631 = scalar_select %p1630, %s120, 1
        %s1632 = smul.addr %s1631, 20
        %s1633 = smul.addr %s1632, 4
        %s1634 = scalar_lea.vmem %s1, %s1633
        %v1636 = vld [vmem:[%s1634] sm:$0xff]
        %v1637 = vld [vmem:[%s1634 + $0x8] sm:$0xff]
        %v1638 = vld [vmem:[%s1634 + $0x10] sm:$0xff]
        %v1639 = vld [vmem:[%s1634 + $0x18] sm:$0xff]
        %v1640 = vld [vmem:[%s1634 + $0x20] sm:$0xff]
        %v1641 = vld [vmem:[%s1634 + $0x28] sm:$0xff]
        %v1642 = vld [vmem:[%s1634 + $0x30] sm:$0xff]
        %v1643 = vld [vmem:[%s1634 + $0x38] sm:$0xff]
        %v1644 = vld [vmem:[%s1634 + $0x40] sm:$0x11]
        %v1645 = vld [vmem:[%s1634 + $0x48] sm:$0x11]
        %v1646 = vld [vmem:[%s3] sm:$0xf]
        %v1647 = vld [vmem:[%s3 + $0x4] sm:$0xf]
        %v1648 = vld [vmem:[%s3 + $0x8] sm:$0xf]
        %v1649 = vld [vmem:[%s3 + $0xc] sm:$0xf]
        %v1650 = vld [vmem:[%s3 + $0x10] sm:$0xf]
        %v1651 = vld [vmem:[%s3 + $0x14] sm:$0xf]
        %v1652 = vld [vmem:[%s3 + $0x18] sm:$0xf]
        %v1653 = vld [vmem:[%s3 + $0x1c] sm:$0xf]
        %v1654 = vld [vmem:[%s3 + $0x20] sm:$0xf]
        %v1655 = vld [vmem:[%s3 + $0x24] sm:$0xf]
        %v1656 = vld [vmem:[%s3 + $0x28] sm:$0xf]
        %v1657 = vld [vmem:[%s3 + $0x2c] sm:$0xf]
        %v1658 = vld [vmem:[%s3 + $0x30] sm:$0xf]
        %v1659 = vld [vmem:[%s3 + $0x34] sm:$0xf]
        %v1660 = vld [vmem:[%s3 + $0x38] sm:$0xf]
        %v1661 = vld [vmem:[%s3 + $0x3c] sm:$0xf]
        %v1662 = vld [vmem:[%s3 + $0x40] sm:$0xf]
        %v1663 = vld [vmem:[%s3 + $0x44] sm:$0xf]
        %v1664 = vld [vmem:[%s3 + $0x48] sm:$0xf]
        %v1665 = vld [vmem:[%s3 + $0x4c] sm:$0xf]
        %v1666 = vld [vmem:[%s3 + $0x50] sm:$0xf]
        %v1667 = vld [vmem:[%s3 + $0x54] sm:$0xf]
        %v1668 = vld [vmem:[%s3 + $0x58] sm:$0xf]
        %v1669 = vld [vmem:[%s3 + $0x5c] sm:$0xf]
        %v1670 = vld [vmem:[%s3 + $0x60] sm:$0xf]
        %v1671 = vld [vmem:[%s3 + $0x64] sm:$0xf]
        %v1672 = vld [vmem:[%s3 + $0x68] sm:$0xf]
        %v1673 = vld [vmem:[%s3 + $0x6c] sm:$0xf]
        %v1674 = vld [vmem:[%s3 + $0x70] sm:$0xf]
        %v1675 = vld [vmem:[%s3 + $0x74] sm:$0xf]
        %v1676 = vld [vmem:[%s3 + $0x78] sm:$0xf]
        %v1677 = vld [vmem:[%s3 + $0x7c] sm:$0xf]
        %v1678 = vld [vmem:[%s3 + $0x80] sm:$0xf]
        %v1679 = vld [vmem:[%s3 + $0x84] sm:$0xf]
        %v1680 = vld [vmem:[%s3 + $0x88] sm:$0xf]
        %v1681 = vld [vmem:[%s3 + $0x8c] sm:$0xf]
        %v1682 = vld [vmem:[%s3 + $0x90] sm:$0xf]
        %v1683 = vld [vmem:[%s3 + $0x94] sm:$0xf]
        %v1684 = vld [vmem:[%s3 + $0x98] sm:$0xf]
        %v1685 = vld [vmem:[%s3 + $0x9c] sm:$0xf]
        %v1686 = vld [vmem:[%s3 + $0xa0] sm:$0xf]
        %v1687 = vld [vmem:[%s3 + $0xa4] sm:$0xf]
        %v1688 = vld [vmem:[%s3 + $0xa8] sm:$0xf]
        %v1689 = vld [vmem:[%s3 + $0xac] sm:$0xf]
        %v1690 = vld [vmem:[%s3 + $0xb0] sm:$0xf]
        %v1691 = vld [vmem:[%s3 + $0xb4] sm:$0xf]
        %v1692 = vld [vmem:[%s3 + $0xb8] sm:$0xf]
        %v1693 = vld [vmem:[%s3 + $0xbc] sm:$0xf]
        %v1694 = vld [vmem:[%s3 + $0xc0] sm:$0xf]
        %v1695 = vld [vmem:[%s3 + $0xc4] sm:$0xf]
        %v1696 = vld [vmem:[%s3 + $0xc8] sm:$0xf]
        %v1697 = vld [vmem:[%s3 + $0xcc] sm:$0xf]
        %v1698 = vld [vmem:[%s3 + $0xd0] sm:$0xf]
        %v1699 = vld [vmem:[%s3 + $0xd4] sm:$0xf]
        %v1700 = vld [vmem:[%s3 + $0xd8] sm:$0xf]
        %v1701 = vld [vmem:[%s3 + $0xdc] sm:$0xf]
        %v1702 = vld [vmem:[%s3 + $0xe0] sm:$0xf]
        %v1703 = vld [vmem:[%s3 + $0xe4] sm:$0xf]
        %v1704 = vld [vmem:[%s3 + $0xe8] sm:$0xf]
        %v1705 = vld [vmem:[%s3 + $0xec] sm:$0xf]
        %v1706 = vld [vmem:[%s3 + $0xf0] sm:$0xf]
        %v1707 = vld [vmem:[%s3 + $0xf4] sm:$0xf]
        %v1708 = vld [vmem:[%s3 + $0xf8] sm:$0xf]
        %v1709 = vld [vmem:[%s3 + $0xfc] sm:$0xf]
        %v1710 = vld [vmem:[%s5] sm:$0xff]
        %v1711 = vld [vmem:[%s5 + $0x8] sm:$0xff]
        %v1712 = vld [vmem:[%s5 + $0x10] sm:$0xff]
        %v1713 = vld [vmem:[%s5 + $0x18] sm:$0xff]
        %v1714 = vld [vmem:[%s5 + $0x20] sm:$0x1]
        %v1725 = vunpack.c.l.b16 %v1636
        %v1726 = vunpack.c.h.b16 %v1636
        %v1727 = vunpack.c.l.b16 %v1637
        %v1728 = vunpack.c.h.b16 %v1637
        %v1729 = vunpack.c.l.b16 %v1638
        %v1730 = vunpack.c.h.b16 %v1638
        %v1731 = vunpack.c.l.b16 %v1639
        %v1732 = vunpack.c.h.b16 %v1639
        %v1733 = vunpack.c.l.b16 %v1640
        %v1734 = vunpack.c.h.b16 %v1640
        %v1735 = vunpack.c.l.b16 %v1641
        %v1736 = vunpack.c.h.b16 %v1641
        %v1737 = vunpack.c.l.b16 %v1642
        %v1738 = vunpack.c.h.b16 %v1642
        %v1739 = vunpack.c.l.b16 %v1643
        %v1740 = vunpack.c.h.b16 %v1643
        %v1741 = vunpack.c.l.b16 %v1644
        %v1742 = vunpack.c.h.b16 %v1644
        %v1743 = vunpack.c.l.b16 %v1645
        %v1744 = vunpack.c.h.b16 %v1645
        %v1745 = vpack.c.b16 %v1729, %v1725
        %v1746 = vpack.c.b16 %v1730, %v1726
        %v1747 = vpack.c.b16 %v1731, %v1727
        %v1748 = vpack.c.b16 %v1732, %v1728
        %v1749 = vpack.c.b16 %v1737, %v1733
        %v1750 = vpack.c.b16 %v1738, %v1734
        %v1751 = vpack.c.b16 %v1739, %v1735
        %v1752 = vpack.c.b16 %v1740, %v1736
        %v1753 = vpack.c.b16 %v1741, %v1741
        %v1754 = vpack.c.b16 %v1742, %v1742
        %v1755 = vpack.c.b16 %v1743, %v1743
        %v1756 = vpack.c.b16 %v1744, %v1744
        %v1833 = vunpack.c.l.b16 %v1646
        %v1834 = vunpack.c.l.b16 %v1647
        %v1835 = vunpack.c.l.b16 %v1648
        %v1836 = vunpack.c.l.b16 %v1649
        %v1837 = vunpack.c.l.b16 %v1650
        %v1838 = vunpack.c.l.b16 %v1651
        %v1839 = vunpack.c.l.b16 %v1652
        %v1840 = vunpack.c.l.b16 %v1653
        %v1841 = vunpack.c.l.b16 %v1654
        %v1842 = vunpack.c.l.b16 %v1655
        %v1843 = vunpack.c.l.b16 %v1656
        %v1844 = vunpack.c.l.b16 %v1657
        %v1845 = vunpack.c.l.b16 %v1658
        %v1846 = vunpack.c.l.b16 %v1659
        %v1847 = vunpack.c.l.b16 %v1660
        %v1848 = vunpack.c.l.b16 %v1661
        %v1849 = vunpack.c.l.b16 %v1662
        %v1850 = vunpack.c.l.b16 %v1663
        %v1851 = vunpack.c.l.b16 %v1664
        %v1852 = vunpack.c.l.b16 %v1665
        %v1853 = vunpack.c.l.b16 %v1666
        %v1854 = vunpack.c.l.b16 %v1667
        %v1855 = vunpack.c.l.b16 %v1668
        %v1856 = vunpack.c.l.b16 %v1669
        %v1857 = vunpack.c.l.b16 %v1670
        %v1858 = vunpack.c.l.b16 %v1671
        %v1859 = vunpack.c.l.b16 %v1672
        %v1860 = vunpack.c.l.b16 %v1673
        %v1861 = vunpack.c.l.b16 %v1674
        %v1862 = vunpack.c.l.b16 %v1675
        %v1863 = vunpack.c.l.b16 %v1676
        %v1864 = vunpack.c.l.b16 %v1677
        %v1865 = vunpack.c.l.b16 %v1678
        %v1866 = vunpack.c.l.b16 %v1679
        %v1867 = vunpack.c.l.b16 %v1680
        %v1868 = vunpack.c.l.b16 %v1681
        %v1869 = vunpack.c.l.b16 %v1682
        %v1870 = vunpack.c.l.b16 %v1683
        %v1871 = vunpack.c.l.b16 %v1684
        %v1872 = vunpack.c.l.b16 %v1685
        %v1873 = vunpack.c.l.b16 %v1686
        %v1874 = vunpack.c.l.b16 %v1687
        %v1875 = vunpack.c.l.b16 %v1688
        %v1876 = vunpack.c.l.b16 %v1689
        %v1877 = vunpack.c.l.b16 %v1690
        %v1878 = vunpack.c.l.b16 %v1691
        %v1879 = vunpack.c.l.b16 %v1692
        %v1880 = vunpack.c.l.b16 %v1693
        %v1881 = vunpack.c.l.b16 %v1694
        %v1882 = vunpack.c.l.b16 %v1695
        %v1883 = vunpack.c.l.b16 %v1696
        %v1884 = vunpack.c.l.b16 %v1697
        %v1885 = vunpack.c.l.b16 %v1698
        %v1886 = vunpack.c.l.b16 %v1699
        %v1887 = vunpack.c.l.b16 %v1700
        %v1888 = vunpack.c.l.b16 %v1701
        %v1889 = vunpack.c.l.b16 %v1702
        %v1890 = vunpack.c.l.b16 %v1703
        %v1891 = vunpack.c.l.b16 %v1704
        %v1892 = vunpack.c.l.b16 %v1705
        %v1893 = vunpack.c.l.b16 %v1706
        %v1894 = vunpack.c.l.b16 %v1707
        %v1895 = vunpack.c.l.b16 %v1708
        %v1896 = vunpack.c.l.b16 %v1709
        %v1897 = vpack.c.b16 %v1834, %v1833
        %v1898 = vpack.c.b16 %v1836, %v1835
        %v1899 = vpack.c.b16 %v1838, %v1837
        %v1900 = vpack.c.b16 %v1840, %v1839
        %v1901 = vpack.c.b16 %v1842, %v1841
        %v1902 = vpack.c.b16 %v1844, %v1843
        %v1903 = vpack.c.b16 %v1846, %v1845
        %v1904 = vpack.c.b16 %v1848, %v1847
        %v1905 = vpack.c.b16 %v1850, %v1849
        %v1906 = vpack.c.b16 %v1852, %v1851
        %v1907 = vpack.c.b16 %v1854, %v1853
        %v1908 = vpack.c.b16 %v1856, %v1855
        %v1909 = vpack.c.b16 %v1858, %v1857
        %v1910 = vpack.c.b16 %v1860, %v1859
        %v1911 = vpack.c.b16 %v1862, %v1861
        %v1912 = vpack.c.b16 %v1864, %v1863
        %v1913 = vpack.c.b16 %v1866, %v1865
        %v1914 = vpack.c.b16 %v1868, %v1867
        %v1915 = vpack.c.b16 %v1870, %v1869
        %v1916 = vpack.c.b16 %v1872, %v1871
        %v1917 = vpack.c.b16 %v1874, %v1873
        %v1918 = vpack.c.b16 %v1876, %v1875
        %v1919 = vpack.c.b16 %v1878, %v1877
        %v1920 = vpack.c.b16 %v1880, %v1879
        %v1921 = vpack.c.b16 %v1882, %v1881
        %v1922 = vpack.c.b16 %v1884, %v1883
        %v1923 = vpack.c.b16 %v1886, %v1885
        %v1924 = vpack.c.b16 %v1888, %v1887
        %v1925 = vpack.c.b16 %v1890, %v1889
        %v1926 = vpack.c.b16 %v1892, %v1891
        %v1927 = vpack.c.b16 %v1894, %v1893
        %v1928 = vpack.c.b16 %v1896, %v1895
        %1961 = vmatpush.bf16.msra.mxu0 %v1904
        %1962 = vmatpush.bf16.msra.mxu0 %v1903
        %1963 = vmatpush.bf16.msra.mxu0 %v1902
        %1964 = vmatpush.bf16.msra.mxu0 %v1901
        %1965 = vmatpush.bf16.msra.mxu0 %v1900
        %1966 = vmatpush.bf16.msra.mxu0 %v1899
        %1967 = vmatpush.bf16.msra.mxu0 %v1898
        %1968 = vmatpush.bf16.msra.mxu0 %v1897
        %1969 = vmatmul.bf16.gmra.mxu0 %v1745
        %v1970 = vpop.f32.mrf.mxu0
        %v1971 = vadd.f32 %v1710, %v1970
        %v1972 = vpop.f32.mrf.mxu0
        %v1973 = vadd.f32 %v1711, %v1972
        %1974 = vmatmul.bf16.gmra.mxu0 %v1749
        %v1975 = vpop.f32.mrf.mxu0
        %v1976 = vadd.f32 %v1712, %v1975
        %v1977 = vpop.f32.mrf.mxu0
        %v1978 = vadd.f32 %v1713, %v1977
        %1979 = vmatmul.bf16.gmra.mxu0 %v1753
        %v1980 = vpop.f32.mrf.mxu0
        %v1981 = vadd.f32 %v1714, %v1980
        %v1982 = vpop.f32.mrf.mxu0
        %1983 = vdwg.mxu0
        %1984 = vmatpush.bf16.msra.mxu0 %v1912
        %1985 = vmatpush.bf16.msra.mxu0 %v1911
        %1986 = vmatpush.bf16.msra.mxu0 %v1910
        %1987 = vmatpush.bf16.msra.mxu0 %v1909
        %1988 = vmatpush.bf16.msra.mxu0 %v1908
        %1989 = vmatpush.bf16.msra.mxu0 %v1907
        %1990 = vmatpush.bf16.msra.mxu0 %v1906
        %1991 = vmatpush.bf16.msra.mxu0 %v1905
        %1992 = vmatmul.bf16.gmra.mxu0 %v1746
        %v1993 = vpop.f32.mrf.mxu0
        %v1994 = vadd.f32 %v1971, %v1993
        %v1995 = vpop.f32.mrf.mxu0
        %v1996 = vadd.f32 %v1973, %v1995
        %1997 = vmatmul.bf16.gmra.mxu0 %v1750
        %v1998 = vpop.f32.mrf.mxu0
        %v1999 = vadd.f32 %v1976, %v1998
        %v2000 = vpop.f32.mrf.mxu0
        %v2001 = vadd.f32 %v1978, %v2000
        %2002 = vmatmul.bf16.gmra.mxu0 %v1754
        %v2003 = vpop.f32.mrf.mxu0
        %v2004 = vadd.f32 %v1981, %v2003
        %v2005 = vpop.f32.mrf.mxu0
        %2006 = vdwg.mxu0
        %2007 = vmatpush.bf16.msra.mxu0 %v1920
        %2008 = vmatpush.bf16.msra.mxu0 %v1919
        %2009 = vmatpush.bf16.msra.mxu0 %v1918
        %2010 = vmatpush.bf16.msra.mxu0 %v1917
        %2011 = vmatpush.bf16.msra.mxu0 %v1916
        %2012 = vmatpush.bf16.msra.mxu0 %v1915
        %2013 = vmatpush.bf16.msra.mxu0 %v1914
        %2014 = vmatpush.bf16.msra.mxu0 %v1913
        %2015 = vmatmul.bf16.gmra.mxu0 %v1747
        %v2016 = vpop.f32.mrf.mxu0
        %v2017 = vadd.f32 %v1994, %v2016
        %v2018 = vpop.f32.mrf.mxu0
        %v2019 = vadd.f32 %v1996, %v2018
        %2020 = vmatmul.bf16.gmra.mxu0 %v1751
        %v2021 = vpop.f32.mrf.mxu0
        %v2022 = vadd.f32 %v1999, %v2021
        %v2023 = vpop.f32.mrf.mxu0
        %v2024 = vadd.f32 %v2001, %v2023
        %2025 = vmatmul.bf16.gmra.mxu0 %v1755
        %v2026 = vpop.f32.mrf.mxu0
        %v2027 = vadd.f32 %v2004, %v2026
        %v2028 = vpop.f32.mrf.mxu0
        %2029 = vdwg.mxu0
        %2030 = vmatpush.bf16.msra.mxu0 %v1928
        %2031 = vmatpush.bf16.msra.mxu0 %v1927
        %2032 = vmatpush.bf16.msra.mxu0 %v1926
        %2033 = vmatpush.bf16.msra.mxu0 %v1925
        %2034 = vmatpush.bf16.msra.mxu0 %v1924
        %2035 = vmatpush.bf16.msra.mxu0 %v1923
        %2036 = vmatpush.bf16.msra.mxu0 %v1922
        %2037 = vmatpush.bf16.msra.mxu0 %v1921
        %2038 = vmatmul.bf16.gmra.mxu0 %v1748
        %v2039 = vpop.f32.mrf.mxu0
        %v2040 = vadd.f32 %v2017, %v2039
        %v2041 = vpop.f32.mrf.mxu0
        %v2042 = vadd.f32 %v2019, %v2041
        %2043 = vmatmul.bf16.gmra.mxu0 %v1752
        %v2044 = vpop.f32.mrf.mxu0
        %v2045 = vadd.f32 %v2022, %v2044
        %v2046 = vpop.f32.mrf.mxu0
        %v2047 = vadd.f32 %v2024, %v2046
        %2048 = vmatmul.bf16.gmra.mxu0 %v1756
        %v2049 = vpop.f32.mrf.mxu0
        %v2050 = vadd.f32 %v2027, %v2049
        %v2051 = vpop.f32.mrf.mxu0
        %2052 = vdwg.mxu0
        %v2053 = vld [vmem:[%s7] sm:$0x1]
        %v2054 = vld [vmem:[%s9] sm:$0x1]
        %vm2055 = vcmask 261120
        %v2056 = vsel %vm2055, %v2040, 0.0
        %2057 = vadd.xlane.f32.xlu0 %v2056
        %v2058 = vpop.xlane.xlu0 %2057
        %v2059 = vsel %vm2055, %v2042, 0.0
        %2060 = vadd.xlane.f32.xlu0 %v2059
        %v2061 = vpop.xlane.xlu0 %2060
        %v2062 = vsel %vm2055, %v2045, 0.0
        %2063 = vadd.xlane.f32.xlu0 %v2062
        %v2064 = vpop.xlane.xlu0 %2063
        %v2065 = vsel %vm2055, %v2047, 0.0
        %2066 = vadd.xlane.f32.xlu0 %v2065
        %v2067 = vpop.xlane.xlu0 %2066
        %vm2068 = vcmask 253952
        %v2069 = vsel %vm2068, %v2050, 0.0
        %2070 = vadd.xlane.f32.xlu0 %v2069
        %v2071 = vpop.xlane.xlu0 %2070
        %v2072 = vrcp.pop 32.0
        %v2073 = vmul.f32 32.0, %v2072
        %v2074 = vsub.f32 1.0, %v2073
        %v2075 = vmul.f32 %v2072, %v2074
        %v2076 = vadd.f32 %v2072, %v2075
        %vm2077 = vweird.f32 %v2072
        %v2078 = vsel %vm2077, %v2072, %v2076
        %v2079 = vmul.f32 %v2058, %v2078
        %v2080 = vmul.f32 %v2061, %v2078
        %v2081 = vmul.f32 %v2064, %v2078
        %v2082 = vmul.f32 %v2067, %v2078
        %v2083 = vmul.f32 %v2071, %v2078
        %v2084 = vsub.f32 %v2040, %v2079
        %v2085 = vsub.f32 %v2042, %v2080
        %v2086 = vsub.f32 %v2045, %v2081
        %v2087 = vsub.f32 %v2047, %v2082
        %v2088 = vsub.f32 %v2050, %v2083
        %v2089 = vmul.f32 %v2084, %v2084
        %v2090 = vmul.f32 %v2085, %v2085
        %v2091 = vmul.f32 %v2086, %v2086
        %v2092 = vmul.f32 %v2087, %v2087
        %v2093 = vmul.f32 %v2088, %v2088
        %v2094 = vsel %vm2055, %v2089, 0.0
        %2095 = vadd.xlane.f32.xlu0 %v2094
        %v2096 = vpop.xlane.xlu0 %2095
        %v2097 = vsel %vm2055, %v2090, 0.0
        %2098 = vadd.xlane.f32.xlu0 %v2097
        %v2099 = vpop.xlane.xlu0 %2098
        %v2100 = vsel %vm2055, %v2091, 0.0
        %2101 = vadd.xlane.f32.xlu0 %v2100
        %v2102 = vpop.xlane.xlu0 %2101
        %v2103 = vsel %vm2055, %v2092, 0.0
        %2104 = vadd.xlane.f32.xlu0 %v2103
        %v2105 = vpop.xlane.xlu0 %2104
        %v2106 = vsel %vm2068, %v2093, 0.0
        %2107 = vadd.xlane.f32.xlu0 %v2106
        %v2108 = vpop.xlane.xlu0 %2107
        %v2109 = vmul.f32 %v2096, %v2078
        %v2110 = vmul.f32 %v2099, %v2078
        %v2111 = vmul.f32 %v2102, %v2078
        %v2112 = vmul.f32 %v2105, %v2078
        %v2113 = vmul.f32 %v2108, %v2078
        %v2114 = vadd.f32 %v2109, 1e-06
        %v2115 = vadd.f32 %v2110, 1e-06
        %v2116 = vadd.f32 %v2111, 1e-06
        %v2117 = vadd.f32 %v2112, 1e-06
        %v2118 = vadd.f32 %v2113, 1e-06
        %v2119 = vrsqrt.pop %v2114
        %v2120 = vmul.f32 %v2119, %v2114
        %v2121 = vmul.f32 %v2120, %v2119
        %v2122 = vmul.f32 0.5, %v2121
        %v2123 = vsub.f32 1.5, %v2122
        %v2124 = vmul.f32 %v2119, %v2123
        %vm2125 = vweird.f32 %v2114
        %vm2126 = vweird.f32 %v2119
        %vm2127 = vmor %vm2125, %vm2126
        %v2128 = vsel %vm2127, %v2119, %v2124
        %v2129 = vrsqrt.pop %v2115
        %v2130 = vmul.f32 %v2129, %v2115
        %v2131 = vmul.f32 %v2130, %v2129
        %v2132 = vmul.f32 0.5, %v2131
        %v2133 = vsub.f32 1.5, %v2132
        %v2134 = vmul.f32 %v2129, %v2133
        %vm2135 = vweird.f32 %v2115
        %vm2136 = vweird.f32 %v2129
        %vm2137 = vmor %vm2135, %vm2136
        %v2138 = vsel %vm2137, %v2129, %v2134
        %v2139 = vrsqrt.pop %v2116
        %v2140 = vmul.f32 %v2139, %v2116
        %v2141 = vmul.f32 %v2140, %v2139
        %v2142 = vmul.f32 0.5, %v2141
        %v2143 = vsub.f32 1.5, %v2142
        %v2144 = vmul.f32 %v2139, %v2143
        %vm2145 = vweird.f32 %v2116
        %vm2146 = vweird.f32 %v2139
        %vm2147 = vmor %vm2145, %vm2146
        %v2148 = vsel %vm2147, %v2139, %v2144
        %v2149 = vrsqrt.pop %v2117
        %v2150 = vmul.f32 %v2149, %v2117
        %v2151 = vmul.f32 %v2150, %v2149
        %v2152 = vmul.f32 0.5, %v2151
        %v2153 = vsub.f32 1.5, %v2152
        %v2154 = vmul.f32 %v2149, %v2153
        %vm2155 = vweird.f32 %v2117
        %vm2156 = vweird.f32 %v2149
        %vm2157 = vmor %vm2155, %vm2156
        %v2158 = vsel %vm2157, %v2149, %v2154
        %v2159 = vrsqrt.pop %v2118
        %v2160 = vmul.f32 %v2159, %v2118
        %v2161 = vmul.f32 %v2160, %v2159
        %v2162 = vmul.f32 0.5, %v2161
        %v2163 = vsub.f32 1.5, %v2162
        %v2164 = vmul.f32 %v2159, %v2163
        %vm2165 = vweird.f32 %v2118
        %vm2166 = vweird.f32 %v2159
        %vm2167 = vmor %vm2165, %vm2166
        %v2168 = vsel %vm2167, %v2159, %v2164
        %v2169 = vmul.f32 %v2084, %v2128
        %v2170 = vmul.f32 %v2085, %v2138
        %v2171 = vmul.f32 %v2086, %v2148
        %v2172 = vmul.f32 %v2087, %v2158
        %v2173 = vmul.f32 %v2088, %v2168
        %v2175 = vperm.slane %v2053, 0
        %v2177 = vmul.f32 %v2169, %v2175
        %v2178 = vmul.f32 %v2170, %v2175
        %v2179 = vmul.f32 %v2171, %v2175
        %v2180 = vmul.f32 %v2172, %v2175
        %v2181 = vmul.f32 %v2173, %v2175
        %v2183 = vperm.slane %v2054, 0
        %v2185 = vadd.f32 %v2177, %v2183
        %v2186 = vadd.f32 %v2178, %v2183
        %v2187 = vadd.f32 %v2179, %v2183
        %v2188 = vadd.f32 %v2180, %v2183
        %v2189 = vadd.f32 %v2181, %v2183
        %v2190 = vld [vmem:[%s11] sm:$0xf]
        %v2191 = vld [vmem:[%s11 + $0x4] sm:$0xf]
        %v2192 = vld [vmem:[%s11 + $0x8] sm:$0xf]
        %v2193 = vld [vmem:[%s11 + $0xc] sm:$0xf]
        %v2194 = vpack.c.bf16 %v2186, %v2185
        %v2195 = vpack.c.bf16 %v2188, %v2187
        %v2196 = vpack.c.bf16 %v2189, %v2189
        %v2197 = vld [vmem:[%s13] sm:$0x1]
        %v2199 = vperm.slane %v2197, 0
        %v2205 = vunpack.c.l.b16 %v2190
        %v2206 = vunpack.c.l.b16 %v2191
        %v2207 = vunpack.c.l.b16 %v2192
        %v2208 = vunpack.c.l.b16 %v2193
        %v2209 = vpack.c.b16 %v2206, %v2205
        %v2210 = vpack.c.b16 %v2208, %v2207
        %v2214 = vsel %vm2055, %v2194, 0
        %v2217 = vsel %vm2055, %v2195, 0
        %v2220 = vsel %vm2055, %v2196, 0
        %2222 = vmatpush.bf16.msra.mxu0 0
        %2223 = vmatpush.bf16.msra.mxu0 0
        %2224 = vmatpush.bf16.msra.mxu0 0
        %2225 = vmatpush.bf16.msra.mxu0 0
        %2226 = vmatpush.bf16.msra.mxu0 0
        %2227 = vmatpush.bf16.msra.mxu0 0
        %2228 = vmatpush.bf16.msra.mxu0 %v2210
        %2229 = vmatpush.bf16.msra.mxu0 %v2209
        %2230 = vmatmul.bf16.gmra.mxu0 %v2214
        %v2231 = vpop.f32.mrf.mxu0
        %v2232 = vadd.f32 %v2199, %v2231
        %v2233 = vpop.f32.mrf.mxu0
        %v2234 = vadd.f32 %v2199, %v2233
        %2235 = vmatmul.bf16.gmra.mxu0 %v2217
        %v2236 = vpop.f32.mrf.mxu0
        %v2237 = vadd.f32 %v2199, %v2236
        %v2238 = vpop.f32.mrf.mxu0
        %v2239 = vadd.f32 %v2199, %v2238
        %2240 = vmatmul.bf16.gmra.mxu0 %v2220
        %v2241 = vpop.f32.mrf.mxu0
        %v2242 = vadd.f32 %v2199, %v2241
        %v2243 = vpop.f32.mrf.mxu0
        %2244 = vdwg.mxu0
        %v2245 = vld [vmem:[%s15] sm:$0xff]
        %v2246 = vld [vmem:[%s15 + $0x8] sm:$0xff]
        %v2247 = vld [vmem:[%s15 + $0x10] sm:$0xff]
        %v2248 = vld [vmem:[%s15 + $0x18] sm:$0xff]
        %v2249 = vld [vmem:[%s15 + $0x20] sm:$0xf]
        %v2250 = vpack.c.bf16 %v2246, %v2245
        %v2251 = vpack.c.bf16 %v2248, %v2247
        %v2252 = vpack.c.bf16 %v2249, %v2249
        %v2253 = vld [vmem:[%s17] sm:$0xff]
        %v2254 = vld [vmem:[%s17 + $0x8] sm:$0x1]
        %v2255 = vld [vmem:[%s17 + $0x10] sm:$0xff]
        %v2256 = vld [vmem:[%s17 + $0x18] sm:$0x1]
        %v2257 = vld [vmem:[%s17 + $0x20] sm:$0xff]
        %v2258 = vld [vmem:[%s17 + $0x28] sm:$0x1]
        %v2259 = vld [vmem:[%s17 + $0x30] sm:$0xff]
        %v2260 = vld [vmem:[%s17 + $0x38] sm:$0x1]
        %v2261 = vpack.c.bf16 %v2234, %v2232
        %v2262 = vpack.c.bf16 %v2239, %v2237
        %v2263 = vpack.c.bf16 %v2242, %v2242
        %2267 = vrot.lane.b32.xlu0 %v2261, 96
        %v2268 = vpop.permute.xlu0 %2267
        %2269 = vrot.lane.b32.xlu0 %v2262, 96
        %v2270 = vpop.permute.xlu0 %2269
        %2271 = vrot.lane.b32.xlu0 %v2263, 96
        %v2272 = vpop.permute.xlu0 %2271
        %vm2275 = vcmask 269312
        %v2277 = vsel %vm2275, %v2250, 0
        %v2280 = vsel %vm2275, %v2251, 0
        %v2283 = vsel %vm2275, %v2252, 0
        %vm2285 = vcmask 1040384
        %v2286 = vsel 0, 4294967295, 65535
        %v2287 = vsel %vm2285, %v2286, 0
        %v2289 = vand.u32 %v2272, %v2287
        %2291 = vmatpush.bf16.msra.mxu0 0
        %2292 = vmatpush.bf16.msra.mxu0 0
        %2293 = vmatpush.bf16.msra.mxu0 0
        %2294 = vmatpush.bf16.msra.mxu0 0
        %2295 = vmatpush.bf16.msra.mxu0 0
        %2296 = vmatpush.bf16.msra.mxu0 %v2289
        %2297 = vmatpush.bf16.msra.mxu0 %v2270
        %2298 = vmatpush.bf16.msra.mxu0 %v2268
        %2299 = vmatmul.bf16.gmra.mxu0 %v2277
        %v2300 = vpop.f32.mrf.mxu0
        %v2301 = vadd.f32 0.0, %v2300
        %v2302 = vpop.f32.mrf.mxu0
        %v2303 = vadd.f32 0.0, %v2302
        %2304 = vmatmul.bf16.gmra.mxu0 %v2280
        %v2305 = vpop.f32.mrf.mxu0
        %v2306 = vadd.f32 0.0, %v2305
        %v2307 = vpop.f32.mrf.mxu0
        %v2308 = vadd.f32 0.0, %v2307
        %2309 = vmatmul.bf16.gmra.mxu0 %v2283
        %v2310 = vpop.f32.mrf.mxu0
        %v2311 = vadd.f32 0.0, %v2310
        %v2312 = vpop.f32.mrf.mxu0
        %2313 = vdwg.mxu0
        %v2314 = vmul.f32 %v2301, %v2253
        %v2315 = vmul.f32 %v2303, %v2254
        %v2318 = vrot.slane %v2255, 7
        %v2319 = vrot.slane %v2256, 7
        %v2320 = vsel %vm2285, %v2318, %v2319
        %v2323 = vmul.f32 %v2303, %v2318
        %v2324 = vmul.f32 %v2306, %v2320
        %vm2327 = vcmask 1046528
        %v2328 = vrot.slane %v2323, 1
        %v2329 = vrot.slane %v2324, 1
        %v2330 = vsel %vm2327, %v2328, %v2329
        %v2333 = vadd.f32 %v2314, %v2330
        %v2334 = vadd.f32 %v2315, %v2329
        %vm2337 = vcmask 1041408
        %v2338 = vrot.slane %v2257, 6
        %v2339 = vrot.slane %v2258, 6
        %v2340 = vsel %vm2337, %v2338, %v2339
        %v2343 = vmul.f32 %v2306, %v2338
        %v2344 = vmul.f32 %v2308, %v2340
        %vm2347 = vcmask 1045504
        %v2348 = vrot.slane %v2343, 2
        %v2349 = vrot.slane %v2344, 2
        %v2350 = vsel %vm2347, %v2348, %v2349
        %v2353 = vadd.f32 %v2333, %v2350
        %v2354 = vadd.f32 %v2334, %v2349
        %vm2357 = vcmask 1042432
        %v2358 = vrot.slane %v2259, 5
        %v2359 = vrot.slane %v2260, 5
        %v2360 = vsel %vm2357, %v2358, %v2359
        %v2363 = vmul.f32 %v2308, %v2358
        %v2364 = vmul.f32 %v2311, %v2360
        %vm2367 = vcmask 1044480
        %v2368 = vrot.slane %v2363, 3
        %v2369 = vrot.slane %v2364, 3
        %v2370 = vsel %vm2367, %v2368, %v2369
        %v2373 = vadd.f32 %v2353, %v2370
        %v2374 = vadd.f32 %v2354, %v2369
        %v2375 = vld [vmem:[%s23] sm:$0xff]
        %v2376 = vld [vmem:[%s23 + $0x8] sm:$0x1]
        %v2377 = vld [vmem:[%s23 + $0x10] sm:$0xff]
        %v2378 = vld [vmem:[%s23 + $0x18] sm:$0x1]
        %v2379 = vld [vmem:[%s23 + $0x20] sm:$0xff]
        %v2380 = vld [vmem:[%s23 + $0x28] sm:$0x1]
        %v2381 = vld [vmem:[%s23 + $0x30] sm:$0xff]
        %v2382 = vld [vmem:[%s23 + $0x38] sm:$0x1]
        %2383 = vrot.lane.b32.xlu0 %v2261, 64
        %v2384 = vpop.permute.xlu0 %2383
        %2385 = vrot.lane.b32.xlu0 %v2262, 64
        %v2386 = vpop.permute.xlu0 %2385
        %2387 = vrot.lane.b32.xlu0 %v2263, 64
        %v2388 = vpop.permute.xlu0 %2387
        %v2392 = vand.u32 %v2388, %v2287
        %2394 = vmatpush.bf16.msra.mxu0 0
        %2395 = vmatpush.bf16.msra.mxu0 0
        %2396 = vmatpush.bf16.msra.mxu0 0
        %2397 = vmatpush.bf16.msra.mxu0 0
        %2398 = vmatpush.bf16.msra.mxu0 0
        %2399 = vmatpush.bf16.msra.mxu0 %v2392
        %2400 = vmatpush.bf16.msra.mxu0 %v2386
        %2401 = vmatpush.bf16.msra.mxu0 %v2384
        %2402 = vmatmul.bf16.gmra.mxu0 %v2277
        %v2403 = vpop.f32.mrf.mxu0
        %v2404 = vadd.f32 0.0, %v2403
        %v2405 = vpop.f32.mrf.mxu0
        %v2406 = vadd.f32 0.0, %v2405
        %2407 = vmatmul.bf16.gmra.mxu0 %v2280
        %v2408 = vpop.f32.mrf.mxu0
        %v2409 = vadd.f32 0.0, %v2408
        %v2410 = vpop.f32.mrf.mxu0
        %v2411 = vadd.f32 0.0, %v2410
        %2412 = vmatmul.bf16.gmra.mxu0 %v2283
        %v2413 = vpop.f32.mrf.mxu0
        %v2414 = vadd.f32 0.0, %v2413
        %v2415 = vpop.f32.mrf.mxu0
        %2416 = vdwg.mxu0
        %v2417 = vmul.f32 %v2404, %v2375
        %v2418 = vmul.f32 %v2406, %v2376
        %v2421 = vrot.slane %v2377, 7
        %v2422 = vrot.slane %v2378, 7
        %v2423 = vsel %vm2285, %v2421, %v2422
        %v2426 = vmul.f32 %v2406, %v2421
        %v2427 = vmul.f32 %v2409, %v2423
        %v2430 = vrot.slane %v2426, 1
        %v2431 = vrot.slane %v2427, 1
        %v2432 = vsel %vm2327, %v2430, %v2431
        %v2435 = vadd.f32 %v2417, %v2432
        %v2436 = vadd.f32 %v2418, %v2431
        %v2439 = vrot.slane %v2379, 6
        %v2440 = vrot.slane %v2380, 6
        %v2441 = vsel %vm2337, %v2439, %v2440
        %v2444 = vmul.f32 %v2409, %v2439
        %v2445 = vmul.f32 %v2411, %v2441
        %v2448 = vrot.slane %v2444, 2
        %v2449 = vrot.slane %v2445, 2
        %v2450 = vsel %vm2347, %v2448, %v2449
        %v2453 = vadd.f32 %v2435, %v2450
        %v2454 = vadd.f32 %v2436, %v2449
        %v2457 = vrot.slane %v2381, 5
        %v2458 = vrot.slane %v2382, 5
        %v2459 = vsel %vm2357, %v2457, %v2458
        %v2462 = vmul.f32 %v2411, %v2457
        %v2463 = vmul.f32 %v2414, %v2459
        %v2466 = vrot.slane %v2462, 3
        %v2467 = vrot.slane %v2463, 3
        %v2468 = vsel %vm2367, %v2466, %v2467
        %v2471 = vadd.f32 %v2453, %v2468
        %v2472 = vadd.f32 %v2454, %v2467
        %v2473 = vld [vmem:[%s29] sm:$0xf]
        %v2474 = vld [vmem:[%s29 + $0x4] sm:$0xf]
        %v2475 = vld [vmem:[%s29 + $0x8] sm:$0xf]
        %v2476 = vld [vmem:[%s29 + $0xc] sm:$0xf]
        %v2477 = vld [vmem:[%s19] sm:$0x1]
        %v2478 = vld [vmem:[%s21] sm:$0x1]
        %v2479 = vsel %vm2055, %v2373, 0.0
        %2480 = vadd.xlane.f32.xlu0 %v2479
        %v2481 = vpop.xlane.xlu0 %2480
        %v2482 = vsel %vm2068, %v2374, 0.0
        %2483 = vadd.xlane.f32.xlu0 %v2482
        %v2484 = vpop.xlane.xlu0 %2483
        %v2485 = vmul.f32 %v2481, %v2078
        %v2486 = vmul.f32 %v2484, %v2078
        %v2487 = vsub.f32 %v2373, %v2485
        %v2488 = vsub.f32 %v2374, %v2486
        %v2489 = vmul.f32 %v2487, %v2487
        %v2490 = vmul.f32 %v2488, %v2488
        %v2491 = vsel %vm2055, %v2489, 0.0
        %2492 = vadd.xlane.f32.xlu0 %v2491
        %v2493 = vpop.xlane.xlu0 %2492
        %v2494 = vsel %vm2068, %v2490, 0.0
        %2495 = vadd.xlane.f32.xlu0 %v2494
        %v2496 = vpop.xlane.xlu0 %2495
        %v2497 = vmul.f32 %v2493, %v2078
        %v2498 = vmul.f32 %v2496, %v2078
        %v2499 = vadd.f32 %v2497, 1e-06
        %v2500 = vadd.f32 %v2498, 1e-06
        %v2501 = vrsqrt.pop %v2499
        %v2502 = vmul.f32 %v2501, %v2499
        %v2503 = vmul.f32 %v2502, %v2501
        %v2504 = vmul.f32 0.5, %v2503
        %v2505 = vsub.f32 1.5, %v2504
        %v2506 = vmul.f32 %v2501, %v2505
        %vm2507 = vweird.f32 %v2499
        %vm2508 = vweird.f32 %v2501
        %vm2509 = vmor %vm2507, %vm2508
        %v2510 = vsel %vm2509, %v2501, %v2506
        %v2511 = vrsqrt.pop %v2500
        %v2512 = vmul.f32 %v2511, %v2500
        %v2513 = vmul.f32 %v2512, %v2511
        %v2514 = vmul.f32 0.5, %v2513
        %v2515 = vsub.f32 1.5, %v2514
        %v2516 = vmul.f32 %v2511, %v2515
        %vm2517 = vweird.f32 %v2500
        %vm2518 = vweird.f32 %v2511
        %vm2519 = vmor %vm2517, %vm2518
        %v2520 = vsel %vm2519, %v2511, %v2516
        %v2521 = vmul.f32 %v2487, %v2510
        %v2522 = vmul.f32 %v2488, %v2520
        %v2524 = vperm.slane %v2477, 0
        %v2526 = vmul.f32 %v2521, %v2524
        %v2527 = vmul.f32 %v2522, %v2524
        %v2529 = vperm.slane %v2478, 0
        %v2531 = vadd.f32 %v2526, %v2529
        %v2532 = vadd.f32 %v2527, %v2529
        %v2533 = vld [vmem:[%s25] sm:$0x1]
        %v2534 = vld [vmem:[%s27] sm:$0x1]
        %v2535 = vsel %vm2055, %v2471, 0.0
        %2536 = vadd.xlane.f32.xlu0 %v2535
        %v2537 = vpop.xlane.xlu0 %2536
        %v2538 = vsel %vm2068, %v2472, 0.0
        %2539 = vadd.xlane.f32.xlu0 %v2538
        %v2540 = vpop.xlane.xlu0 %2539
        %v2541 = vmul.f32 %v2537, %v2078
        %v2542 = vmul.f32 %v2540, %v2078
        %v2543 = vsub.f32 %v2471, %v2541
        %v2544 = vsub.f32 %v2472, %v2542
        %v2545 = vmul.f32 %v2543, %v2543
        %v2546 = vmul.f32 %v2544, %v2544
        %v2547 = vsel %vm2055, %v2545, 0.0
        %2548 = vadd.xlane.f32.xlu0 %v2547
        %v2549 = vpop.xlane.xlu0 %2548
        %v2550 = vsel %vm2068, %v2546, 0.0
        %2551 = vadd.xlane.f32.xlu0 %v2550
        %v2552 = vpop.xlane.xlu0 %2551
        %v2553 = vmul.f32 %v2549, %v2078
        %v2554 = vmul.f32 %v2552, %v2078
        %v2555 = vadd.f32 %v2553, 1e-06
        %v2556 = vadd.f32 %v2554, 1e-06
        %v2557 = vrsqrt.pop %v2555
        %v2558 = vmul.f32 %v2557, %v2555
        %v2559 = vmul.f32 %v2558, %v2557
        %v2560 = vmul.f32 0.5, %v2559
        %v2561 = vsub.f32 1.5, %v2560
        %v2562 = vmul.f32 %v2557, %v2561
        %vm2563 = vweird.f32 %v2555
        %vm2564 = vweird.f32 %v2557
        %vm2565 = vmor %vm2563, %vm2564
        %v2566 = vsel %vm2565, %v2557, %v2562
        %v2567 = vrsqrt.pop %v2556
        %v2568 = vmul.f32 %v2567, %v2556
        %v2569 = vmul.f32 %v2568, %v2567
        %v2570 = vmul.f32 0.5, %v2569
        %v2571 = vsub.f32 1.5, %v2570
        %v2572 = vmul.f32 %v2567, %v2571
        %vm2573 = vweird.f32 %v2556
        %vm2574 = vweird.f32 %v2567
        %vm2575 = vmor %vm2573, %vm2574
        %v2576 = vsel %vm2575, %v2567, %v2572
        %v2577 = vmul.f32 %v2543, %v2566
        %v2578 = vmul.f32 %v2544, %v2576
        %v2580 = vperm.slane %v2533, 0
        %v2582 = vmul.f32 %v2577, %v2580
        %v2583 = vmul.f32 %v2578, %v2580
        %v2585 = vperm.slane %v2534, 0
        %v2587 = vadd.f32 %v2582, %v2585
        %v2588 = vadd.f32 %v2583, %v2585
        %v2589 = vmul.f32 %v2232, 0.17677669
        %v2590 = vmul.f32 %v2234, 0.17677669
        %v2591 = vmul.f32 %v2237, 0.17677669
        %v2592 = vmul.f32 %v2239, 0.17677669
        %v2593 = vmul.f32 %v2242, 0.17677669
        %v2594 = vpack.c.bf16 %v2590, %v2589
        %v2595 = vpack.c.bf16 %v2592, %v2591
        %v2596 = vpack.c.bf16 %v2593, %v2593
        %v2597 = vpack.c.bf16 %v2532, %v2531
        %v2599 = vsel %vm2055, %v2594, 0
        %v2602 = vsel %vm2055, %v2595, 0
        %v2605 = vsel %vm2055, %v2596, 0
        %v2608 = vsel %vm2055, %v2597, 0
        %2610 = vmatpush.bf16.xpose.msra.mxu0 0
        %2611 = vmatpush.bf16.xpose.msra.mxu0 0
        %2612 = vmatpush.bf16.xpose.msra.mxu0 0
        %2613 = vmatpush.bf16.xpose.msra.mxu0 0
        %2614 = vmatpush.bf16.xpose.msra.mxu0 0
        %2615 = vmatpush.bf16.xpose.msra.mxu0 0
        %2616 = vmatpush.bf16.xpose.msra.mxu0 0
        %2617 = vmatpush.bf16.xpose.msra.mxu0 %v2608
        %2618 = vmatmul.bf16.gmra.mxu0 %v2599
        %v2619 = vpop.f32.mrf.mxu0
        %v2620 = vadd.f32 0.0, %v2619
        %v2621 = vpop.f32.mrf.mxu0
        %v2622 = vadd.f32 0.0, %v2621
        %2623 = vmatmul.bf16.gmra.mxu0 %v2602
        %v2624 = vpop.f32.mrf.mxu0
        %v2625 = vadd.f32 0.0, %v2624
        %v2626 = vpop.f32.mrf.mxu0
        %v2627 = vadd.f32 0.0, %v2626
        %2628 = vmatmul.bf16.gmra.mxu0 %v2605
        %v2629 = vpop.f32.mrf.mxu0
        %v2630 = vadd.f32 0.0, %v2629
        %v2631 = vpop.f32.mrf.mxu0
        %2632 = vdwg.mxu0
        %vm2633 = vcmask 72704
        %v2634 = vsel %vm2633, %v2620, -inf
        %2635 = vmax.xlane.f32.xlu0 %v2634
        %v2636 = vpop.xlane.xlu0 %2635
        %v2637 = vsel %vm2633, %v2622, -inf
        %2638 = vmax.xlane.f32.xlu0 %v2637
        %v2639 = vpop.xlane.xlu0 %2638
        %v2640 = vsel %vm2633, %v2625, -inf
        %2641 = vmax.xlane.f32.xlu0 %v2640
        %v2642 = vpop.xlane.xlu0 %2641
        %v2643 = vsel %vm2633, %v2627, -inf
        %2644 = vmax.xlane.f32.xlu0 %v2643
        %v2645 = vpop.xlane.xlu0 %2644
        %vm2646 = vcmask 65536
        %v2647 = vsel %vm2646, %v2630, -inf
        %2648 = vmax.xlane.f32.xlu0 %v2647
        %v2649 = vpop.xlane.xlu0 %2648
        %v2650 = vsub.f32 %v2620, %v2636
        %v2651 = vsub.f32 %v2622, %v2639
        %v2652 = vsub.f32 %v2625, %v2642
        %v2653 = vsub.f32 %v2627, %v2645
        %v2654 = vsub.f32 %v2630, %v2649
        %v2655 = vmul.f32 %v2650, 1.442695
        %v2656 = vpow.pop %v2655
        %v2657 = vmul.f32 %v2651, 1.442695
        %v2658 = vpow.pop %v2657
        %v2659 = vmul.f32 %v2652, 1.442695
        %v2660 = vpow.pop %v2659
        %v2661 = vmul.f32 %v2653, 1.442695
        %v2662 = vpow.pop %v2661
        %v2663 = vmul.f32 %v2654, 1.442695
        %v2664 = vpow.pop %v2663
        %v2665 = vsel %vm2633, %v2656, 0.0
        %2666 = vadd.xlane.f32.xlu0 %v2665
        %v2667 = vpop.xlane.xlu0 %2666
        %v2668 = vsel %vm2633, %v2658, 0.0
        %2669 = vadd.xlane.f32.xlu0 %v2668
        %v2670 = vpop.xlane.xlu0 %2669
        %v2671 = vsel %vm2633, %v2660, 0.0
        %2672 = vadd.xlane.f32.xlu0 %v2671
        %v2673 = vpop.xlane.xlu0 %2672
        %v2674 = vsel %vm2633, %v2662, 0.0
        %2675 = vadd.xlane.f32.xlu0 %v2674
        %v2676 = vpop.xlane.xlu0 %2675
        %v2677 = vsel %vm2646, %v2664, 0.0
        %2678 = vadd.xlane.f32.xlu0 %v2677
        %v2679 = vpop.xlane.xlu0 %2678
        %v2680 = vrcp.pop %v2667
        %v2681 = vrcp.pop %v2670
        %v2682 = vrcp.pop %v2673
        %v2683 = vrcp.pop %v2676
        %v2684 = vrcp.pop %v2679
        %v2685 = vmul.f32 %v2656, %v2680
        %v2686 = vmul.f32 %v2658, %v2681
        %v2687 = vmul.f32 %v2660, %v2682
        %v2688 = vmul.f32 %v2662, %v2683
        %v2689 = vmul.f32 %v2664, %v2684
        %v2690 = vpack.c.bf16 %v2588, %v2587
        %v2691 = vpack.c.bf16 %v2686, %v2685
        %v2692 = vpack.c.bf16 %v2688, %v2687
        %v2693 = vpack.c.bf16 %v2689, %v2689
        %v2695 = vsel %vm2633, %v2691, 0
        %v2698 = vsel %vm2633, %v2692, 0
        %v2701 = vsel %vm2633, %v2693, 0
        %vm2703 = vcmask 1043456
        %v2704 = vsel %vm2703, 4294967295, 65535
        %v2705 = vsel %vm2367, %v2704, 0
        %v2707 = vand.u32 %v2690, %v2705
        %2709 = vmatpush.bf16.msra.mxu0 0
        %2710 = vmatpush.bf16.msra.mxu0 0
        %2711 = vmatpush.bf16.msra.mxu0 0
        %2712 = vmatpush.bf16.msra.mxu0 0
        %2713 = vmatpush.bf16.msra.mxu0 0
        %2714 = vmatpush.bf16.msra.mxu0 0
        %2715 = vmatpush.bf16.msra.mxu0 0
        %2716 = vmatpush.bf16.msra.mxu0 %v2707
        %2717 = vmatmul.bf16.gmra.mxu0 %v2695
        %v2718 = vpop.f32.mrf.mxu0
        %v2719 = vadd.f32 0.0, %v2718
        %v2720 = vpop.f32.mrf.mxu0
        %v2721 = vadd.f32 0.0, %v2720
        %2722 = vmatmul.bf16.gmra.mxu0 %v2698
        %v2723 = vpop.f32.mrf.mxu0
        %v2724 = vadd.f32 0.0, %v2723
        %v2725 = vpop.f32.mrf.mxu0
        %v2726 = vadd.f32 0.0, %v2725
        %2727 = vmatmul.bf16.gmra.mxu0 %v2701
        %v2728 = vpop.f32.mrf.mxu0
        %v2729 = vadd.f32 0.0, %v2728
        %v2730 = vpop.f32.mrf.mxu0
        %2731 = vdwg.mxu0
        %v2732 = vpack.c.bf16 %v2721, %v2719
        %v2733 = vpack.c.bf16 %v2726, %v2724
        %v2734 = vpack.c.bf16 %v2729, %v2729
        %v2735 = vld [vmem:[%s31] sm:$0x1]
        %v2737 = vperm.slane %v2735, 0
        %v2743 = vunpack.c.l.b16 %v2473
        %v2744 = vunpack.c.l.b16 %v2474
        %v2745 = vunpack.c.l.b16 %v2475
        %v2746 = vunpack.c.l.b16 %v2476
        %v2747 = vpack.c.b16 %v2744, %v2743
        %v2748 = vpack.c.b16 %v2746, %v2745
        %v2752 = vsel %vm2055, %v2732, 0
        %v2755 = vsel %vm2055, %v2733, 0
        %v2758 = vsel %vm2055, %v2734, 0
        %2760 = vmatpush.bf16.msra.mxu0 0
        %2761 = vmatpush.bf16.msra.mxu0 0
        %2762 = vmatpush.bf16.msra.mxu0 0
        %2763 = vmatpush.bf16.msra.mxu0 0
        %2764 = vmatpush.bf16.msra.mxu0 0
        %2765 = vmatpush.bf16.msra.mxu0 0
        %2766 = vmatpush.bf16.msra.mxu0 %v2748
        %2767 = vmatpush.bf16.msra.mxu0 %v2747
        %2768 = vmatmul.bf16.gmra.mxu0 %v2752
        %v2769 = vpop.f32.mrf.mxu0
        %v2770 = vadd.f32 %v2737, %v2769
        %v2771 = vpop.f32.mrf.mxu0
        %v2772 = vadd.f32 %v2737, %v2771
        %2773 = vmatmul.bf16.gmra.mxu0 %v2755
        %v2774 = vpop.f32.mrf.mxu0
        %v2775 = vadd.f32 %v2737, %v2774
        %v2776 = vpop.f32.mrf.mxu0
        %v2777 = vadd.f32 %v2737, %v2776
        %2778 = vmatmul.bf16.gmra.mxu0 %v2758
        %v2779 = vpop.f32.mrf.mxu0
        %v2780 = vadd.f32 %v2737, %v2779
        %v2781 = vpop.f32.mrf.mxu0
        %2782 = vdwg.mxu0
        %v2783 = vadd.f32 %v2040, %v2770
        %v2784 = vadd.f32 %v2042, %v2772
        %v2785 = vadd.f32 %v2045, %v2775
        %v2786 = vadd.f32 %v2047, %v2777
        %v2787 = vadd.f32 %v2050, %v2780
        %v2788 = vld [vmem:[%s33] sm:$0x1]
        %v2789 = vld [vmem:[%s35] sm:$0x1]
        %v2790 = vsel %vm2055, %v2783, 0.0
        %2791 = vadd.xlane.f32.xlu0 %v2790
        %v2792 = vpop.xlane.xlu0 %2791
        %v2793 = vsel %vm2055, %v2784, 0.0
        %2794 = vadd.xlane.f32.xlu0 %v2793
        %v2795 = vpop.xlane.xlu0 %2794
        %v2796 = vsel %vm2055, %v2785, 0.0
        %2797 = vadd.xlane.f32.xlu0 %v2796
        %v2798 = vpop.xlane.xlu0 %2797
        %v2799 = vsel %vm2055, %v2786, 0.0
        %2800 = vadd.xlane.f32.xlu0 %v2799
        %v2801 = vpop.xlane.xlu0 %2800
        %v2802 = vsel %vm2068, %v2787, 0.0
        %2803 = vadd.xlane.f32.xlu0 %v2802
        %v2804 = vpop.xlane.xlu0 %2803
        %v2805 = vmul.f32 %v2792, %v2078
        %v2806 = vmul.f32 %v2795, %v2078
        %v2807 = vmul.f32 %v2798, %v2078
        %v2808 = vmul.f32 %v2801, %v2078
        %v2809 = vmul.f32 %v2804, %v2078
        %v2810 = vsub.f32 %v2783, %v2805
        %v2811 = vsub.f32 %v2784, %v2806
        %v2812 = vsub.f32 %v2785, %v2807
        %v2813 = vsub.f32 %v2786, %v2808
        %v2814 = vsub.f32 %v2787, %v2809
        %v2815 = vmul.f32 %v2810, %v2810
        %v2816 = vmul.f32 %v2811, %v2811
        %v2817 = vmul.f32 %v2812, %v2812
        %v2818 = vmul.f32 %v2813, %v2813
        %v2819 = vmul.f32 %v2814, %v2814
        %v2820 = vsel %vm2055, %v2815, 0.0
        %2821 = vadd.xlane.f32.xlu0 %v2820
        %v2822 = vpop.xlane.xlu0 %2821
        %v2823 = vsel %vm2055, %v2816, 0.0
        %2824 = vadd.xlane.f32.xlu0 %v2823
        %v2825 = vpop.xlane.xlu0 %2824
        %v2826 = vsel %vm2055, %v2817, 0.0
        %2827 = vadd.xlane.f32.xlu0 %v2826
        %v2828 = vpop.xlane.xlu0 %2827
        %v2829 = vsel %vm2055, %v2818, 0.0
        %2830 = vadd.xlane.f32.xlu0 %v2829
        %v2831 = vpop.xlane.xlu0 %2830
        %v2832 = vsel %vm2068, %v2819, 0.0
        %2833 = vadd.xlane.f32.xlu0 %v2832
        %v2834 = vpop.xlane.xlu0 %2833
        %v2835 = vmul.f32 %v2822, %v2078
        %v2836 = vmul.f32 %v2825, %v2078
        %v2837 = vmul.f32 %v2828, %v2078
        %v2838 = vmul.f32 %v2831, %v2078
        %v2839 = vmul.f32 %v2834, %v2078
        %v2840 = vadd.f32 %v2835, 1e-06
        %v2841 = vadd.f32 %v2836, 1e-06
        %v2842 = vadd.f32 %v2837, 1e-06
        %v2843 = vadd.f32 %v2838, 1e-06
        %v2844 = vadd.f32 %v2839, 1e-06
        %v2845 = vrsqrt.pop %v2840
        %v2846 = vmul.f32 %v2845, %v2840
        %v2847 = vmul.f32 %v2846, %v2845
        %v2848 = vmul.f32 0.5, %v2847
        %v2849 = vsub.f32 1.5, %v2848
        %v2850 = vmul.f32 %v2845, %v2849
        %vm2851 = vweird.f32 %v2840
        %vm2852 = vweird.f32 %v2845
        %vm2853 = vmor %vm2851, %vm2852
        %v2854 = vsel %vm2853, %v2845, %v2850
        %v2855 = vrsqrt.pop %v2841
        %v2856 = vmul.f32 %v2855, %v2841
        %v2857 = vmul.f32 %v2856, %v2855
        %v2858 = vmul.f32 0.5, %v2857
        %v2859 = vsub.f32 1.5, %v2858
        %v2860 = vmul.f32 %v2855, %v2859
        %vm2861 = vweird.f32 %v2841
        %vm2862 = vweird.f32 %v2855
        %vm2863 = vmor %vm2861, %vm2862
        %v2864 = vsel %vm2863, %v2855, %v2860
        %v2865 = vrsqrt.pop %v2842
        %v2866 = vmul.f32 %v2865, %v2842
        %v2867 = vmul.f32 %v2866, %v2865
        %v2868 = vmul.f32 0.5, %v2867
        %v2869 = vsub.f32 1.5, %v2868
        %v2870 = vmul.f32 %v2865, %v2869
        %vm2871 = vweird.f32 %v2842
        %vm2872 = vweird.f32 %v2865
        %vm2873 = vmor %vm2871, %vm2872
        %v2874 = vsel %vm2873, %v2865, %v2870
        %v2875 = vrsqrt.pop %v2843
        %v2876 = vmul.f32 %v2875, %v2843
        %v2877 = vmul.f32 %v2876, %v2875
        %v2878 = vmul.f32 0.5, %v2877
        %v2879 = vsub.f32 1.5, %v2878
        %v2880 = vmul.f32 %v2875, %v2879
        %vm2881 = vweird.f32 %v2843
        %vm2882 = vweird.f32 %v2875
        %vm2883 = vmor %vm2881, %vm2882
        %v2884 = vsel %vm2883, %v2875, %v2880
        %v2885 = vrsqrt.pop %v2844
        %v2886 = vmul.f32 %v2885, %v2844
        %v2887 = vmul.f32 %v2886, %v2885
        %v2888 = vmul.f32 0.5, %v2887
        %v2889 = vsub.f32 1.5, %v2888
        %v2890 = vmul.f32 %v2885, %v2889
        %vm2891 = vweird.f32 %v2844
        %vm2892 = vweird.f32 %v2885
        %vm2893 = vmor %vm2891, %vm2892
        %v2894 = vsel %vm2893, %v2885, %v2890
        %v2895 = vmul.f32 %v2810, %v2854
        %v2896 = vmul.f32 %v2811, %v2864
        %v2897 = vmul.f32 %v2812, %v2874
        %v2898 = vmul.f32 %v2813, %v2884
        %v2899 = vmul.f32 %v2814, %v2894
        %v2901 = vperm.slane %v2788, 0
        %v2903 = vmul.f32 %v2895, %v2901
        %v2904 = vmul.f32 %v2896, %v2901
        %v2905 = vmul.f32 %v2897, %v2901
        %v2906 = vmul.f32 %v2898, %v2901
        %v2907 = vmul.f32 %v2899, %v2901
        %v2909 = vperm.slane %v2789, 0
        %v2911 = vadd.f32 %v2903, %v2909
        %v2912 = vadd.f32 %v2904, %v2909
        %v2913 = vadd.f32 %v2905, %v2909
        %v2914 = vadd.f32 %v2906, %v2909
        %v2915 = vadd.f32 %v2907, %v2909
        %v2916 = vpack.c.bf16 %v2912, %v2911
        %v2917 = vpack.c.bf16 %v2914, %v2913
        %v2918 = vpack.c.bf16 %v2915, %v2915
        %v2919 = vld [vmem:[%s37] sm:$0xf]
        %v2920 = vld [vmem:[%s37 + $0x4] sm:$0xf]
        %v2921 = vld [vmem:[%s37 + $0x8] sm:$0xf]
        %v2922 = vld [vmem:[%s37 + $0xc] sm:$0xf]
        %v2923 = vld [vmem:[%s39] sm:$0x1]
        %v2925 = vperm.slane %v2923, 0
        %v2931 = vunpack.c.l.b16 %v2919
        %v2932 = vunpack.c.l.b16 %v2920
        %v2933 = vunpack.c.l.b16 %v2921
        %v2934 = vunpack.c.l.b16 %v2922
        %v2935 = vpack.c.b16 %v2932, %v2931
        %v2936 = vpack.c.b16 %v2934, %v2933
        %v2940 = vsel %vm2055, %v2916, 0
        %v2943 = vsel %vm2055, %v2917, 0
        %v2946 = vsel %vm2055, %v2918, 0
        %2948 = vmatpush.bf16.msra.mxu0 0
        %2949 = vmatpush.bf16.msra.mxu0 0
        %2950 = vmatpush.bf16.msra.mxu0 0
        %2951 = vmatpush.bf16.msra.mxu0 0
        %2952 = vmatpush.bf16.msra.mxu0 0
        %2953 = vmatpush.bf16.msra.mxu0 0
        %2954 = vmatpush.bf16.msra.mxu0 %v2936
        %2955 = vmatpush.bf16.msra.mxu0 %v2935
        %2956 = vmatmul.bf16.gmra.mxu0 %v2940
        %v2957 = vpop.f32.mrf.mxu0
        %v2958 = vadd.f32 %v2925, %v2957
        %v2959 = vpop.f32.mrf.mxu0
        %v2960 = vadd.f32 %v2925, %v2959
        %2961 = vmatmul.bf16.gmra.mxu0 %v2943
        %v2962 = vpop.f32.mrf.mxu0
        %v2963 = vadd.f32 %v2925, %v2962
        %v2964 = vpop.f32.mrf.mxu0
        %v2965 = vadd.f32 %v2925, %v2964
        %2966 = vmatmul.bf16.gmra.mxu0 %v2946
        %v2967 = vpop.f32.mrf.mxu0
        %v2968 = vadd.f32 %v2925, %v2967
        %v2969 = vpop.f32.mrf.mxu0
        %2970 = vdwg.mxu0
        %v2971 = vmul.f32 %v2958, 0.5
        %v2972 = vmul.f32 %v2960, 0.5
        %v2973 = vmul.f32 %v2963, 0.5
        %v2974 = vmul.f32 %v2965, 0.5
        %v2975 = vmul.f32 %v2968, 0.5
        %v2976 = vmul.f32 %v2958, 0.044715
        %v2977 = vmul.f32 %v2960, 0.044715
        %v2978 = vmul.f32 %v2963, 0.044715
        %v2979 = vmul.f32 %v2965, 0.044715
        %v2980 = vmul.f32 %v2968, 0.044715
        %v2981 = vmul.f32 %v2976, %v2958
        %v2982 = vmul.f32 %v2977, %v2960
        %v2983 = vmul.f32 %v2978, %v2963
        %v2984 = vmul.f32 %v2979, %v2965
        %v2985 = vmul.f32 %v2980, %v2968
        %v2986 = vmul.f32 %v2981, %v2958
        %v2987 = vmul.f32 %v2982, %v2960
        %v2988 = vmul.f32 %v2983, %v2963
        %v2989 = vmul.f32 %v2984, %v2965
        %v2990 = vmul.f32 %v2985, %v2968
        %v2991 = vadd.f32 %v2958, %v2986
        %v2992 = vadd.f32 %v2960, %v2987
        %v2993 = vadd.f32 %v2963, %v2988
        %v2994 = vadd.f32 %v2965, %v2989
        %v2995 = vadd.f32 %v2968, %v2990
        %v2996 = vmul.f32 %v2991, 0.7978846
        %v2997 = vmul.f32 %v2992, 0.7978846
        %v2998 = vmul.f32 %v2993, 0.7978846
        %v2999 = vmul.f32 %v2994, 0.7978846
        %v3000 = vmul.f32 %v2995, 0.7978846
        %v3001 = vtanh.pop %v2996
        %v3002 = vtanh.pop %v2997
        %v3003 = vtanh.pop %v2998
        %v3004 = vtanh.pop %v2999
        %v3005 = vtanh.pop %v3000
        %v3006 = vadd.f32 %v3001, 1.0
        %v3007 = vadd.f32 %v3002, 1.0
        %v3008 = vadd.f32 %v3003, 1.0
        %v3009 = vadd.f32 %v3004, 1.0
        %v3010 = vadd.f32 %v3005, 1.0
        %v3011 = vmul.f32 %v2971, %v3006
        %v3012 = vmul.f32 %v2972, %v3007
        %v3013 = vmul.f32 %v2973, %v3008
        %v3014 = vmul.f32 %v2974, %v3009
        %v3015 = vmul.f32 %v2975, %v3010
        %v3016 = vld [vmem:[%s41] sm:$0xf]
        %v3017 = vld [vmem:[%s41 + $0x4] sm:$0xf]
        %v3018 = vld [vmem:[%s41 + $0x8] sm:$0xf]
        %v3019 = vld [vmem:[%s41 + $0xc] sm:$0xf]
        %v3020 = vld [vmem:[%s41 + $0x10] sm:$0xf]
        %v3021 = vld [vmem:[%s41 + $0x14] sm:$0xf]
        %v3022 = vld [vmem:[%s41 + $0x18] sm:$0xf]
        %v3023 = vld [vmem:[%s41 + $0x1c] sm:$0xf]
        %v3024 = vld [vmem:[%s41 + $0x20] sm:$0xf]
        %v3025 = vld [vmem:[%s41 + $0x24] sm:$0xf]
        %v3026 = vld [vmem:[%s41 + $0x28] sm:$0xf]
        %v3027 = vld [vmem:[%s41 + $0x2c] sm:$0xf]
        %v3028 = vld [vmem:[%s41 + $0x30] sm:$0xf]
        %v3029 = vld [vmem:[%s41 + $0x34] sm:$0xf]
        %v3030 = vld [vmem:[%s41 + $0x38] sm:$0xf]
        %v3031 = vld [vmem:[%s41 + $0x3c] sm:$0xf]
        %v3032 = vpack.c.bf16 %v3012, %v3011
        %v3033 = vpack.c.bf16 %v3014, %v3013
        %v3034 = vpack.c.bf16 %v3015, %v3015
        %v3035 = vld [vmem:[%s43] sm:$0x1]
        %v3037 = vperm.slane %v3035, 0
        %v3055 = vunpack.c.l.b16 %v3016
        %v3056 = vunpack.c.l.b16 %v3017
        %v3057 = vunpack.c.l.b16 %v3018
        %v3058 = vunpack.c.l.b16 %v3019
        %v3059 = vunpack.c.l.b16 %v3020
        %v3060 = vunpack.c.l.b16 %v3021
        %v3061 = vunpack.c.l.b16 %v3022
        %v3062 = vunpack.c.l.b16 %v3023
        %v3063 = vunpack.c.l.b16 %v3024
        %v3064 = vunpack.c.l.b16 %v3025
        %v3065 = vunpack.c.l.b16 %v3026
        %v3066 = vunpack.c.l.b16 %v3027
        %v3067 = vunpack.c.l.b16 %v3028
        %v3068 = vunpack.c.l.b16 %v3029
        %v3069 = vunpack.c.l.b16 %v3030
        %v3070 = vunpack.c.l.b16 %v3031
        %v3071 = vpack.c.b16 %v3056, %v3055
        %v3072 = vpack.c.b16 %v3058, %v3057
        %v3073 = vpack.c.b16 %v3060, %v3059
        %v3074 = vpack.c.b16 %v3062, %v3061
        %v3075 = vpack.c.b16 %v3064, %v3063
        %v3076 = vpack.c.b16 %v3066, %v3065
        %v3077 = vpack.c.b16 %v3068, %v3067
        %v3078 = vpack.c.b16 %v3070, %v3069
        %3087 = vmatpush.bf16.msra.mxu0 %v3078
        %3088 = vmatpush.bf16.msra.mxu0 %v3077
        %3089 = vmatpush.bf16.msra.mxu0 %v3076
        %3090 = vmatpush.bf16.msra.mxu0 %v3075
        %3091 = vmatpush.bf16.msra.mxu0 %v3074
        %3092 = vmatpush.bf16.msra.mxu0 %v3073
        %3093 = vmatpush.bf16.msra.mxu0 %v3072
        %3094 = vmatpush.bf16.msra.mxu0 %v3071
        %3095 = vmatmul.bf16.gmra.mxu0 %v3032
        %v3096 = vpop.f32.mrf.mxu0
        %v3097 = vadd.f32 %v3037, %v3096
        %v3098 = vpop.f32.mrf.mxu0
        %v3099 = vadd.f32 %v3037, %v3098
        %3100 = vmatmul.bf16.gmra.mxu0 %v3033
        %v3101 = vpop.f32.mrf.mxu0
        %v3102 = vadd.f32 %v3037, %v3101
        %v3103 = vpop.f32.mrf.mxu0
        %v3104 = vadd.f32 %v3037, %v3103
        %3105 = vmatmul.bf16.gmra.mxu0 %v3034
        %v3106 = vpop.f32.mrf.mxu0
        %v3107 = vadd.f32 %v3037, %v3106
        %v3108 = vpop.f32.mrf.mxu0
        %3109 = vdwg.mxu0
        %v3110 = vadd.f32 %v2783, %v3097
        %v3111 = vadd.f32 %v2784, %v3099
        %v3112 = vadd.f32 %v2785, %v3102
        %v3113 = vadd.f32 %v2786, %v3104
        %v3114 = vadd.f32 %v2787, %v3107
        %v3115 = vld [vmem:[%s45] sm:$0x1]
        %v3116 = vld [vmem:[%s47] sm:$0x1]
        %v3117 = vsel %vm2055, %v3110, 0.0
        %3118 = vadd.xlane.f32.xlu0 %v3117
        %v3119 = vpop.xlane.xlu0 %3118
        %v3120 = vsel %vm2055, %v3111, 0.0
        %3121 = vadd.xlane.f32.xlu0 %v3120
        %v3122 = vpop.xlane.xlu0 %3121
        %v3123 = vsel %vm2055, %v3112, 0.0
        %3124 = vadd.xlane.f32.xlu0 %v3123
        %v3125 = vpop.xlane.xlu0 %3124
        %v3126 = vsel %vm2055, %v3113, 0.0
        %3127 = vadd.xlane.f32.xlu0 %v3126
        %v3128 = vpop.xlane.xlu0 %3127
        %v3129 = vsel %vm2068, %v3114, 0.0
        %3130 = vadd.xlane.f32.xlu0 %v3129
        %v3131 = vpop.xlane.xlu0 %3130
        %v3132 = vmul.f32 %v3119, %v2078
        %v3133 = vmul.f32 %v3122, %v2078
        %v3134 = vmul.f32 %v3125, %v2078
        %v3135 = vmul.f32 %v3128, %v2078
        %v3136 = vmul.f32 %v3131, %v2078
        %v3137 = vsub.f32 %v3110, %v3132
        %v3138 = vsub.f32 %v3111, %v3133
        %v3139 = vsub.f32 %v3112, %v3134
        %v3140 = vsub.f32 %v3113, %v3135
        %v3141 = vsub.f32 %v3114, %v3136
        %v3142 = vmul.f32 %v3137, %v3137
        %v3143 = vmul.f32 %v3138, %v3138
        %v3144 = vmul.f32 %v3139, %v3139
        %v3145 = vmul.f32 %v3140, %v3140
        %v3146 = vmul.f32 %v3141, %v3141
        %v3147 = vsel %vm2055, %v3142, 0.0
        %3148 = vadd.xlane.f32.xlu0 %v3147
        %v3149 = vpop.xlane.xlu0 %3148
        %v3150 = vsel %vm2055, %v3143, 0.0
        %3151 = vadd.xlane.f32.xlu0 %v3150
        %v3152 = vpop.xlane.xlu0 %3151
        %v3153 = vsel %vm2055, %v3144, 0.0
        %3154 = vadd.xlane.f32.xlu0 %v3153
        %v3155 = vpop.xlane.xlu0 %3154
        %v3156 = vsel %vm2055, %v3145, 0.0
        %3157 = vadd.xlane.f32.xlu0 %v3156
        %v3158 = vpop.xlane.xlu0 %3157
        %v3159 = vsel %vm2068, %v3146, 0.0
        %3160 = vadd.xlane.f32.xlu0 %v3159
        %v3161 = vpop.xlane.xlu0 %3160
        %v3162 = vmul.f32 %v3149, %v2078
        %v3163 = vmul.f32 %v3152, %v2078
        %v3164 = vmul.f32 %v3155, %v2078
        %v3165 = vmul.f32 %v3158, %v2078
        %v3166 = vmul.f32 %v3161, %v2078
        %v3167 = vadd.f32 %v3162, 1e-06
        %v3168 = vadd.f32 %v3163, 1e-06
        %v3169 = vadd.f32 %v3164, 1e-06
        %v3170 = vadd.f32 %v3165, 1e-06
        %v3171 = vadd.f32 %v3166, 1e-06
        %v3172 = vrsqrt.pop %v3167
        %v3173 = vmul.f32 %v3172, %v3167
        %v3174 = vmul.f32 %v3173, %v3172
        %v3175 = vmul.f32 0.5, %v3174
        %v3176 = vsub.f32 1.5, %v3175
        %v3177 = vmul.f32 %v3172, %v3176
        %vm3178 = vweird.f32 %v3167
        %vm3179 = vweird.f32 %v3172
        %vm3180 = vmor %vm3178, %vm3179
        %v3181 = vsel %vm3180, %v3172, %v3177
        %v3182 = vrsqrt.pop %v3168
        %v3183 = vmul.f32 %v3182, %v3168
        %v3184 = vmul.f32 %v3183, %v3182
        %v3185 = vmul.f32 0.5, %v3184
        %v3186 = vsub.f32 1.5, %v3185
        %v3187 = vmul.f32 %v3182, %v3186
        %vm3188 = vweird.f32 %v3168
        %vm3189 = vweird.f32 %v3182
        %vm3190 = vmor %vm3188, %vm3189
        %v3191 = vsel %vm3190, %v3182, %v3187
        %v3192 = vrsqrt.pop %v3169
        %v3193 = vmul.f32 %v3192, %v3169
        %v3194 = vmul.f32 %v3193, %v3192
        %v3195 = vmul.f32 0.5, %v3194
        %v3196 = vsub.f32 1.5, %v3195
        %v3197 = vmul.f32 %v3192, %v3196
        %vm3198 = vweird.f32 %v3169
        %vm3199 = vweird.f32 %v3192
        %vm3200 = vmor %vm3198, %vm3199
        %v3201 = vsel %vm3200, %v3192, %v3197
        %v3202 = vrsqrt.pop %v3170
        %v3203 = vmul.f32 %v3202, %v3170
        %v3204 = vmul.f32 %v3203, %v3202
        %v3205 = vmul.f32 0.5, %v3204
        %v3206 = vsub.f32 1.5, %v3205
        %v3207 = vmul.f32 %v3202, %v3206
        %vm3208 = vweird.f32 %v3170
        %vm3209 = vweird.f32 %v3202
        %vm3210 = vmor %vm3208, %vm3209
        %v3211 = vsel %vm3210, %v3202, %v3207
        %v3212 = vrsqrt.pop %v3171
        %v3213 = vmul.f32 %v3212, %v3171
        %v3214 = vmul.f32 %v3213, %v3212
        %v3215 = vmul.f32 0.5, %v3214
        %v3216 = vsub.f32 1.5, %v3215
        %v3217 = vmul.f32 %v3212, %v3216
        %vm3218 = vweird.f32 %v3171
        %vm3219 = vweird.f32 %v3212
        %vm3220 = vmor %vm3218, %vm3219
        %v3221 = vsel %vm3220, %v3212, %v3217
        %v3222 = vmul.f32 %v3137, %v3181
        %v3223 = vmul.f32 %v3138, %v3191
        %v3224 = vmul.f32 %v3139, %v3201
        %v3225 = vmul.f32 %v3140, %v3211
        %v3226 = vmul.f32 %v3141, %v3221
        %v3228 = vperm.slane %v3115, 0
        %v3230 = vmul.f32 %v3222, %v3228
        %v3231 = vmul.f32 %v3223, %v3228
        %v3232 = vmul.f32 %v3224, %v3228
        %v3233 = vmul.f32 %v3225, %v3228
        %v3234 = vmul.f32 %v3226, %v3228
        %v3236 = vperm.slane %v3116, 0
        %v3238 = vadd.f32 %v3230, %v3236
        %v3239 = vadd.f32 %v3231, %v3236
        %v3240 = vadd.f32 %v3232, %v3236
        %v3241 = vadd.f32 %v3233, %v3236
        %v3242 = vadd.f32 %v3234, %v3236
        %v3243 = vld [vmem:[%s49] sm:$0xf]
        %v3244 = vld [vmem:[%s49 + $0x4] sm:$0xf]
        %v3245 = vld [vmem:[%s49 + $0x8] sm:$0xf]
        %v3246 = vld [vmem:[%s49 + $0xc] sm:$0xf]
        %v3247 = vpack.c.bf16 %v3239, %v3238
        %v3248 = vpack.c.bf16 %v3241, %v3240
        %v3249 = vpack.c.bf16 %v3242, %v3242
        %v3250 = vld [vmem:[%s51] sm:$0x1]
        %v3252 = vperm.slane %v3250, 0
        %v3258 = vunpack.c.l.b16 %v3243
        %v3259 = vunpack.c.l.b16 %v3244
        %v3260 = vunpack.c.l.b16 %v3245
        %v3261 = vunpack.c.l.b16 %v3246
        %v3262 = vpack.c.b16 %v3259, %v3258
        %v3263 = vpack.c.b16 %v3261, %v3260
        %v3267 = vsel %vm2055, %v3247, 0
        %v3270 = vsel %vm2055, %v3248, 0
        %v3273 = vsel %vm2055, %v3249, 0
        %3275 = vmatpush.bf16.msra.mxu0 0
        %3276 = vmatpush.bf16.msra.mxu0 0
        %3277 = vmatpush.bf16.msra.mxu0 0
        %3278 = vmatpush.bf16.msra.mxu0 0
        %3279 = vmatpush.bf16.msra.mxu0 0
        %3280 = vmatpush.bf16.msra.mxu0 0
        %3281 = vmatpush.bf16.msra.mxu0 %v3263
        %3282 = vmatpush.bf16.msra.mxu0 %v3262
        %3283 = vmatmul.bf16.gmra.mxu0 %v3267
        %v3284 = vpop.f32.mrf.mxu0
        %v3285 = vadd.f32 %v3252, %v3284
        %v3286 = vpop.f32.mrf.mxu0
        %v3287 = vadd.f32 %v3252, %v3286
        %3288 = vmatmul.bf16.gmra.mxu0 %v3270
        %v3289 = vpop.f32.mrf.mxu0
        %v3290 = vadd.f32 %v3252, %v3289
        %v3291 = vpop.f32.mrf.mxu0
        %v3292 = vadd.f32 %v3252, %v3291
        %3293 = vmatmul.bf16.gmra.mxu0 %v3273
        %v3294 = vpop.f32.mrf.mxu0
        %v3295 = vadd.f32 %v3252, %v3294
        %v3296 = vpop.f32.mrf.mxu0
        %3297 = vdwg.mxu0
        %v3298 = vld [vmem:[%s61] sm:$0xff]
        %v3299 = vld [vmem:[%s61 + $0x8] sm:$0xff]
        %v3300 = vld [vmem:[%s61 + $0x10] sm:$0xff]
        %v3301 = vld [vmem:[%s61 + $0x18] sm:$0xff]
        %v3302 = vld [vmem:[%s61 + $0x20] sm:$0xf]
        %v3303 = vpack.c.bf16 %v3299, %v3298
        %v3304 = vpack.c.bf16 %v3301, %v3300
        %v3305 = vpack.c.bf16 %v3302, %v3302
        %v3306 = vld [vmem:[%s63] sm:$0xff]
        %v3307 = vld [vmem:[%s63 + $0x8] sm:$0x1]
        %v3308 = vld [vmem:[%s63 + $0x10] sm:$0xff]
        %v3309 = vld [vmem:[%s63 + $0x18] sm:$0x1]
        %v3310 = vld [vmem:[%s63 + $0x20] sm:$0xff]
        %v3311 = vld [vmem:[%s63 + $0x28] sm:$0x1]
        %v3312 = vld [vmem:[%s63 + $0x30] sm:$0xff]
        %v3313 = vld [vmem:[%s63 + $0x38] sm:$0x1]
        %v3314 = vpack.c.bf16 %v3287, %v3285
        %v3315 = vpack.c.bf16 %v3292, %v3290
        %v3316 = vpack.c.bf16 %v3295, %v3295
        %3320 = vrot.lane.b32.xlu0 %v3314, 96
        %v3321 = vpop.permute.xlu0 %3320
        %3322 = vrot.lane.b32.xlu0 %v3315, 96
        %v3323 = vpop.permute.xlu0 %3322
        %3324 = vrot.lane.b32.xlu0 %v3316, 96
        %v3325 = vpop.permute.xlu0 %3324
        %v3329 = vsel %vm2275, %v3303, 0
        %v3332 = vsel %vm2275, %v3304, 0
        %v3335 = vsel %vm2275, %v3305, 0
        %v3338 = vand.u32 %v3325, %v2287
        %3340 = vmatpush.bf16.msra.mxu0 0
        %3341 = vmatpush.bf16.msra.mxu0 0
        %3342 = vmatpush.bf16.msra.mxu0 0
        %3343 = vmatpush.bf16.msra.mxu0 0
        %3344 = vmatpush.bf16.msra.mxu0 0
        %3345 = vmatpush.bf16.msra.mxu0 %v3338
        %3346 = vmatpush.bf16.msra.mxu0 %v3323
        %3347 = vmatpush.bf16.msra.mxu0 %v3321
        %3348 = vmatmul.bf16.gmra.mxu0 %v3329
        %v3349 = vpop.f32.mrf.mxu0
        %v3350 = vadd.f32 0.0, %v3349
        %v3351 = vpop.f32.mrf.mxu0
        %v3352 = vadd.f32 0.0, %v3351
        %3353 = vmatmul.bf16.gmra.mxu0 %v3332
        %v3354 = vpop.f32.mrf.mxu0
        %v3355 = vadd.f32 0.0, %v3354
        %v3356 = vpop.f32.mrf.mxu0
        %v3357 = vadd.f32 0.0, %v3356
        %3358 = vmatmul.bf16.gmra.mxu0 %v3335
        %v3359 = vpop.f32.mrf.mxu0
        %v3360 = vadd.f32 0.0, %v3359
        %v3361 = vpop.f32.mrf.mxu0
        %3362 = vdwg.mxu0
        %v3363 = vmul.f32 %v3350, %v3306
        %v3364 = vmul.f32 %v3352, %v3307
        %v3367 = vrot.slane %v3308, 7
        %v3368 = vrot.slane %v3309, 7
        %v3369 = vsel %vm2285, %v3367, %v3368
        %v3372 = vmul.f32 %v3352, %v3367
        %v3373 = vmul.f32 %v3355, %v3369
        %v3376 = vrot.slane %v3372, 1
        %v3377 = vrot.slane %v3373, 1
        %v3378 = vsel %vm2327, %v3376, %v3377
        %v3381 = vadd.f32 %v3363, %v3378
        %v3382 = vadd.f32 %v3364, %v3377
        %v3385 = vrot.slane %v3310, 6
        %v3386 = vrot.slane %v3311, 6
        %v3387 = vsel %vm2337, %v3385, %v3386
        %v3390 = vmul.f32 %v3355, %v3385
        %v3391 = vmul.f32 %v3357, %v3387
        %v3394 = vrot.slane %v3390, 2
        %v3395 = vrot.slane %v3391, 2
        %v3396 = vsel %vm2347, %v3394, %v3395
        %v3399 = vadd.f32 %v3381, %v3396
        %v3400 = vadd.f32 %v3382, %v3395
        %v3403 = vrot.slane %v3312, 5
        %v3404 = vrot.slane %v3313, 5
        %v3405 = vsel %vm2357, %v3403, %v3404
        %v3408 = vmul.f32 %v3357, %v3403
        %v3409 = vmul.f32 %v3360, %v3405
        %v3412 = vrot.slane %v3408, 3
        %v3413 = vrot.slane %v3409, 3
        %v3414 = vsel %vm2367, %v3412, %v3413
        %v3417 = vadd.f32 %v3399, %v3414
        %v3418 = vadd.f32 %v3400, %v3413
        %v3419 = vld [vmem:[%s69] sm:$0xff]
        %v3420 = vld [vmem:[%s69 + $0x8] sm:$0x1]
        %v3421 = vld [vmem:[%s69 + $0x10] sm:$0xff]
        %v3422 = vld [vmem:[%s69 + $0x18] sm:$0x1]
        %v3423 = vld [vmem:[%s69 + $0x20] sm:$0xff]
        %v3424 = vld [vmem:[%s69 + $0x28] sm:$0x1]
        %v3425 = vld [vmem:[%s69 + $0x30] sm:$0xff]
        %v3426 = vld [vmem:[%s69 + $0x38] sm:$0x1]
        %3427 = vrot.lane.b32.xlu0 %v3314, 64
        %v3428 = vpop.permute.xlu0 %3427
        %3429 = vrot.lane.b32.xlu0 %v3315, 64
        %v3430 = vpop.permute.xlu0 %3429
        %3431 = vrot.lane.b32.xlu0 %v3316, 64
        %v3432 = vpop.permute.xlu0 %3431
        %v3436 = vand.u32 %v3432, %v2287
        %3438 = vmatpush.bf16.msra.mxu0 0
        %3439 = vmatpush.bf16.msra.mxu0 0
        %3440 = vmatpush.bf16.msra.mxu0 0
        %3441 = vmatpush.bf16.msra.mxu0 0
        %3442 = vmatpush.bf16.msra.mxu0 0
        %3443 = vmatpush.bf16.msra.mxu0 %v3436
        %3444 = vmatpush.bf16.msra.mxu0 %v3430
        %3445 = vmatpush.bf16.msra.mxu0 %v3428
        %3446 = vmatmul.bf16.gmra.mxu0 %v3329
        %v3447 = vpop.f32.mrf.mxu0
        %v3448 = vadd.f32 0.0, %v3447
        %v3449 = vpop.f32.mrf.mxu0
        %v3450 = vadd.f32 0.0, %v3449
        %3451 = vmatmul.bf16.gmra.mxu0 %v3332
        %v3452 = vpop.f32.mrf.mxu0
        %v3453 = vadd.f32 0.0, %v3452
        %v3454 = vpop.f32.mrf.mxu0
        %v3455 = vadd.f32 0.0, %v3454
        %3456 = vmatmul.bf16.gmra.mxu0 %v3335
        %v3457 = vpop.f32.mrf.mxu0
        %v3458 = vadd.f32 0.0, %v3457
        %v3459 = vpop.f32.mrf.mxu0
        %3460 = vdwg.mxu0
        %v3461 = vmul.f32 %v3448, %v3419
        %v3462 = vmul.f32 %v3450, %v3420
        %v3465 = vrot.slane %v3421, 7
        %v3466 = vrot.slane %v3422, 7
        %v3467 = vsel %vm2285, %v3465, %v3466
        %v3470 = vmul.f32 %v3450, %v3465
        %v3471 = vmul.f32 %v3453, %v3467
        %v3474 = vrot.slane %v3470, 1
        %v3475 = vrot.slane %v3471, 1
        %v3476 = vsel %vm2327, %v3474, %v3475
        %v3479 = vadd.f32 %v3461, %v3476
        %v3480 = vadd.f32 %v3462, %v3475
        %v3483 = vrot.slane %v3423, 6
        %v3484 = vrot.slane %v3424, 6
        %v3485 = vsel %vm2337, %v3483, %v3484
        %v3488 = vmul.f32 %v3453, %v3483
        %v3489 = vmul.f32 %v3455, %v3485
        %v3492 = vrot.slane %v3488, 2
        %v3493 = vrot.slane %v3489, 2
        %v3494 = vsel %vm2347, %v3492, %v3493
        %v3497 = vadd.f32 %v3479, %v3494
        %v3498 = vadd.f32 %v3480, %v3493
        %v3501 = vrot.slane %v3425, 5
        %v3502 = vrot.slane %v3426, 5
        %v3503 = vsel %vm2357, %v3501, %v3502
        %v3506 = vmul.f32 %v3455, %v3501
        %v3507 = vmul.f32 %v3458, %v3503
        %v3510 = vrot.slane %v3506, 3
        %v3511 = vrot.slane %v3507, 3
        %v3512 = vsel %vm2367, %v3510, %v3511
        %v3515 = vadd.f32 %v3497, %v3512
        %v3516 = vadd.f32 %v3498, %v3511
        %v3517 = vld [vmem:[%s53] sm:$0xff]
        %v3518 = vld [vmem:[%s53 + $0x8] sm:$0xff]
        %v3519 = vld [vmem:[%s53 + $0x10] sm:$0xff]
        %v3520 = vld [vmem:[%s53 + $0x18] sm:$0xff]
        %v3521 = vld [vmem:[%s53 + $0x20] sm:$0xf]
        %v3522 = vpack.c.bf16 %v3518, %v3517
        %v3523 = vpack.c.bf16 %v3520, %v3519
        %v3524 = vpack.c.bf16 %v3521, %v3521
        %v3525 = vld [vmem:[%s55] sm:$0xff]
        %v3526 = vld [vmem:[%s55 + $0x8] sm:$0x1]
        %v3527 = vld [vmem:[%s55 + $0x10] sm:$0xff]
        %v3528 = vld [vmem:[%s55 + $0x18] sm:$0x1]
        %v3529 = vld [vmem:[%s55 + $0x20] sm:$0xff]
        %v3530 = vld [vmem:[%s55 + $0x28] sm:$0x1]
        %v3531 = vld [vmem:[%s55 + $0x30] sm:$0xff]
        %v3532 = vld [vmem:[%s55 + $0x38] sm:$0x1]
        %v3534 = vsel %vm2275, %v3522, 0
        %v3537 = vsel %vm2275, %v3523, 0
        %v3540 = vsel %vm2275, %v3524, 0
        %v3543 = vand.u32 %v3316, %v2287
        %3545 = vmatpush.bf16.msra.mxu0 0
        %3546 = vmatpush.bf16.msra.mxu0 0
        %3547 = vmatpush.bf16.msra.mxu0 0
        %3548 = vmatpush.bf16.msra.mxu0 0
        %3549 = vmatpush.bf16.msra.mxu0 0
        %3550 = vmatpush.bf16.msra.mxu0 %v3543
        %3551 = vmatpush.bf16.msra.mxu0 %v3315
        %3552 = vmatpush.bf16.msra.mxu0 %v3314
        %3553 = vmatmul.bf16.gmra.mxu0 %v3534
        %v3554 = vpop.f32.mrf.mxu0
        %v3555 = vadd.f32 0.0, %v3554
        %v3556 = vpop.f32.mrf.mxu0
        %v3557 = vadd.f32 0.0, %v3556
        %3558 = vmatmul.bf16.gmra.mxu0 %v3537
        %v3559 = vpop.f32.mrf.mxu0
        %v3560 = vadd.f32 0.0, %v3559
        %v3561 = vpop.f32.mrf.mxu0
        %v3562 = vadd.f32 0.0, %v3561
        %3563 = vmatmul.bf16.gmra.mxu0 %v3540
        %v3564 = vpop.f32.mrf.mxu0
        %v3565 = vadd.f32 0.0, %v3564
        %v3566 = vpop.f32.mrf.mxu0
        %3567 = vdwg.mxu0
        %v3568 = vmul.f32 %v3555, %v3525
        %v3569 = vmul.f32 %v3557, %v3526
        %v3572 = vrot.slane %v3527, 7
        %v3573 = vrot.slane %v3528, 7
        %v3574 = vsel %vm2285, %v3572, %v3573
        %v3577 = vmul.f32 %v3557, %v3572
        %v3578 = vmul.f32 %v3560, %v3574
        %v3581 = vrot.slane %v3577, 1
        %v3582 = vrot.slane %v3578, 1
        %v3583 = vsel %vm2327, %v3581, %v3582
        %v3586 = vadd.f32 %v3568, %v3583
        %v3587 = vadd.f32 %v3569, %v3582
        %v3590 = vrot.slane %v3529, 6
        %v3591 = vrot.slane %v3530, 6
        %v3592 = vsel %vm2337, %v3590, %v3591
        %v3595 = vmul.f32 %v3560, %v3590
        %v3596 = vmul.f32 %v3562, %v3592
        %v3599 = vrot.slane %v3595, 2
        %v3600 = vrot.slane %v3596, 2
        %v3601 = vsel %vm2347, %v3599, %v3600
        %v3604 = vadd.f32 %v3586, %v3601
        %v3605 = vadd.f32 %v3587, %v3600
        %v3608 = vrot.slane %v3531, 5
        %v3609 = vrot.slane %v3532, 5
        %v3610 = vsel %vm2357, %v3608, %v3609
        %v3613 = vmul.f32 %v3562, %v3608
        %v3614 = vmul.f32 %v3565, %v3610
        %v3617 = vrot.slane %v3613, 3
        %v3618 = vrot.slane %v3614, 3
        %v3619 = vsel %vm2367, %v3617, %v3618
        %v3622 = vadd.f32 %v3604, %v3619
        %v3623 = vadd.f32 %v3605, %v3618
        %v3624 = vld [vmem:[%s75] sm:$0xf]
        %v3625 = vld [vmem:[%s75 + $0x4] sm:$0xf]
        %v3626 = vld [vmem:[%s75 + $0x8] sm:$0xf]
        %v3627 = vld [vmem:[%s75 + $0xc] sm:$0xf]
        %v3628 = vld [vmem:[%s57] sm:$0x1]
        %v3629 = vld [vmem:[%s59] sm:$0x1]
        %vm3630 = vcmask 130048
        %v3631 = vsel %vm3630, %v3622, 0.0
        %3632 = vadd.xlane.f32.xlu0 %v3631
        %v3633 = vpop.xlane.xlu0 %3632
        %vm3634 = vcmask 122880
        %v3635 = vsel %vm3634, %v3623, 0.0
        %3636 = vadd.xlane.f32.xlu0 %v3635
        %v3637 = vpop.xlane.xlu0 %3636
        %v3638 = vrcp.pop 16.0
        %v3639 = vmul.f32 16.0, %v3638
        %v3640 = vsub.f32 1.0, %v3639
        %v3641 = vmul.f32 %v3638, %v3640
        %v3642 = vadd.f32 %v3638, %v3641
        %vm3643 = vweird.f32 %v3638
        %v3644 = vsel %vm3643, %v3638, %v3642
        %v3645 = vmul.f32 %v3633, %v3644
        %v3646 = vmul.f32 %v3637, %v3644
        %v3647 = vsub.f32 %v3622, %v3645
        %v3648 = vsub.f32 %v3623, %v3646
        %v3649 = vmul.f32 %v3647, %v3647
        %v3650 = vmul.f32 %v3648, %v3648
        %v3651 = vsel %vm3630, %v3649, 0.0
        %3652 = vadd.xlane.f32.xlu0 %v3651
        %v3653 = vpop.xlane.xlu0 %3652
        %v3654 = vsel %vm3634, %v3650, 0.0
        %3655 = vadd.xlane.f32.xlu0 %v3654
        %v3656 = vpop.xlane.xlu0 %3655
        %v3657 = vmul.f32 %v3653, %v3644
        %v3658 = vmul.f32 %v3656, %v3644
        %v3659 = vadd.f32 %v3657, 1e-06
        %v3660 = vadd.f32 %v3658, 1e-06
        %v3661 = vrsqrt.pop %v3659
        %v3662 = vmul.f32 %v3661, %v3659
        %v3663 = vmul.f32 %v3662, %v3661
        %v3664 = vmul.f32 0.5, %v3663
        %v3665 = vsub.f32 1.5, %v3664
        %v3666 = vmul.f32 %v3661, %v3665
        %vm3667 = vweird.f32 %v3659
        %vm3668 = vweird.f32 %v3661
        %vm3669 = vmor %vm3667, %vm3668
        %v3670 = vsel %vm3669, %v3661, %v3666
        %v3671 = vrsqrt.pop %v3660
        %v3672 = vmul.f32 %v3671, %v3660
        %v3673 = vmul.f32 %v3672, %v3671
        %v3674 = vmul.f32 0.5, %v3673
        %v3675 = vsub.f32 1.5, %v3674
        %v3676 = vmul.f32 %v3671, %v3675
        %vm3677 = vweird.f32 %v3660
        %vm3678 = vweird.f32 %v3671
        %vm3679 = vmor %vm3677, %vm3678
        %v3680 = vsel %vm3679, %v3671, %v3676
        %v3681 = vmul.f32 %v3647, %v3670
        %v3682 = vmul.f32 %v3648, %v3680
        %v3684 = vperm.slane %v3628, 0
        %v3686 = vmul.f32 %v3681, %v3684
        %v3687 = vmul.f32 %v3682, %v3684
        %v3689 = vperm.slane %v3629, 0
        %v3691 = vadd.f32 %v3686, %v3689
        %v3692 = vadd.f32 %v3687, %v3689
        %v3693 = vld [vmem:[#allocation2] sm:$0x1]
        %v3694 = vld [vmem:[#allocation5] sm:$0x1]
        %v3695 = vsel %vm3630, %v3417, 0.0
        %3696 = vadd.xlane.f32.xlu0 %v3695
        %v3697 = vpop.xlane.xlu0 %3696
        %v3698 = vsel %vm3634, %v3418, 0.0
        %3699 = vadd.xlane.f32.xlu0 %v3698
        %v3700 = vpop.xlane.xlu0 %3699
        %v3701 = vmul.f32 %v3697, %v3644
        %v3702 = vmul.f32 %v3700, %v3644
        %v3703 = vsub.f32 %v3417, %v3701
        %v3704 = vsub.f32 %v3418, %v3702
        %v3705 = vmul.f32 %v3703, %v3703
        %v3706 = vmul.f32 %v3704, %v3704
        %v3707 = vsel %vm3630, %v3705, 0.0
        %3708 = vadd.xlane.f32.xlu0 %v3707
        %v3709 = vpop.xlane.xlu0 %3708
        %v3710 = vsel %vm3634, %v3706, 0.0
        %3711 = vadd.xlane.f32.xlu0 %v3710
        %v3712 = vpop.xlane.xlu0 %3711
        %v3713 = vmul.f32 %v3709, %v3644
        %v3714 = vmul.f32 %v3712, %v3644
        %v3715 = vadd.f32 %v3713, 1e-06
        %v3716 = vadd.f32 %v3714, 1e-06
        %v3717 = vrsqrt.pop %v3715
        %v3718 = vmul.f32 %v3717, %v3715
        %v3719 = vmul.f32 %v3718, %v3717
        %v3720 = vmul.f32 0.5, %v3719
        %v3721 = vsub.f32 1.5, %v3720
        %v3722 = vmul.f32 %v3717, %v3721
        %vm3723 = vweird.f32 %v3715
        %vm3724 = vweird.f32 %v3717
        %vm3725 = vmor %vm3723, %vm3724
        %v3726 = vsel %vm3725, %v3717, %v3722
        %v3727 = vrsqrt.pop %v3716
        %v3728 = vmul.f32 %v3727, %v3716
        %v3729 = vmul.f32 %v3728, %v3727
        %v3730 = vmul.f32 0.5, %v3729
        %v3731 = vsub.f32 1.5, %v3730
        %v3732 = vmul.f32 %v3727, %v3731
        %vm3733 = vweird.f32 %v3716
        %vm3734 = vweird.f32 %v3727
        %vm3735 = vmor %vm3733, %vm3734
        %v3736 = vsel %vm3735, %v3727, %v3732
        %v3737 = vmul.f32 %v3703, %v3726
        %v3738 = vmul.f32 %v3704, %v3736
        %v3740 = vperm.slane %v3693, 0
        %v3742 = vmul.f32 %v3737, %v3740
        %v3743 = vmul.f32 %v3738, %v3740
        %v3745 = vperm.slane %v3694, 0
        %v3747 = vadd.f32 %v3742, %v3745
        %v3748 = vadd.f32 %v3743, %v3745
        %v3749 = vld [vmem:[#allocation7] sm:$0x1]
        %v3750 = vld [vmem:[#allocation8] sm:$0x1]
        %v3751 = vsel %vm3630, %v3515, 0.0
        %3752 = vadd.xlane.f32.xlu0 %v3751
        %v3753 = vpop.xlane.xlu0 %3752
        %v3754 = vsel %vm3634, %v3516, 0.0
        %3755 = vadd.xlane.f32.xlu0 %v3754
        %v3756 = vpop.xlane.xlu0 %3755
        %v3757 = vmul.f32 %v3753, %v3644
        %v3758 = vmul.f32 %v3756, %v3644
        %v3759 = vsub.f32 %v3515, %v3757
        %v3760 = vsub.f32 %v3516, %v3758
        %v3761 = vmul.f32 %v3759, %v3759
        %v3762 = vmul.f32 %v3760, %v3760
        %v3763 = vsel %vm3630, %v3761, 0.0
        %3764 = vadd.xlane.f32.xlu0 %v3763
        %v3765 = vpop.xlane.xlu0 %3764
        %v3766 = vsel %vm3634, %v3762, 0.0
        %3767 = vadd.xlane.f32.xlu0 %v3766
        %v3768 = vpop.xlane.xlu0 %3767
        %v3769 = vmul.f32 %v3765, %v3644
        %v3770 = vmul.f32 %v3768, %v3644
        %v3771 = vadd.f32 %v3769, 1e-06
        %v3772 = vadd.f32 %v3770, 1e-06
        %v3773 = vrsqrt.pop %v3771
        %v3774 = vmul.f32 %v3773, %v3771
        %v3775 = vmul.f32 %v3774, %v3773
        %v3776 = vmul.f32 0.5, %v3775
        %v3777 = vsub.f32 1.5, %v3776
        %v3778 = vmul.f32 %v3773, %v3777
        %vm3779 = vweird.f32 %v3771
        %vm3780 = vweird.f32 %v3773
        %vm3781 = vmor %vm3779, %vm3780
        %v3782 = vsel %vm3781, %v3773, %v3778
        %v3783 = vrsqrt.pop %v3772
        %v3784 = vmul.f32 %v3783, %v3772
        %v3785 = vmul.f32 %v3784, %v3783
        %v3786 = vmul.f32 0.5, %v3785
        %v3787 = vsub.f32 1.5, %v3786
        %v3788 = vmul.f32 %v3783, %v3787
        %vm3789 = vweird.f32 %v3772
        %vm3790 = vweird.f32 %v3783
        %vm3791 = vmor %vm3789, %vm3790
        %v3792 = vsel %vm3791, %v3783, %v3788
        %v3793 = vmul.f32 %v3759, %v3782
        %v3794 = vmul.f32 %v3760, %v3792
        %v3796 = vperm.slane %v3749, 0
        %v3798 = vmul.f32 %v3793, %v3796
        %v3799 = vmul.f32 %v3794, %v3796
        %v3801 = vperm.slane %v3750, 0
        %v3803 = vadd.f32 %v3798, %v3801
        %v3804 = vadd.f32 %v3799, %v3801
        %v3805 = vmul.f32 %v3691, 0.25
        %v3806 = vmul.f32 %v3692, 0.25
        %v3807 = vpack.c.bf16 %v3806, %v3805
        %v3808 = vpack.c.bf16 %v3748, %v3747
        %v3810 = vsel %vm3630, %v3807, 0
        %v3813 = vsel %vm3630, %v3808, 0
        %3815 = vmatpush.bf16.xpose.msra.mxu0 0
        %3816 = vmatpush.bf16.xpose.msra.mxu0 0
        %3817 = vmatpush.bf16.xpose.msra.mxu0 0
        %3818 = vmatpush.bf16.xpose.msra.mxu0 0
        %3819 = vmatpush.bf16.xpose.msra.mxu0 0
        %3820 = vmatpush.bf16.xpose.msra.mxu0 0
        %3821 = vmatpush.bf16.xpose.msra.mxu0 0
        %3822 = vmatpush.bf16.xpose.msra.mxu0 %v3813
        %3823 = vmatmul.bf16.gmra.mxu0 %v3810
        %v3824 = vpop.f32.mrf.mxu0
        %v3825 = vadd.f32 0.0, %v3824
        %v3826 = vpop.f32.mrf.mxu0
        %v3827 = vadd.f32 0.0, %v3826
        %3828 = vdwg.mxu0
        %v3829 = vsel %vm2633, %v3825, -inf
        %3830 = vmax.xlane.f32.xlu0 %v3829
        %v3831 = vpop.xlane.xlu0 %3830
        %v3832 = vsel %vm2646, %v3827, -inf
        %3833 = vmax.xlane.f32.xlu0 %v3832
        %v3834 = vpop.xlane.xlu0 %3833
        %v3835 = vsub.f32 %v3825, %v3831
        %v3836 = vsub.f32 %v3827, %v3834
        %v3837 = vmul.f32 %v3835, 1.442695
        %v3838 = vpow.pop %v3837
        %v3839 = vmul.f32 %v3836, 1.442695
        %v3840 = vpow.pop %v3839
        %v3841 = vsel %vm2633, %v3838, 0.0
        %3842 = vadd.xlane.f32.xlu0 %v3841
        %v3843 = vpop.xlane.xlu0 %3842
        %v3844 = vsel %vm2646, %v3840, 0.0
        %3845 = vadd.xlane.f32.xlu0 %v3844
        %v3846 = vpop.xlane.xlu0 %3845
        %v3847 = vrcp.pop %v3843
        %v3848 = vrcp.pop %v3846
        %v3849 = vmul.f32 %v3838, %v3847
        %v3850 = vmul.f32 %v3840, %v3848
        %v3851 = vpack.c.bf16 %v3804, %v3803
        %v3852 = vpack.c.bf16 %v3850, %v3849
        %v3854 = vsel %vm2633, %v3852, 0
        %v3857 = vand.u32 %v3851, %v2705
        %3859 = vmatpush.bf16.msra.mxu0 0
        %3860 = vmatpush.bf16.msra.mxu0 0
        %3861 = vmatpush.bf16.msra.mxu0 0
        %3862 = vmatpush.bf16.msra.mxu0 0
        %3863 = vmatpush.bf16.msra.mxu0 0
        %3864 = vmatpush.bf16.msra.mxu0 0
        %3865 = vmatpush.bf16.msra.mxu0 0
        %3866 = vmatpush.bf16.msra.mxu0 %v3857
        %3867 = vmatmul.bf16.gmra.mxu0 %v3854
        %v3868 = vpop.f32.mrf.mxu0
        %v3869 = vadd.f32 0.0, %v3868
        %v3870 = vpop.f32.mrf.mxu0
        %v3871 = vadd.f32 0.0, %v3870
        %3872 = vdwg.mxu0
        %v3873 = vpack.c.bf16 %v3871, %v3869
        %3876 = vrot.lane.b32.xlu0 %v3622, 112
        %v3877 = vpop.permute.xlu0 %3876
        %3878 = vrot.lane.b32.xlu0 %v3623, 112
        %v3879 = vpop.permute.xlu0 %3878
        %v3882 = vsel %vm3630, %v3877, 0.0
        %3883 = vadd.xlane.f32.xlu0 %v3882
        %v3884 = vpop.xlane.xlu0 %3883
        %v3885 = vsel %vm3634, %v3879, 0.0
        %3886 = vadd.xlane.f32.xlu0 %v3885
        %v3887 = vpop.xlane.xlu0 %3886
        %v3888 = vmul.f32 %v3884, %v3644
        %v3889 = vmul.f32 %v3887, %v3644
        %v3890 = vsub.f32 %v3622, %v3888
        %v3891 = vsub.f32 %v3623, %v3889
        %v3892 = vmul.f32 %v3890, %v3890
        %v3893 = vmul.f32 %v3891, %v3891
        %3896 = vrot.lane.b32.xlu0 %v3892, 112
        %v3897 = vpop.permute.xlu0 %3896
        %3898 = vrot.lane.b32.xlu0 %v3893, 112
        %v3899 = vpop.permute.xlu0 %3898
        %v3902 = vsel %vm3630, %v3897, 0.0
        %3903 = vadd.xlane.f32.xlu0 %v3902
        %v3904 = vpop.xlane.xlu0 %3903
        %v3905 = vsel %vm3634, %v3899, 0.0
        %3906 = vadd.xlane.f32.xlu0 %v3905
        %v3907 = vpop.xlane.xlu0 %3906
        %v3908 = vmul.f32 %v3904, %v3644
        %v3909 = vmul.f32 %v3907, %v3644
        %v3910 = vadd.f32 %v3908, 1e-06
        %v3911 = vadd.f32 %v3909, 1e-06
        %v3912 = vrsqrt.pop %v3910
        %v3913 = vmul.f32 %v3912, %v3910
        %v3914 = vmul.f32 %v3913, %v3912
        %v3915 = vmul.f32 0.5, %v3914
        %v3916 = vsub.f32 1.5, %v3915
        %v3917 = vmul.f32 %v3912, %v3916
        %vm3918 = vweird.f32 %v3910
        %vm3919 = vweird.f32 %v3912
        %vm3920 = vmor %vm3918, %vm3919
        %v3921 = vsel %vm3920, %v3912, %v3917
        %v3922 = vrsqrt.pop %v3911
        %v3923 = vmul.f32 %v3922, %v3911
        %v3924 = vmul.f32 %v3923, %v3922
        %v3925 = vmul.f32 0.5, %v3924
        %v3926 = vsub.f32 1.5, %v3925
        %v3927 = vmul.f32 %v3922, %v3926
        %vm3928 = vweird.f32 %v3911
        %vm3929 = vweird.f32 %v3922
        %vm3930 = vmor %vm3928, %vm3929
        %v3931 = vsel %vm3930, %v3922, %v3927
        %v3932 = vmul.f32 %v3890, %v3921
        %v3933 = vmul.f32 %v3891, %v3931
        %3934 = vrot.lane.b32.xlu0 %v3684, 16
        %v3935 = vpop.permute.xlu0 %3934
        %v3937 = vmul.f32 %v3932, %v3935
        %v3938 = vmul.f32 %v3933, %v3935
        %3939 = vrot.lane.b32.xlu0 %v3689, 16
        %v3940 = vpop.permute.xlu0 %3939
        %v3942 = vadd.f32 %v3937, %v3940
        %v3943 = vadd.f32 %v3938, %v3940
        %3946 = vrot.lane.b32.xlu0 %v3417, 112
        %v3947 = vpop.permute.xlu0 %3946
        %3948 = vrot.lane.b32.xlu0 %v3418, 112
        %v3949 = vpop.permute.xlu0 %3948
        %v3952 = vsel %vm3630, %v3947, 0.0
        %3953 = vadd.xlane.f32.xlu0 %v3952
        %v3954 = vpop.xlane.xlu0 %3953
        %v3955 = vsel %vm3634, %v3949, 0.0
        %3956 = vadd.xlane.f32.xlu0 %v3955
        %v3957 = vpop.xlane.xlu0 %3956
        %v3958 = vmul.f32 %v3954, %v3644
        %v3959 = vmul.f32 %v3957, %v3644
        %v3960 = vsub.f32 %v3417, %v3958
        %v3961 = vsub.f32 %v3418, %v3959
        %v3962 = vmul.f32 %v3960, %v3960
        %v3963 = vmul.f32 %v3961, %v3961
        %3966 = vrot.lane.b32.xlu0 %v3962, 112
        %v3967 = vpop.permute.xlu0 %3966
        %3968 = vrot.lane.b32.xlu0 %v3963, 112
        %v3969 = vpop.permute.xlu0 %3968
        %v3972 = vsel %vm3630, %v3967, 0.0
        %3973 = vadd.xlane.f32.xlu0 %v3972
        %v3974 = vpop.xlane.xlu0 %3973
        %v3975 = vsel %vm3634, %v3969, 0.0
        %3976 = vadd.xlane.f32.xlu0 %v3975
        %v3977 = vpop.xlane.xlu0 %3976
        %v3978 = vmul.f32 %v3974, %v3644
        %v3979 = vmul.f32 %v3977, %v3644
        %v3980 = vadd.f32 %v3978, 1e-06
        %v3981 = vadd.f32 %v3979, 1e-06
        %v3982 = vrsqrt.pop %v3980
        %v3983 = vmul.f32 %v3982, %v3980
        %v3984 = vmul.f32 %v3983, %v3982
        %v3985 = vmul.f32 0.5, %v3984
        %v3986 = vsub.f32 1.5, %v3985
        %v3987 = vmul.f32 %v3982, %v3986
        %vm3988 = vweird.f32 %v3980
        %vm3989 = vweird.f32 %v3982
        %vm3990 = vmor %vm3988, %vm3989
        %v3991 = vsel %vm3990, %v3982, %v3987
        %v3992 = vrsqrt.pop %v3981
        %v3993 = vmul.f32 %v3992, %v3981
        %v3994 = vmul.f32 %v3993, %v3992
        %v3995 = vmul.f32 0.5, %v3994
        %v3996 = vsub.f32 1.5, %v3995
        %v3997 = vmul.f32 %v3992, %v3996
        %vm3998 = vweird.f32 %v3981
        %vm3999 = vweird.f32 %v3992
        %vm4000 = vmor %vm3998, %vm3999
        %v4001 = vsel %vm4000, %v3992, %v3997
        %v4002 = vmul.f32 %v3960, %v3991
        %v4003 = vmul.f32 %v3961, %v4001
        %4004 = vrot.lane.b32.xlu0 %v3740, 16
        %v4005 = vpop.permute.xlu0 %4004
        %v4007 = vmul.f32 %v4002, %v4005
        %v4008 = vmul.f32 %v4003, %v4005
        %4009 = vrot.lane.b32.xlu0 %v3745, 16
        %v4010 = vpop.permute.xlu0 %4009
        %v4012 = vadd.f32 %v4007, %v4010
        %v4013 = vadd.f32 %v4008, %v4010
        %4016 = vrot.lane.b32.xlu0 %v3515, 112
        %v4017 = vpop.permute.xlu0 %4016
        %4018 = vrot.lane.b32.xlu0 %v3516, 112
        %v4019 = vpop.permute.xlu0 %4018
        %v4022 = vsel %vm3630, %v4017, 0.0
        %4023 = vadd.xlane.f32.xlu0 %v4022
        %v4024 = vpop.xlane.xlu0 %4023
        %v4025 = vsel %vm3634, %v4019, 0.0
        %4026 = vadd.xlane.f32.xlu0 %v4025
        %v4027 = vpop.xlane.xlu0 %4026
        %v4028 = vmul.f32 %v4024, %v3644
        %v4029 = vmul.f32 %v4027, %v3644
        %v4030 = vsub.f32 %v3515, %v4028
        %v4031 = vsub.f32 %v3516, %v4029
        %v4032 = vmul.f32 %v4030, %v4030
        %v4033 = vmul.f32 %v4031, %v4031
        %4036 = vrot.lane.b32.xlu0 %v4032, 112
        %v4037 = vpop.permute.xlu0 %4036
        %4038 = vrot.lane.b32.xlu0 %v4033, 112
        %v4039 = vpop.permute.xlu0 %4038
        %v4042 = vsel %vm3630, %v4037, 0.0
        %4043 = vadd.xlane.f32.xlu0 %v4042
        %v4044 = vpop.xlane.xlu0 %4043
        %v4045 = vsel %vm3634, %v4039, 0.0
        %4046 = vadd.xlane.f32.xlu0 %v4045
        %v4047 = vpop.xlane.xlu0 %4046
        %v4048 = vmul.f32 %v4044, %v3644
        %v4049 = vmul.f32 %v4047, %v3644
        %v4050 = vadd.f32 %v4048, 1e-06
        %v4051 = vadd.f32 %v4049, 1e-06
        %v4052 = vrsqrt.pop %v4050
        %v4053 = vmul.f32 %v4052, %v4050
        %v4054 = vmul.f32 %v4053, %v4052
        %v4055 = vmul.f32 0.5, %v4054
        %v4056 = vsub.f32 1.5, %v4055
        %v4057 = vmul.f32 %v4052, %v4056
        %vm4058 = vweird.f32 %v4050
        %vm4059 = vweird.f32 %v4052
        %vm4060 = vmor %vm4058, %vm4059
        %v4061 = vsel %vm4060, %v4052, %v4057
        %v4062 = vrsqrt.pop %v4051
        %v4063 = vmul.f32 %v4062, %v4051
        %v4064 = vmul.f32 %v4063, %v4062
        %v4065 = vmul.f32 0.5, %v4064
        %v4066 = vsub.f32 1.5, %v4065
        %v4067 = vmul.f32 %v4062, %v4066
        %vm4068 = vweird.f32 %v4051
        %vm4069 = vweird.f32 %v4062
        %vm4070 = vmor %vm4068, %vm4069
        %v4071 = vsel %vm4070, %v4062, %v4067
        %v4072 = vmul.f32 %v4030, %v4061
        %v4073 = vmul.f32 %v4031, %v4071
        %4074 = vrot.lane.b32.xlu0 %v3796, 16
        %v4075 = vpop.permute.xlu0 %4074
        %v4077 = vmul.f32 %v4072, %v4075
        %v4078 = vmul.f32 %v4073, %v4075
        %4079 = vrot.lane.b32.xlu0 %v3801, 16
        %v4080 = vpop.permute.xlu0 %4079
        %v4082 = vadd.f32 %v4077, %v4080
        %v4083 = vadd.f32 %v4078, %v4080
        %v4084 = vmul.f32 %v3942, 0.25
        %v4085 = vmul.f32 %v3943, 0.25
        %v4086 = vpack.c.bf16 %v4085, %v4084
        %v4087 = vpack.c.bf16 %v4013, %v4012
        %4089 = vrot.lane.b32.xlu0 %v4086, 112
        %v4090 = vpop.permute.xlu0 %4089
        %4092 = vrot.lane.b32.xlu0 %v4087, 112
        %v4093 = vpop.permute.xlu0 %4092
        %v4095 = vsel %vm3630, %v4090, 0
        %v4098 = vsel %vm3630, %v4093, 0
        %4100 = vmatpush.bf16.xpose.msra.mxu0 0
        %4101 = vmatpush.bf16.xpose.msra.mxu0 0
        %4102 = vmatpush.bf16.xpose.msra.mxu0 0
        %4103 = vmatpush.bf16.xpose.msra.mxu0 0
        %4104 = vmatpush.bf16.xpose.msra.mxu0 0
        %4105 = vmatpush.bf16.xpose.msra.mxu0 0
        %4106 = vmatpush.bf16.xpose.msra.mxu0 0
        %4107 = vmatpush.bf16.xpose.msra.mxu0 %v4098
        %4108 = vmatmul.bf16.gmra.mxu0 %v4095
        %v4109 = vpop.f32.mrf.mxu0
        %v4110 = vadd.f32 0.0, %v4109
        %v4111 = vpop.f32.mrf.mxu0
        %v4112 = vadd.f32 0.0, %v4111
        %4113 = vdwg.mxu0
        %v4114 = vsel %vm2633, %v4110, -inf
        %4115 = vmax.xlane.f32.xlu0 %v4114
        %v4116 = vpop.xlane.xlu0 %4115
        %v4117 = vsel %vm2646, %v4112, -inf
        %4118 = vmax.xlane.f32.xlu0 %v4117
        %v4119 = vpop.xlane.xlu0 %4118
        %v4120 = vsub.f32 %v4110, %v4116
        %v4121 = vsub.f32 %v4112, %v4119
        %v4122 = vmul.f32 %v4120, 1.442695
        %v4123 = vpow.pop %v4122
        %v4124 = vmul.f32 %v4121, 1.442695
        %v4125 = vpow.pop %v4124
        %v4126 = vsel %vm2633, %v4123, 0.0
        %4127 = vadd.xlane.f32.xlu0 %v4126
        %v4128 = vpop.xlane.xlu0 %4127
        %v4129 = vsel %vm2646, %v4125, 0.0
        %4130 = vadd.xlane.f32.xlu0 %v4129
        %v4131 = vpop.xlane.xlu0 %4130
        %v4132 = vrcp.pop %v4128
        %v4133 = vrcp.pop %v4131
        %v4134 = vmul.f32 %v4123, %v4132
        %v4135 = vmul.f32 %v4125, %v4133
        %v4136 = vpack.c.bf16 %v4083, %v4082
        %v4137 = vpack.c.bf16 %v4135, %v4134
        %4139 = vrot.lane.b32.xlu0 %v4136, 112
        %v4140 = vpop.permute.xlu0 %4139
        %v4142 = vsel %vm2633, %v4137, 0
        %v4145 = vand.u32 %v4140, %v2705
        %4147 = vmatpush.bf16.msra.mxu0 0
        %4148 = vmatpush.bf16.msra.mxu0 0
        %4149 = vmatpush.bf16.msra.mxu0 0
        %4150 = vmatpush.bf16.msra.mxu0 0
        %4151 = vmatpush.bf16.msra.mxu0 0
        %4152 = vmatpush.bf16.msra.mxu0 0
        %4153 = vmatpush.bf16.msra.mxu0 0
        %4154 = vmatpush.bf16.msra.mxu0 %v4145
        %4155 = vmatmul.bf16.gmra.mxu0 %v4142
        %v4156 = vpop.f32.mrf.mxu0
        %v4157 = vadd.f32 0.0, %v4156
        %v4158 = vpop.f32.mrf.mxu0
        %v4159 = vadd.f32 0.0, %v4158
        %4160 = vdwg.mxu0
        %v4161 = vpack.c.bf16 %v4159, %v4157
        %v4164 = vunpack.c.l.b16 %v3626
        %v4165 = vunpack.c.l.b16 %v3627
        %v4166 = vpack.c.b16 %v4165, %v4164
        %v4169 = vsel %vm3630, %v4161, 0
        %4171 = vmatpush.bf16.msra.mxu0 0
        %4172 = vmatpush.bf16.msra.mxu0 0
        %4173 = vmatpush.bf16.msra.mxu0 0
        %4174 = vmatpush.bf16.msra.mxu0 0
        %4175 = vmatpush.bf16.msra.mxu0 0
        %4176 = vmatpush.bf16.msra.mxu0 0
        %4177 = vmatpush.bf16.msra.mxu0 0
        %4178 = vmatpush.bf16.msra.mxu0 %v4166
        %4179 = vmatmul.bf16.gmra.mxu0 %v4169
        %v4180 = vpop.f32.mrf.mxu0
        %v4181 = vadd.f32 0.0, %v4180
        %v4182 = vpop.f32.mrf.mxu0
        %v4183 = vadd.f32 0.0, %v4182
        %4184 = vdwg.mxu0
        %v4187 = vunpack.c.l.b16 %v3624
        %v4188 = vunpack.c.l.b16 %v3625
        %v4189 = vpack.c.b16 %v4188, %v4187
        %v4192 = vsel %vm3630, %v3873, 0
        %4194 = vmatpush.bf16.msra.mxu0 0
        %4195 = vmatpush.bf16.msra.mxu0 0
        %4196 = vmatpush.bf16.msra.mxu0 0
        %4197 = vmatpush.bf16.msra.mxu0 0
        %4198 = vmatpush.bf16.msra.mxu0 0
        %4199 = vmatpush.bf16.msra.mxu0 0
        %4200 = vmatpush.bf16.msra.mxu0 0
        %4201 = vmatpush.bf16.msra.mxu0 %v4189
        %4202 = vmatmul.bf16.gmra.mxu0 %v4192
        %v4203 = vpop.f32.mrf.mxu0
        %v4204 = vadd.f32 %v4181, %v4203
        %v4205 = vpop.f32.mrf.mxu0
        %v4206 = vadd.f32 %v4183, %v4205
        %4207 = vdwg.mxu0
        %v4208 = vld [vmem:[#allocation10] sm:$0x1]
        %v4210 = vperm.slane %v4208, 0
        %v4212 = vadd.f32 %v4204, %v4210
        %v4213 = vadd.f32 %v4206, %v4210
        %v4215 = vsel %vm2275, %v3517, 0
        %v4218 = vsel %vm2275, %v3518, 0
        %v4221 = vsel %vm2275, %v3519, 0
        %v4224 = vsel %vm2275, %v3520, 0
        %v4227 = vsel %vm2275, %v3521, 0
        %v4230 = vsel %vm2285, %v3114, 0
        %4232 = vmatpush.msra.mxu0 0.0
        %4233 = vmatpush.msra.mxu0 0.0
        %4234 = vmatpush.msra.mxu0 0.0
        %4235 = vmatpush.msra.mxu0 0.0
        %4236 = vmatpush.msra.mxu0 0.0
        %4237 = vmatpush.msra.mxu0 0.0
        %4238 = vmatpush.msra.mxu0 0.0
        %4239 = vmatpush.msra.mxu0 0.0
        %4240 = vmatpush.msra.mxu0 0.0
        %4241 = vmatpush.msra.mxu0 0.0
        %4242 = vmatpush.msra.mxu0 0.0
        %4243 = vmatpush.msra.mxu0 %v4230
        %4244 = vmatpush.msra.mxu0 %v3113
        %4245 = vmatpush.msra.mxu0 %v3112
        %4246 = vmatpush.msra.mxu0 %v3111
        %4247 = vmatpush.msra.mxu0 %v3110
        %4248 = vmatmul.f32.gmra.mxu0 %v4215
        %v4249 = vpop.f32.mrf.mxu0
        %v4250 = vadd.f32 0.0, %v4249
        %4251 = vmatmul.f32.gmra.mxu0 %v4218
        %v4252 = vpop.f32.mrf.mxu0
        %v4253 = vadd.f32 0.0, %v4252
        %4254 = vmatmul.f32.gmra.mxu0 %v4221
        %v4255 = vpop.f32.mrf.mxu0
        %v4256 = vadd.f32 0.0, %v4255
        %4257 = vmatmul.f32.gmra.mxu0 %v4224
        %v4258 = vpop.f32.mrf.mxu0
        %v4259 = vadd.f32 0.0, %v4258
        %4260 = vmatmul.f32.gmra.mxu0 %v4227
        %v4261 = vpop.f32.mrf.mxu0
        %v4262 = vadd.f32 0.0, %v4261
        %4263 = vdwg.mxu0
        %v4266 = vrot.slane %v4253, 1
        %v4267 = vrot.slane %v4256, 1
        %v4268 = vsel %vm2327, %v4266, %v4267
        %v4271 = vmax.f32 %v4250, %v4268
        %v4272 = vmax.f32 %v4253, %v4267
        %v4274 = vrot.slane %v4256, 2
        %v4275 = vrot.slane %v4259, 2
        %v4276 = vsel %vm2347, %v4274, %v4275
        %v4279 = vmax.f32 %v4271, %v4276
        %v4280 = vmax.f32 %v4272, %v4275
        %v4282 = vrot.slane %v4259, 3
        %v4283 = vrot.slane %v4262, 3
        %v4284 = vsel %vm2367, %v4282, %v4283
        %v4287 = vmax.f32 %v4279, %v4284
        %v4288 = vmax.f32 %v4280, %v4283
        %v4289 = vadd.f32 %v4287, %v4212
        %v4290 = vadd.f32 %v4288, %v4213
        %v4291 = vld [vmem:[#allocation11] sm:$0x1]
        %v4292 = vld [vmem:[#allocation13] sm:$0x1]
        %v4293 = vsel %vm2055, %v4289, 0.0
        %4294 = vadd.xlane.f32.xlu0 %v4293
        %v4295 = vpop.xlane.xlu0 %4294
        %v4296 = vsel %vm2068, %v4290, 0.0
        %4297 = vadd.xlane.f32.xlu0 %v4296
        %v4298 = vpop.xlane.xlu0 %4297
        %v4299 = vmul.f32 %v4295, %v2078
        %v4300 = vmul.f32 %v4298, %v2078
        %v4301 = vsub.f32 %v4289, %v4299
        %v4302 = vsub.f32 %v4290, %v4300
        %v4303 = vmul.f32 %v4301, %v4301
        %v4304 = vmul.f32 %v4302, %v4302
        %v4305 = vsel %vm2055, %v4303, 0.0
        %4306 = vadd.xlane.f32.xlu0 %v4305
        %v4307 = vpop.xlane.xlu0 %4306
        %v4308 = vsel %vm2068, %v4304, 0.0
        %4309 = vadd.xlane.f32.xlu0 %v4308
        %v4310 = vpop.xlane.xlu0 %4309
        %v4311 = vmul.f32 %v4307, %v2078
        %v4312 = vmul.f32 %v4310, %v2078
        %v4313 = vadd.f32 %v4311, 1e-06
        %v4314 = vadd.f32 %v4312, 1e-06
        %v4315 = vrsqrt.pop %v4313
        %v4316 = vmul.f32 %v4315, %v4313
        %v4317 = vmul.f32 %v4316, %v4315
        %v4318 = vmul.f32 0.5, %v4317
        %v4319 = vsub.f32 1.5, %v4318
        %v4320 = vmul.f32 %v4315, %v4319
        %vm4321 = vweird.f32 %v4313
        %vm4322 = vweird.f32 %v4315
        %vm4323 = vmor %vm4321, %vm4322
        %v4324 = vsel %vm4323, %v4315, %v4320
        %v4325 = vrsqrt.pop %v4314
        %v4326 = vmul.f32 %v4325, %v4314
        %v4327 = vmul.f32 %v4326, %v4325
        %v4328 = vmul.f32 0.5, %v4327
        %v4329 = vsub.f32 1.5, %v4328
        %v4330 = vmul.f32 %v4325, %v4329
        %vm4331 = vweird.f32 %v4314
        %vm4332 = vweird.f32 %v4325
        %vm4333 = vmor %vm4331, %vm4332
        %v4334 = vsel %vm4333, %v4325, %v4330
        %v4335 = vmul.f32 %v4301, %v4324
        %v4336 = vmul.f32 %v4302, %v4334
        %v4338 = vperm.slane %v4291, 0
        %v4340 = vmul.f32 %v4335, %v4338
        %v4341 = vmul.f32 %v4336, %v4338
        %v4343 = vperm.slane %v4292, 0
        %v4345 = vadd.f32 %v4340, %v4343
        %v4346 = vadd.f32 %v4341, %v4343
        %v4347 = vpack.c.bf16 %v4346, %v4345
        %v4348 = vld [vmem:[%s83] sm:$0xf]
        %v4349 = vld [vmem:[%s83 + $0x4] sm:$0xf]
        %v4350 = vld [vmem:[%s83 + $0x8] sm:$0xf]
        %v4351 = vld [vmem:[%s83 + $0xc] sm:$0xf]
        %v4352 = vld [vmem:[#allocation14] sm:$0x1]
        %v4354 = vperm.slane %v4352, 0
        %v4360 = vunpack.c.l.b16 %v4348
        %v4361 = vunpack.c.l.b16 %v4349
        %v4362 = vunpack.c.l.b16 %v4350
        %v4363 = vunpack.c.l.b16 %v4351
        %v4364 = vpack.c.b16 %v4361, %v4360
        %v4365 = vpack.c.b16 %v4363, %v4362
        %v4369 = vsel %vm2055, %v4347, 0
        %4371 = vmatpush.bf16.msra.mxu0 0
        %4372 = vmatpush.bf16.msra.mxu0 0
        %4373 = vmatpush.bf16.msra.mxu0 0
        %4374 = vmatpush.bf16.msra.mxu0 0
        %4375 = vmatpush.bf16.msra.mxu0 0
        %4376 = vmatpush.bf16.msra.mxu0 0
        %4377 = vmatpush.bf16.msra.mxu0 %v4365
        %4378 = vmatpush.bf16.msra.mxu0 %v4364
        %4379 = vmatmul.bf16.gmra.mxu0 %v4369
        %v4380 = vpop.f32.mrf.mxu0
        %v4381 = vadd.f32 %v4354, %v4380
        %v4382 = vpop.f32.mrf.mxu0
        %v4383 = vadd.f32 %v4354, %v4382
        %4384 = vdwg.mxu0
        %v4385 = vmul.f32 %v4381, 0.5
        %v4386 = vmul.f32 %v4383, 0.5
        %v4387 = vmul.f32 %v4381, 0.044715
        %v4388 = vmul.f32 %v4383, 0.044715
        %v4389 = vmul.f32 %v4387, %v4381
        %v4390 = vmul.f32 %v4388, %v4383
        %v4391 = vmul.f32 %v4389, %v4381
        %v4392 = vmul.f32 %v4390, %v4383
        %v4393 = vadd.f32 %v4381, %v4391
        %v4394 = vadd.f32 %v4383, %v4392
        %v4395 = vmul.f32 %v4393, 0.7978846
        %v4396 = vmul.f32 %v4394, 0.7978846
        %v4397 = vtanh.pop %v4395
        %v4398 = vtanh.pop %v4396
        %v4399 = vadd.f32 %v4397, 1.0
        %v4400 = vadd.f32 %v4398, 1.0
        %v4401 = vmul.f32 %v4385, %v4399
        %v4402 = vmul.f32 %v4386, %v4400
        %v4403 = vld [vmem:[%s87] sm:$0xf]
        %v4404 = vld [vmem:[%s87 + $0x4] sm:$0xf]
        %v4405 = vld [vmem:[%s87 + $0x8] sm:$0xf]
        %v4406 = vld [vmem:[%s87 + $0xc] sm:$0xf]
        %v4407 = vld [vmem:[%s87 + $0x10] sm:$0xf]
        %v4408 = vld [vmem:[%s87 + $0x14] sm:$0xf]
        %v4409 = vld [vmem:[%s87 + $0x18] sm:$0xf]
        %v4410 = vld [vmem:[%s87 + $0x1c] sm:$0xf]
        %v4411 = vld [vmem:[%s87 + $0x20] sm:$0xf]
        %v4412 = vld [vmem:[%s87 + $0x24] sm:$0xf]
        %v4413 = vld [vmem:[%s87 + $0x28] sm:$0xf]
        %v4414 = vld [vmem:[%s87 + $0x2c] sm:$0xf]
        %v4415 = vld [vmem:[%s87 + $0x30] sm:$0xf]
        %v4416 = vld [vmem:[%s87 + $0x34] sm:$0xf]
        %v4417 = vld [vmem:[%s87 + $0x38] sm:$0xf]
        %v4418 = vld [vmem:[%s87 + $0x3c] sm:$0xf]
        %v4419 = vpack.c.bf16 %v4402, %v4401
        %v4420 = vld [vmem:[#allocation16] sm:$0x1]
        %v4422 = vperm.slane %v4420, 0
        %v4440 = vunpack.c.l.b16 %v4403
        %v4441 = vunpack.c.l.b16 %v4404
        %v4442 = vunpack.c.l.b16 %v4405
        %v4443 = vunpack.c.l.b16 %v4406
        %v4444 = vunpack.c.l.b16 %v4407
        %v4445 = vunpack.c.l.b16 %v4408
        %v4446 = vunpack.c.l.b16 %v4409
        %v4447 = vunpack.c.l.b16 %v4410
        %v4448 = vunpack.c.l.b16 %v4411
        %v4449 = vunpack.c.l.b16 %v4412
        %v4450 = vunpack.c.l.b16 %v4413
        %v4451 = vunpack.c.l.b16 %v4414
        %v4452 = vunpack.c.l.b16 %v4415
        %v4453 = vunpack.c.l.b16 %v4416
        %v4454 = vunpack.c.l.b16 %v4417
        %v4455 = vunpack.c.l.b16 %v4418
        %v4456 = vpack.c.b16 %v4441, %v4440
        %v4457 = vpack.c.b16 %v4443, %v4442
        %v4458 = vpack.c.b16 %v4445, %v4444
        %v4459 = vpack.c.b16 %v4447, %v4446
        %v4460 = vpack.c.b16 %v4449, %v4448
        %v4461 = vpack.c.b16 %v4451, %v4450
        %v4462 = vpack.c.b16 %v4453, %v4452
        %v4463 = vpack.c.b16 %v4455, %v4454
        %4472 = vmatpush.bf16.msra.mxu0 %v4463
        %4473 = vmatpush.bf16.msra.mxu0 %v4462
        %4474 = vmatpush.bf16.msra.mxu0 %v4461
        %4475 = vmatpush.bf16.msra.mxu0 %v4460
        %4476 = vmatpush.bf16.msra.mxu0 %v4459
        %4477 = vmatpush.bf16.msra.mxu0 %v4458
        %4478 = vmatpush.bf16.msra.mxu0 %v4457
        %4479 = vmatpush.bf16.msra.mxu0 %v4456
        %4480 = vmatmul.bf16.gmra.mxu0 %v4419
        %v4481 = vpop.f32.mrf.mxu0
        %v4482 = vadd.f32 %v4422, %v4481
        %v4483 = vpop.f32.mrf.mxu0
        %4484 = vdwg.mxu0
        %v4485 = vld [vmem:[%s91] sm:$0xf]
        %v4486 = vld [vmem:[%s91 + $0x4] sm:$0xf]
        %v4487 = vld [vmem:[%s91 + $0x8] sm:$0xf]
        %v4488 = vld [vmem:[%s91 + $0xc] sm:$0xf]
        %v4489 = vld [vmem:[#allocation17] sm:$0x1]
        %v4491 = vperm.slane %v4489, 0
        %v4497 = vunpack.c.l.b16 %v4485
        %v4498 = vunpack.c.l.b16 %v4486
        %v4499 = vunpack.c.l.b16 %v4487
        %v4500 = vunpack.c.l.b16 %v4488
        %v4501 = vpack.c.b16 %v4498, %v4497
        %v4502 = vpack.c.b16 %v4500, %v4499
        %4505 = vmatpush.bf16.msra.mxu0 0
        %4506 = vmatpush.bf16.msra.mxu0 0
        %4507 = vmatpush.bf16.msra.mxu0 0
        %4508 = vmatpush.bf16.msra.mxu0 0
        %4509 = vmatpush.bf16.msra.mxu0 0
        %4510 = vmatpush.bf16.msra.mxu0 0
        %4511 = vmatpush.bf16.msra.mxu0 %v4502
        %4512 = vmatpush.bf16.msra.mxu0 %v4501
        %4513 = vmatmul.bf16.gmra.mxu0 %v4369
        %v4514 = vpop.f32.mrf.mxu0
        %v4515 = vadd.f32 %v4491, %v4514
        %v4516 = vpop.f32.mrf.mxu0
        %4517 = vdwg.mxu0
        %v4518 = vadd.f32 %v4515, %v4482
        %v4519 = vld [vmem:[#allocation19] sm:$0x1]
        %v4520 = vld [vmem:[#allocation20] sm:$0x1]
        %vm4521 = vcmask 516096
        %v4522 = vsel %vm4521, %v4518, 0.0
        %4523 = vadd.xlane.f32.xlu0 %v4522
        %v4524 = vpop.xlane.xlu0 %4523
        %v4525 = vrcp.pop 64.0
        %v4526 = vmul.f32 64.0, %v4525
        %v4527 = vsub.f32 1.0, %v4526
        %v4528 = vmul.f32 %v4525, %v4527
        %v4529 = vadd.f32 %v4525, %v4528
        %vm4530 = vweird.f32 %v4525
        %v4531 = vsel %vm4530, %v4525, %v4529
        %v4532 = vmul.f32 %v4524, %v4531
        %v4533 = vsub.f32 %v4518, %v4532
        %v4534 = vmul.f32 %v4533, %v4533
        %v4535 = vsel %vm4521, %v4534, 0.0
        %4536 = vadd.xlane.f32.xlu0 %v4535
        %v4537 = vpop.xlane.xlu0 %4536
        %v4538 = vmul.f32 %v4537, %v4531
        %v4539 = vadd.f32 %v4538, 1e-06
        %v4540 = vrsqrt.pop %v4539
        %v4541 = vmul.f32 %v4540, %v4539
        %v4542 = vmul.f32 %v4541, %v4540
        %v4543 = vmul.f32 0.5, %v4542
        %v4544 = vsub.f32 1.5, %v4543
        %v4545 = vmul.f32 %v4540, %v4544
        %vm4546 = vweird.f32 %v4539
        %vm4547 = vweird.f32 %v4540
        %vm4548 = vmor %vm4546, %vm4547
        %v4549 = vsel %vm4548, %v4540, %v4545
        %v4550 = vmul.f32 %v4533, %v4549
        %v4551 = vmul.f32 %v4550, %v4519
        %v4552 = vadd.f32 %v4551, %v4520
        %4553 = vst.msk [vmem:[%s1629] sm:$0x1] %vm4521, %v4552
        %s4554 = sand.u32 %s1162, 1
        %s4555 = scalar_lea.sflag [#allocation4], %s4554
        %s4556 = sand.u32 %s1162, 1
        %s4557 = scalar_lea.vmem [#allocation22], %s4556
        // Predicated region
        $region265: #{mvit_forward.1} parent=215 // pred_check
          %p4558 = pneg %p1172
        $region266: #{mvit_forward.1} parent=215 // pred_check_branch
          %4560 = sbr.rel (%p4558) target = $region268
        $region267: #{mvit_forward.1} parent=215 // pred_region
          %4562 = vsyncadd %s4555, 0
          %s4563 = scalar_lea.hbm %s99, %s120
          %s4565 = sshll.u32 %s4557, 4
          %s4566 = int_to_ptr.vmem [resolvable:$true] %s4565
          %s4567 = sshll.u32 %s4563, 4
          %s4568 = int_to_ptr.hbm [resolvable:$true] %s4567
          %4570 = dma.vmem_to_hbm [thread:$0]  %s4566, 16, %s4568, %s4555
        $region268: #{mvit_forward.1} parent=215 // pred_fallthru
          _
      $region216: #{mvit_forward.1} parent=5 // pred_fallthru
        _
      %p4571 = scmp.le.s32.totalorder 2, %s115
      // Predicated region
      $region269: #{mvit_forward.1} parent=5 // pred_check
        %p4572 = pneg %p4571
      $region270: #{mvit_forward.1} parent=5 // pred_check_branch
        %4574 = sbr.rel (%p4572) target = $region272
      $region271: #{mvit_forward.1} parent=5 // pred_region
        %s4575 = ssub.s32 %s115, 2
        // Predicated region
        $region273: #{mvit_forward.1} parent=271 // pred_check
          %p4576 = pneg %p1178
        $region274: #{mvit_forward.1} parent=271 // pred_check_branch
          %4578 = sbr.rel (%p4576) target = $region276
        $region275: #{mvit_forward.1} parent=271 // pred_region
          %s4579 = sand.u32 %s1163, 1
          %s4580 = scalar_lea.sflag [#allocation4], %s4579
          %s4581 = sand.u32 %s1163, 1
          %s4582 = scalar_lea.vmem [#allocation22], %s4581
          %4584 = dma.done %s4580, 16
        $region276: #{mvit_forward.1} parent=271 // pred_fallthru
          _
      $region272: #{mvit_forward.1} parent=5 // pred_fallthru
        _
    $region6: #{mvit_forward.1} parent=1 // loop_footer
      %s119 = sadd.s32 1, %s115
    $region7: #{mvit_forward.1} parent=1 // loop_footer_branch
      %114 = sbr.rel target = $region3
    $region8: #{mvit_forward.1} parent=1 // loop_exit
      _
    %4585 = vsyncpa [#allocation3], 1
    %s4586 = scalar_lea.sflag [#allocation3], 1
    %4587 = vsyncpa %s4586, 1
    %4588 = vsyncpa [#allocation6], 1
    %4589 = vsyncpa [#allocation9], 1
    %4590 = vsyncpa [#allocation12], 1
    %4591 = vsyncpa [#allocation15], 1
    %4592 = vsyncpa [#allocation18], 1
    %4593 = vsyncpa [#allocation21], 1
    %4594 = vsyncpa [#allocation4], 1
    %s4595 = scalar_lea.sflag [#allocation4], 1
    %4596 = vsyncpa %s4595, 1

</llo_original>
